<compile_context>
chip_gen: v6e
topology: v6e:2x2x1
jax: 0.10.0
libtpu: 0.0.40
codegen_flags: <defaults>
</compile_context>

<pallas_src>
import math

import jax
import jax.numpy as jnp
from jax.experimental import pallas as pl
from jax.experimental.pallas import tpu as pltpu

# Model / problem sizes (small, TPU-tile friendly)
B, S, H = 2, 8, 128          # batch, sequence length, hidden size (embed_dim)
NH, HD = 4, 32               # num heads, head dim
F = 4 * H                    # FFN intermediate size
V = 64                       # vocab size
EPS = 1e-12                  # BERT layernorm eps
WDT = jnp.bfloat16           # storage dtype of the big projection weights


def _layer_norm(x, g, b):
    mu = jnp.mean(x, axis=-1, keepdims=True)
    var = jnp.mean((x - mu) ** 2, axis=-1, keepdims=True)
    return (x - mu) * jax.lax.rsqrt(var + EPS) * g + b


def _make_kernel(bb):
    """Build a kernel that processes `bb` sentences (bb*S rows) per grid step."""
    scale = 1.0 / math.sqrt(HD)

    def kernel(lens_ref,                              # SMEM (B,) int32 (prefetched)
               emb_ref,                               # (bb*S, H) f32 embeddings
               embg_ref, embb_ref,                    # embedding LN gamma/beta (1,H)
               wqkv_ref, bqkv_ref,                    # (H, 3H) bf16, (1, 3H) f32
               wo_ref, bo_ref,                        # (H, H)  bf16, (1, H)  f32
               ln1g_ref, ln1b_ref,
               w1_ref, b1_ref,                        # (H, F)  bf16, (1, F)  f32
               w2_ref, b2_ref,                        # (F, H)  bf16, (1, H)  f32
               ln2g_ref, ln2b_ref,
               out_ref):                              # (bb, 1, H) f32
        blk = pl.program_id(0)
        key_pos = jax.lax.broadcasted_iota(jnp.int32, (1, S), 1)

        # --- Embedding layernorm (folded into the kernel) ---
        x = _layer_norm(emb_ref[...], embg_ref[...], embb_ref[...])      # (bb*S, H)

        # --- Fused QKV projection: one MXU matmul with N = 3H = 384 ---
        qkv = jnp.dot(x.astype(WDT), wqkv_ref[...],
                      preferred_element_type=jnp.float32) + bqkv_ref[...]  # (bb*S, 3H)

        wo = wo_ref[...]                                                  # (H, H) bf16

        # --- Multi-head self attention (per sentence, per head) ---
        attn_parts = []
        for s_i in range(bb):                         # static unroll over sentences
            length = lens_ref[blk * bb + s_i]
            neg_bias = jnp.where(key_pos < length, 0.0, -1e9)             # (1, S) f32
            r0 = s_i * S
            acc = jnp.zeros((S, H), jnp.float32)
            for h in range(NH):                       # static unroll over heads
                c0 = h * HD
                qh = qkv[r0:r0 + S, c0:c0 + HD]
                kh = qkv[r0:r0 + S, H + c0:H + c0 + HD]
                vh = qkv[r0:r0 + S, 2 * H + c0:2 * H + c0 + HD]
                # contract last dims -> no explicit kh.T
                sc = jax.lax.dot_general(
                    qh, kh, (((1,), (1,)), ((), ())),
                    preferred_element_type=jnp.float32) * scale + neg_bias
                sc = sc - jnp.max(sc, axis=-1, keepdims=True)
                p = jnp.exp(sc)
                p = p * pl.reciprocal(jnp.sum(p, axis=-1, keepdims=True),
                                      approx=True)
                ctx = jnp.dot(p, vh, preferred_element_type=jnp.float32)  # (S, HD)
                # accumulate ctx_h @ Wo[h*HD:(h+1)*HD, :]  (no lane concat)
                acc = acc + jnp.dot(ctx.astype(WDT), wo[c0:c0 + HD, :],
                                    preferred_element_type=jnp.float32)
            attn_parts.append(acc)
        attn = attn_parts[0] if bb == 1 else jnp.concatenate(attn_parts, axis=0)
        attn = attn + bo_ref[...]

        y = _layer_norm(x + attn, ln1g_ref[...], ln1b_ref[...])          # (bb*S, H)

        # --- Feed-forward ---
        # TODO(synk): HF BERT uses exact (erf) GELU; tanh approximation kept here
        # for guaranteed Mosaic lowering (numerically very close).
        hmid = jax.nn.gelu(
            jnp.dot(y.astype(WDT), w1_ref[...],
                    preferred_element_type=jnp.float32) + b1_ref[...],
            approximate=True)
        ffn = jnp.dot(hmid.astype(WDT), w2_ref[...],
                      preferred_element_type=jnp.float32) + b2_ref[...]
        z = _layer_norm(y + ffn, ln2g_ref[...], ln2b_ref[...])           # (bb*S, H)

        # --- Masked mean pooling (sentence vector per sentence) ---
        for s_i in range(bb):
            length = lens_ref[blk * bb + s_i]
            m = (key_pos < length).astype(jnp.float32)                    # (1, S)
            pooled = jnp.dot(m, z[s_i * S:(s_i + 1) * S, :],
                             preferred_element_type=jnp.float32)          # (1, H)
            denom = jnp.maximum(jnp.sum(m, axis=-1, keepdims=True), 1.0)  # (1, 1)
            out_ref[s_i, :, :] = pooled * pl.reciprocal(denom, approx=True)

    return kernel


def _pick_batch_block(batch):
    """Device-aware blocking: collapse the batch on 1-TC chips, shard on v7x."""
    try:
        kind = jax.devices()[0].device_kind.lower()
    except Exception:
        kind = ""
    if "v7" in kind:
        return 1        # 2 TensorCores per chip: keep grid=(B,) "parallel"
    return batch        # v5e / v6e: single TC -> one grid step, no per-step overhead


def make_params(key):
    ks = jax.random.split(key, 8)
    init = lambda k, shape: (jax.random.normal(k, shape, jnp.float32) * 0.02)
    wq, wk, wv = init(ks[2], (H, H)), init(ks[3], (H, H)), init(ks[4], (H, H))
    return {
        "word_emb": init(ks[0], (V, H)),
        "pos_emb": init(ks[1], (S, H)),
        "emb_ln_g": jnp.ones((1, H), jnp.float32),
        "emb_ln_b": jnp.zeros((1, H), jnp.float32),
        # fused QKV projection, big weights stored bf16 (f32 MXU accumulation)
        "wqkv": jnp.concatenate([wq, wk, wv], axis=1).astype(WDT),        # (H, 3H)
        "bqkv": jnp.zeros((1, 3 * H), jnp.float32),
        "wo": init(ks[5], (H, H)).astype(WDT), "bo": jnp.zeros((1, H), jnp.float32),
        "ln1_g": jnp.ones((1, H), jnp.float32), "ln1_b": jnp.zeros((1, H), jnp.float32),
        "w1": init(ks[6], (H, F)).astype(WDT), "b1": jnp.zeros((1, F), jnp.float32),
        "w2": init(ks[7], (F, H)).astype(WDT), "b2": jnp.zeros((1, H), jnp.float32),
        "ln2_g": jnp.ones((1, H), jnp.float32), "ln2_b": jnp.zeros((1, H), jnp.float32),
    }


def sentence_encoder_forward(input_ids, attention_mask, params, batch_block=None):
    """SentenceEncoder.forward: (B, S) ids + mask -> (B, H) sentence vectors."""
    bsz, seq = input_ids.shape
    if batch_block is None:
        batch_block = _pick_batch_block(bsz)
    assert bsz % batch_block == 0
    rows = batch_block * seq

    # Glue kept in XLA: token embedding gather + position add (one fused gather).
    # TODO(synk): the id gather could move in-kernel via scalar-prefetched ids +
    # pl.Element row blocks; left in XLA for clarity at these sizes.
    emb = params["word_emb"][input_ids] + params["pos_emb"][None, :, :]     # (B,S,H)
    emb_flat = emb.reshape(bsz * seq, H).astype(jnp.float32)
    lengths = jnp.sum(attention_mask.astype(jnp.int32), axis=-1)            # (B,) SMEM

    def full(shape):
        return pl.BlockSpec(shape, lambda *_: (0,) * len(shape))

    in_specs = [
        pl.BlockSpec((rows, H), lambda b, lens: (b, 0)),   # embeddings (per block)
        full((1, H)), full((1, H)),                        # emb LN gamma/beta
        full((H, 3 * H)), full((1, 3 * H)),                # Wqkv, bqkv
        full((H, H)), full((1, H)),                        # Wo, bo
        full((1, H)), full((1, H)),                        # LN1 gamma/beta
        full((H, F)), full((1, F)),                        # W1, b1
        full((F, H)), full((1, H)),                        # W2, b2
        full((1, H)), full((1, H)),                        # LN2 gamma/beta
    ]

    out = pl.pallas_call(
        _make_kernel(batch_block),
        out_shape=jax.ShapeDtypeStruct((bsz, 1, H), jnp.float32),
        grid_spec=pltpu.PrefetchScalarGridSpec(
            num_scalar_prefetch=1,
            grid=(bsz // batch_block,),
            in_specs=in_specs,
            out_specs=pl.BlockSpec((batch_block, 1, H), lambda b, lens: (b, 0, 0)),
        ),
        compiler_params=pltpu.CompilerParams(dimension_semantics=("parallel",)),
    )(lengths, emb_flat,
      params["emb_ln_g"], params["emb_ln_b"],
      params["wqkv"], params["bqkv"],
      params["wo"], params["bo"],
      params["ln1_g"], params["ln1_b"],
      params["w1"], params["b1"], params["w2"], params["b2"],
      params["ln2_g"], params["ln2_b"])
    return out[:, 0, :]                                                      # (B, H)


def reference_forward(input_ids, attention_mask, params):
    """Pure-JAX reference (f32 math, same bf16 weight values)."""
    f32 = lambda w: w.astype(jnp.float32)
    emb = params["word_emb"][input_ids] + params["pos_emb"][None, :, :]
    x = _layer_norm(emb, params["emb_ln_g"], params["emb_ln_b"])
    qkv = x @ f32(params["wqkv"]) + params["bqkv"]
    q, k, v = qkv[..., :H], qkv[..., H:2 * H], qkv[..., 2 * H:]
    q = q.reshape(B, S, NH, HD).transpose(0, 2, 1, 3)
    k = k.reshape(B, S, NH, HD).transpose(0, 2, 1, 3)
    v = v.reshape(B, S, NH, HD).transpose(0, 2, 1, 3)
    mask = attention_mask.astype(jnp.float32)
    sc = jnp.einsum("bhqd,bhkd->bhqk", q, k) / math.sqrt(HD)
    sc = sc + (1.0 - mask)[:, None, None, :] * -1e9
    p = jax.nn.softmax(sc, axis=-1)
    ctx = jnp.einsum("bhqk,bhkd->bhqd", p, v).transpose(0, 2, 1, 3).reshape(B, S, H)
    y = _layer_norm(x + ctx @ f32(params["wo"]) + params["bo"],
                    params["ln1_g"], params["ln1_b"])
    hmid = jax.nn.gelu(y @ f32(params["w1"]) + params["b1"], approximate=True)
    z = _layer_norm(y + hmid @ f32(params["w2"]) + params["b2"],
                    params["ln2_g"], params["ln2_b"])
    pooled = jnp.einsum("bs,bsh->bh", mask, z)
    return pooled / jnp.maximum(mask.sum(-1, keepdims=True), 1.0)


if __name__ == "__main__":
    key = jax.random.PRNGKey(0)
    k_ids, k_params = jax.random.split(key)

    input_ids = jax.random.randint(k_ids, (B, S), 0, V, dtype=jnp.int32)
    lengths = jnp.array([S, 5], dtype=jnp.int32)               # second sentence padded
    positions = jax.lax.broadcasted_iota(jnp.int32, (B, S), 1)
    attention_mask = (positions < lengths[:, None]).astype(jnp.int32)

    params = make_params(k_params)

    vecs = sentence_encoder_forward(input_ids, attention_mask, params)
    jax.block_until_ready(vecs)

    assert vecs.shape == (B, H) and vecs.dtype == jnp.float32
    assert bool(jnp.all(jnp.isfinite(vecs)))

    ref = reference_forward(input_ids, attention_mask, params)
    assert bool(jnp.allclose(vecs, ref, atol=1e-1, rtol=1e-1)), "kernel/ref mismatch"

    print("KERNEL_OK")
</pallas_src>

<mosaic_0001>
module attributes {stable_mosaic.version = 11 : i64} {
  func.func @kernel(%arg0: i32, %arg1: memref<2xi32, #tpu.memory_space<smem>>, %arg2: memref<16x128xf32, #tpu.memory_space<vmem>>, %arg3: memref<1x128xf32, #tpu.memory_space<vmem>>, %arg4: memref<1x128xf32, #tpu.memory_space<vmem>>, %arg5: memref<128x384xbf16, #tpu.memory_space<vmem>>, %arg6: memref<1x384xf32, #tpu.memory_space<vmem>>, %arg7: memref<128x128xbf16, #tpu.memory_space<vmem>>, %arg8: memref<1x128xf32, #tpu.memory_space<vmem>>, %arg9: memref<1x128xf32, #tpu.memory_space<vmem>>, %arg10: memref<1x128xf32, #tpu.memory_space<vmem>>, %arg11: memref<128x512xbf16, #tpu.memory_space<vmem>>, %arg12: memref<1x512xf32, #tpu.memory_space<vmem>>, %arg13: memref<512x128xbf16, #tpu.memory_space<vmem>>, %arg14: memref<1x128xf32, #tpu.memory_space<vmem>>, %arg15: memref<1x128xf32, #tpu.memory_space<vmem>>, %arg16: memref<1x128xf32, #tpu.memory_space<vmem>>, %arg17: memref<2x1x128xf32, #tpu.memory_space<vmem>>) attributes {dimension_semantics = [#tpu.dimension_semantics<parallel>], iteration_bounds = array<i64: 1>, scalar_prefetch = 1 : i64, scratch_operands = 0 : i64, tpu.core_type = #tpu.core_type<tc>, window_params = [{transform_indices = @transform_0, window_bounds = array<i64: 16, 128>}, {pipeline_mode = #tpu.pipeline_mode<synchronous>, transform_indices = @transform_1, window_bounds = array<i64: 1, 128>}, {pipeline_mode = #tpu.pipeline_mode<synchronous>, transform_indices = @transform_2, window_bounds = array<i64: 1, 128>}, {pipeline_mode = #tpu.pipeline_mode<synchronous>, transform_indices = @transform_3, window_bounds = array<i64: 128, 384>}, {pipeline_mode = #tpu.pipeline_mode<synchronous>, transform_indices = @transform_4, window_bounds = array<i64: 1, 384>}, {pipeline_mode = #tpu.pipeline_mode<synchronous>, transform_indices = @transform_5, window_bounds = array<i64: 128, 128>}, {pipeline_mode = #tpu.pipeline_mode<synchronous>, transform_indices = @transform_6, window_bounds = array<i64: 1, 128>}, {pipeline_mode = #tpu.pipeline_mode<synchronous>, transform_indices = @transform_7, window_bounds = array<i64: 1, 128>}, {pipeline_mode = #tpu.pipeline_mode<synchronous>, transform_indices = @transform_8, window_bounds = array<i64: 1, 128>}, {pipeline_mode = #tpu.pipeline_mode<synchronous>, transform_indices = @transform_9, window_bounds = array<i64: 128, 512>}, {pipeline_mode = #tpu.pipeline_mode<synchronous>, transform_indices = @transform_10, window_bounds = array<i64: 1, 512>}, {pipeline_mode = #tpu.pipeline_mode<synchronous>, transform_indices = @transform_11, window_bounds = array<i64: 512, 128>}, {pipeline_mode = #tpu.pipeline_mode<synchronous>, transform_indices = @transform_12, window_bounds = array<i64: 1, 128>}, {pipeline_mode = #tpu.pipeline_mode<synchronous>, transform_indices = @transform_13, window_bounds = array<i64: 1, 128>}, {pipeline_mode = #tpu.pipeline_mode<synchronous>, transform_indices = @transform_14, window_bounds = array<i64: 1, 128>}, {transform_indices = @transform_15, window_bounds = array<i64: 2, 1, 128>}]} {
    %0 = tpu.iota {dimensions = array<i32: 1>} : vector<1x8xi32>
    %c0 = arith.constant 0 : index
    %c0_0 = arith.constant 0 : index
    %1 = vector.load %arg2[%c0, %c0_0] : memref<16x128xf32, #tpu.memory_space<vmem>>, vector<16x128xf32>
    %c0_1 = arith.constant 0 : index
    %c0_2 = arith.constant 0 : index
    %2 = vector.load %arg3[%c0_1, %c0_2] : memref<1x128xf32, #tpu.memory_space<vmem>>, vector<1x128xf32>
    %c0_3 = arith.constant 0 : index
    %c0_4 = arith.constant 0 : index
    %3 = vector.load %arg4[%c0_3, %c0_4] : memref<1x128xf32, #tpu.memory_space<vmem>>, vector<1x128xf32>
    %cst = arith.constant dense<0.000000e+00> : vector<16xf32>
    %4 = vector.multi_reduction <add>, %1, %cst [1] : vector<16x128xf32> to vector<16xf32>
    %5 = vector.shape_cast %4 : vector<16xf32> to vector<16x1xf32>
    %cst_5 = arith.constant 1.280000e+02 : f32
    %6 = vector.broadcast %cst_5 : f32 to vector<16x1xf32>
    %7 = arith.divf %5, %6 : vector<16x1xf32>
    %8 = vector.broadcast %7 : vector<16x1xf32> to vector<16x128xf32>
    %9 = arith.subf %1, %8 : vector<16x128xf32>
    %10 = arith.mulf %9, %9 : vector<16x128xf32>
    %cst_6 = arith.constant dense<0.000000e+00> : vector<16xf32>
    %11 = vector.multi_reduction <add>, %10, %cst_6 [1] : vector<16x128xf32> to vector<16xf32>
    %12 = vector.shape_cast %11 : vector<16xf32> to vector<16x1xf32>
    %cst_7 = arith.constant 1.280000e+02 : f32
    %13 = vector.broadcast %cst_7 : f32 to vector<16x1xf32>
    %14 = arith.divf %12, %13 : vector<16x1xf32>
    %15 = vector.broadcast %7 : vector<16x1xf32> to vector<16x128xf32>
    %16 = arith.subf %1, %15 : vector<16x128xf32>
    %cst_8 = arith.constant 9.99999996E-13 : f32
    %17 = vector.broadcast %cst_8 : f32 to vector<16x1xf32>
    %18 = arith.addf %14, %17 : vector<16x1xf32>
    %19 = math.rsqrt %18 : vector<16x1xf32>
    %20 = vector.broadcast %19 : vector<16x1xf32> to vector<16x128xf32>
    %21 = arith.mulf %16, %20 : vector<16x128xf32>
    %22 = vector.broadcast %2 : vector<1x128xf32> to vector<16x128xf32>
    %23 = arith.mulf %21, %22 : vector<16x128xf32>
    %24 = vector.broadcast %3 : vector<1x128xf32> to vector<16x128xf32>
    %25 = arith.addf %23, %24 : vector<16x128xf32>
    %26 = arith.truncf %25 : vector<16x128xf32> to vector<16x128xbf16>
    %c0_9 = arith.constant 0 : index
    %c0_10 = arith.constant 0 : index
    %27 = vector.load %arg5[%c0_9, %c0_10] : memref<128x384xbf16, #tpu.memory_space<vmem>>, vector<128x384xbf16>
    %cst_11 = arith.constant dense<0.000000e+00> : vector<16x384xf32>
    %28 = tpu.matmul %26, %27, %cst_11 {dimension_numbers = #tpu.dot_dimension_numbers<[1], [0], [0], [1], [0, 0, 1, 1], [], []>} : vector<16x128xbf16>, vector<128x384xbf16>, vector<16x384xf32> -> vector<16x384xf32>
    %c0_12 = arith.constant 0 : index
    %c0_13 = arith.constant 0 : index
    %29 = vector.load %arg6[%c0_12, %c0_13] : memref<1x384xf32, #tpu.memory_space<vmem>>, vector<1x384xf32>
    %30 = vector.broadcast %29 : vector<1x384xf32> to vector<16x384xf32>
    %31 = arith.addf %28, %30 : vector<16x384xf32>
    %c0_14 = arith.constant 0 : index
    %c0_15 = arith.constant 0 : index
    %32 = vector.load %arg7[%c0_14, %c0_15] : memref<128x128xbf16, #tpu.memory_space<vmem>>, vector<128x128xbf16>
    %c2_i32 = arith.constant 2 : i32
    %33 = arith.muli %arg0, %c2_i32 : i32
    %c0_i32 = arith.constant 0 : i32
    %34 = arith.addi %33, %c0_i32 : i32
    %35 = arith.index_cast %34 : i32 to index
    %36 = memref.load %arg1[%35] : memref<2xi32, #tpu.memory_space<smem>>
    %37 = vector.broadcast %36 : i32 to vector<1x8xi32>
    %38 = arith.cmpi slt, %0, %37 : vector<1x8xi32>
    %cst_16 = arith.constant 0.000000e+00 : f32
    %cst_17 = arith.constant -1.000000e+09 : f32
    %39 = vector.broadcast %cst_16 : f32 to vector<1x8xf32>
    %40 = vector.broadcast %cst_17 : f32 to vector<1x8xf32>
    %41 = arith.select %38, %39, %40 : vector<1x8xi1>, vector<1x8xf32>
    %cst_18 = arith.constant 0.000000e+00 : f32
    %42 = vector.broadcast %cst_18 : f32 to vector<8x128xf32>
    %43 = vector.extract_strided_slice %31 {offsets = [0, 0], sizes = [8, 32], strides = [1, 1]} : vector<16x384xf32> to vector<8x32xf32>
    %44 = vector.extract_strided_slice %31 {offsets = [0, 128], sizes = [8, 32], strides = [1, 1]} : vector<16x384xf32> to vector<8x32xf32>
    %45 = vector.extract_strided_slice %31 {offsets = [0, 256], sizes = [8, 32], strides = [1, 1]} : vector<16x384xf32> to vector<8x32xf32>
    %cst_19 = arith.constant dense<0.000000e+00> : vector<8x8xf32>
    %46 = tpu.matmul %43, %44, %cst_19 {dimension_numbers = #tpu.dot_dimension_numbers<[1], [1], [0], [0], [0, 0, 1, 0], [], []>} : vector<8x32xf32>, vector<8x32xf32>, vector<8x8xf32> -> vector<8x8xf32>
    %cst_20 = arith.constant 0.176776692 : f32
    %47 = vector.broadcast %cst_20 : f32 to vector<8x8xf32>
    %48 = arith.mulf %46, %47 : vector<8x8xf32>
    %49 = vector.broadcast %41 : vector<1x8xf32> to vector<8x8xf32>
    %50 = arith.addf %48, %49 : vector<8x8xf32>
    %cst_21 = arith.constant dense<0xFF800000> : vector<8xf32>
    %51 = vector.multi_reduction <maximumf>, %50, %cst_21 [1] : vector<8x8xf32> to vector<8xf32>
    %52 = vector.shape_cast %51 : vector<8xf32> to vector<8x1xf32>
    %53 = vector.broadcast %52 : vector<8x1xf32> to vector<8x8xf32>
    %54 = arith.subf %50, %53 : vector<8x8xf32>
    %55 = math.exp %54 : vector<8x8xf32>
    %cst_22 = arith.constant dense<0.000000e+00> : vector<8xf32>
    %56 = vector.multi_reduction <add>, %55, %cst_22 [1] : vector<8x8xf32> to vector<8xf32>
    %57 = vector.shape_cast %56 : vector<8xf32> to vector<8x1xf32>
    %58 = tpu.reciprocal %57 {approx = true} : vector<8x1xf32> -> vector<8x1xf32>
    %59 = vector.broadcast %58 : vector<8x1xf32> to vector<8x8xf32>
    %60 = arith.mulf %55, %59 : vector<8x8xf32>
    %cst_23 = arith.constant dense<0.000000e+00> : vector<8x32xf32>
    %61 = tpu.matmul %60, %45, %cst_23 {dimension_numbers = #tpu.dot_dimension_numbers<[1], [0], [0], [1], [0, 0, 1, 1], [], []>} : vector<8x8xf32>, vector<8x32xf32>, vector<8x32xf32> -> vector<8x32xf32>
    %62 = arith.truncf %61 : vector<8x32xf32> to vector<8x32xbf16>
    %63 = vector.extract_strided_slice %32 {offsets = [0, 0], sizes = [32, 128], strides = [1, 1]} : vector<128x128xbf16> to vector<32x128xbf16>
    %cst_24 = arith.constant dense<0.000000e+00> : vector<8x128xf32>
    %64 = tpu.matmul %62, %63, %cst_24 {dimension_numbers = #tpu.dot_dimension_numbers<[1], [0], [0], [1], [0, 0, 1, 1], [], []>} : vector<8x32xbf16>, vector<32x128xbf16>, vector<8x128xf32> -> vector<8x128xf32>
    %65 = arith.addf %42, %64 : vector<8x128xf32>
    %66 = vector.extract_strided_slice %31 {offsets = [0, 32], sizes = [8, 32], strides = [1, 1]} : vector<16x384xf32> to vector<8x32xf32>
    %67 = vector.extract_strided_slice %31 {offsets = [0, 160], sizes = [8, 32], strides = [1, 1]} : vector<16x384xf32> to vector<8x32xf32>
    %68 = vector.extract_strided_slice %31 {offsets = [0, 288], sizes = [8, 32], strides = [1, 1]} : vector<16x384xf32> to vector<8x32xf32>
    %cst_25 = arith.constant dense<0.000000e+00> : vector<8x8xf32>
    %69 = tpu.matmul %66, %67, %cst_25 {dimension_numbers = #tpu.dot_dimension_numbers<[1], [1], [0], [0], [0, 0, 1, 0], [], []>} : vector<8x32xf32>, vector<8x32xf32>, vector<8x8xf32> -> vector<8x8xf32>
    %cst_26 = arith.constant 0.176776692 : f32
    %70 = vector.broadcast %cst_26 : f32 to vector<8x8xf32>
    %71 = arith.mulf %69, %70 : vector<8x8xf32>
    %72 = vector.broadcast %41 : vector<1x8xf32> to vector<8x8xf32>
    %73 = arith.addf %71, %72 : vector<8x8xf32>
    %cst_27 = arith.constant dense<0xFF800000> : vector<8xf32>
    %74 = vector.multi_reduction <maximumf>, %73, %cst_27 [1] : vector<8x8xf32> to vector<8xf32>
    %75 = vector.shape_cast %74 : vector<8xf32> to vector<8x1xf32>
    %76 = vector.broadcast %75 : vector<8x1xf32> to vector<8x8xf32>
    %77 = arith.subf %73, %76 : vector<8x8xf32>
    %78 = math.exp %77 : vector<8x8xf32>
    %cst_28 = arith.constant dense<0.000000e+00> : vector<8xf32>
    %79 = vector.multi_reduction <add>, %78, %cst_28 [1] : vector<8x8xf32> to vector<8xf32>
    %80 = vector.shape_cast %79 : vector<8xf32> to vector<8x1xf32>
    %81 = tpu.reciprocal %80 {approx = true} : vector<8x1xf32> -> vector<8x1xf32>
    %82 = vector.broadcast %81 : vector<8x1xf32> to vector<8x8xf32>
    %83 = arith.mulf %78, %82 : vector<8x8xf32>
    %cst_29 = arith.constant dense<0.000000e+00> : vector<8x32xf32>
    %84 = tpu.matmul %83, %68, %cst_29 {dimension_numbers = #tpu.dot_dimension_numbers<[1], [0], [0], [1], [0, 0, 1, 1], [], []>} : vector<8x8xf32>, vector<8x32xf32>, vector<8x32xf32> -> vector<8x32xf32>
    %85 = arith.truncf %84 : vector<8x32xf32> to vector<8x32xbf16>
    %86 = vector.extract_strided_slice %32 {offsets = [32, 0], sizes = [32, 128], strides = [1, 1]} : vector<128x128xbf16> to vector<32x128xbf16>
    %cst_30 = arith.constant dense<0.000000e+00> : vector<8x128xf32>
    %87 = tpu.matmul %85, %86, %cst_30 {dimension_numbers = #tpu.dot_dimension_numbers<[1], [0], [0], [1], [0, 0, 1, 1], [], []>} : vector<8x32xbf16>, vector<32x128xbf16>, vector<8x128xf32> -> vector<8x128xf32>
    %88 = arith.addf %65, %87 : vector<8x128xf32>
    %89 = vector.extract_strided_slice %31 {offsets = [0, 64], sizes = [8, 32], strides = [1, 1]} : vector<16x384xf32> to vector<8x32xf32>
    %90 = vector.extract_strided_slice %31 {offsets = [0, 192], sizes = [8, 32], strides = [1, 1]} : vector<16x384xf32> to vector<8x32xf32>
    %91 = vector.extract_strided_slice %31 {offsets = [0, 320], sizes = [8, 32], strides = [1, 1]} : vector<16x384xf32> to vector<8x32xf32>
    %cst_31 = arith.constant dense<0.000000e+00> : vector<8x8xf32>
    %92 = tpu.matmul %89, %90, %cst_31 {dimension_numbers = #tpu.dot_dimension_numbers<[1], [1], [0], [0], [0, 0, 1, 0], [], []>} : vector<8x32xf32>, vector<8x32xf32>, vector<8x8xf32> -> vector<8x8xf32>
    %cst_32 = arith.constant 0.176776692 : f32
    %93 = vector.broadcast %cst_32 : f32 to vector<8x8xf32>
    %94 = arith.mulf %92, %93 : vector<8x8xf32>
    %95 = vector.broadcast %41 : vector<1x8xf32> to vector<8x8xf32>
    %96 = arith.addf %94, %95 : vector<8x8xf32>
    %cst_33 = arith.constant dense<0xFF800000> : vector<8xf32>
    %97 = vector.multi_reduction <maximumf>, %96, %cst_33 [1] : vector<8x8xf32> to vector<8xf32>
    %98 = vector.shape_cast %97 : vector<8xf32> to vector<8x1xf32>
    %99 = vector.broadcast %98 : vector<8x1xf32> to vector<8x8xf32>
    %100 = arith.subf %96, %99 : vector<8x8xf32>
    %101 = math.exp %100 : vector<8x8xf32>
    %cst_34 = arith.constant dense<0.000000e+00> : vector<8xf32>
    %102 = vector.multi_reduction <add>, %101, %cst_34 [1] : vector<8x8xf32> to vector<8xf32>
    %103 = vector.shape_cast %102 : vector<8xf32> to vector<8x1xf32>
    %104 = tpu.reciprocal %103 {approx = true} : vector<8x1xf32> -> vector<8x1xf32>
    %105 = vector.broadcast %104 : vector<8x1xf32> to vector<8x8xf32>
    %106 = arith.mulf %101, %105 : vector<8x8xf32>
    %cst_35 = arith.constant dense<0.000000e+00> : vector<8x32xf32>
    %107 = tpu.matmul %106, %91, %cst_35 {dimension_numbers = #tpu.dot_dimension_numbers<[1], [0], [0], [1], [0, 0, 1, 1], [], []>} : vector<8x8xf32>, vector<8x32xf32>, vector<8x32xf32> -> vector<8x32xf32>
    %108 = arith.truncf %107 : vector<8x32xf32> to vector<8x32xbf16>
    %109 = vector.extract_strided_slice %32 {offsets = [64, 0], sizes = [32, 128], strides = [1, 1]} : vector<128x128xbf16> to vector<32x128xbf16>
    %cst_36 = arith.constant dense<0.000000e+00> : vector<8x128xf32>
    %110 = tpu.matmul %108, %109, %cst_36 {dimension_numbers = #tpu.dot_dimension_numbers<[1], [0], [0], [1], [0, 0, 1, 1], [], []>} : vector<8x32xbf16>, vector<32x128xbf16>, vector<8x128xf32> -> vector<8x128xf32>
    %111 = arith.addf %88, %110 : vector<8x128xf32>
    %112 = vector.extract_strided_slice %31 {offsets = [0, 96], sizes = [8, 32], strides = [1, 1]} : vector<16x384xf32> to vector<8x32xf32>
    %113 = vector.extract_strided_slice %31 {offsets = [0, 224], sizes = [8, 32], strides = [1, 1]} : vector<16x384xf32> to vector<8x32xf32>
    %114 = vector.extract_strided_slice %31 {offsets = [0, 352], sizes = [8, 32], strides = [1, 1]} : vector<16x384xf32> to vector<8x32xf32>
    %cst_37 = arith.constant dense<0.000000e+00> : vector<8x8xf32>
    %115 = tpu.matmul %112, %113, %cst_37 {dimension_numbers = #tpu.dot_dimension_numbers<[1], [1], [0], [0], [0, 0, 1, 0], [], []>} : vector<8x32xf32>, vector<8x32xf32>, vector<8x8xf32> -> vector<8x8xf32>
    %cst_38 = arith.constant 0.176776692 : f32
    %116 = vector.broadcast %cst_38 : f32 to vector<8x8xf32>
    %117 = arith.mulf %115, %116 : vector<8x8xf32>
    %118 = vector.broadcast %41 : vector<1x8xf32> to vector<8x8xf32>
    %119 = arith.addf %117, %118 : vector<8x8xf32>
    %cst_39 = arith.constant dense<0xFF800000> : vector<8xf32>
    %120 = vector.multi_reduction <maximumf>, %119, %cst_39 [1] : vector<8x8xf32> to vector<8xf32>
    %121 = vector.shape_cast %120 : vector<8xf32> to vector<8x1xf32>
    %122 = vector.broadcast %121 : vector<8x1xf32> to vector<8x8xf32>
    %123 = arith.subf %119, %122 : vector<8x8xf32>
    %124 = math.exp %123 : vector<8x8xf32>
    %cst_40 = arith.constant dense<0.000000e+00> : vector<8xf32>
    %125 = vector.multi_reduction <add>, %124, %cst_40 [1] : vector<8x8xf32> to vector<8xf32>
    %126 = vector.shape_cast %125 : vector<8xf32> to vector<8x1xf32>
    %127 = tpu.reciprocal %126 {approx = true} : vector<8x1xf32> -> vector<8x1xf32>
    %128 = vector.broadcast %127 : vector<8x1xf32> to vector<8x8xf32>
    %129 = arith.mulf %124, %128 : vector<8x8xf32>
    %cst_41 = arith.constant dense<0.000000e+00> : vector<8x32xf32>
    %130 = tpu.matmul %129, %114, %cst_41 {dimension_numbers = #tpu.dot_dimension_numbers<[1], [0], [0], [1], [0, 0, 1, 1], [], []>} : vector<8x8xf32>, vector<8x32xf32>, vector<8x32xf32> -> vector<8x32xf32>
    %131 = arith.truncf %130 : vector<8x32xf32> to vector<8x32xbf16>
    %132 = vector.extract_strided_slice %32 {offsets = [96, 0], sizes = [32, 128], strides = [1, 1]} : vector<128x128xbf16> to vector<32x128xbf16>
    %cst_42 = arith.constant dense<0.000000e+00> : vector<8x128xf32>
    %133 = tpu.matmul %131, %132, %cst_42 {dimension_numbers = #tpu.dot_dimension_numbers<[1], [0], [0], [1], [0, 0, 1, 1], [], []>} : vector<8x32xbf16>, vector<32x128xbf16>, vector<8x128xf32> -> vector<8x128xf32>
    %134 = arith.addf %111, %133 : vector<8x128xf32>
    %c2_i32_43 = arith.constant 2 : i32
    %135 = arith.muli %arg0, %c2_i32_43 : i32
    %c1_i32 = arith.constant 1 : i32
    %136 = arith.addi %135, %c1_i32 : i32
    %137 = arith.index_cast %136 : i32 to index
    %138 = memref.load %arg1[%137] : memref<2xi32, #tpu.memory_space<smem>>
    %139 = vector.broadcast %138 : i32 to vector<1x8xi32>
    %140 = arith.cmpi slt, %0, %139 : vector<1x8xi32>
    %cst_44 = arith.constant 0.000000e+00 : f32
    %cst_45 = arith.constant -1.000000e+09 : f32
    %141 = vector.broadcast %cst_44 : f32 to vector<1x8xf32>
    %142 = vector.broadcast %cst_45 : f32 to vector<1x8xf32>
    %143 = arith.select %140, %141, %142 : vector<1x8xi1>, vector<1x8xf32>
    %cst_46 = arith.constant 0.000000e+00 : f32
    %144 = vector.broadcast %cst_46 : f32 to vector<8x128xf32>
    %145 = vector.extract_strided_slice %31 {offsets = [8, 0], sizes = [8, 32], strides = [1, 1]} : vector<16x384xf32> to vector<8x32xf32>
    %146 = vector.extract_strided_slice %31 {offsets = [8, 128], sizes = [8, 32], strides = [1, 1]} : vector<16x384xf32> to vector<8x32xf32>
    %147 = vector.extract_strided_slice %31 {offsets = [8, 256], sizes = [8, 32], strides = [1, 1]} : vector<16x384xf32> to vector<8x32xf32>
    %cst_47 = arith.constant dense<0.000000e+00> : vector<8x8xf32>
    %148 = tpu.matmul %145, %146, %cst_47 {dimension_numbers = #tpu.dot_dimension_numbers<[1], [1], [0], [0], [0, 0, 1, 0], [], []>} : vector<8x32xf32>, vector<8x32xf32>, vector<8x8xf32> -> vector<8x8xf32>
    %cst_48 = arith.constant 0.176776692 : f32
    %149 = vector.broadcast %cst_48 : f32 to vector<8x8xf32>
    %150 = arith.mulf %148, %149 : vector<8x8xf32>
    %151 = vector.broadcast %143 : vector<1x8xf32> to vector<8x8xf32>
    %152 = arith.addf %150, %151 : vector<8x8xf32>
    %cst_49 = arith.constant dense<0xFF800000> : vector<8xf32>
    %153 = vector.multi_reduction <maximumf>, %152, %cst_49 [1] : vector<8x8xf32> to vector<8xf32>
    %154 = vector.shape_cast %153 : vector<8xf32> to vector<8x1xf32>
    %155 = vector.broadcast %154 : vector<8x1xf32> to vector<8x8xf32>
    %156 = arith.subf %152, %155 : vector<8x8xf32>
    %157 = math.exp %156 : vector<8x8xf32>
    %cst_50 = arith.constant dense<0.000000e+00> : vector<8xf32>
    %158 = vector.multi_reduction <add>, %157, %cst_50 [1] : vector<8x8xf32> to vector<8xf32>
    %159 = vector.shape_cast %158 : vector<8xf32> to vector<8x1xf32>
    %160 = tpu.reciprocal %159 {approx = true} : vector<8x1xf32> -> vector<8x1xf32>
    %161 = vector.broadcast %160 : vector<8x1xf32> to vector<8x8xf32>
    %162 = arith.mulf %157, %161 : vector<8x8xf32>
    %cst_51 = arith.constant dense<0.000000e+00> : vector<8x32xf32>
    %163 = tpu.matmul %162, %147, %cst_51 {dimension_numbers = #tpu.dot_dimension_numbers<[1], [0], [0], [1], [0, 0, 1, 1], [], []>} : vector<8x8xf32>, vector<8x32xf32>, vector<8x32xf32> -> vector<8x32xf32>
    %164 = arith.truncf %163 : vector<8x32xf32> to vector<8x32xbf16>
    %165 = vector.extract_strided_slice %32 {offsets = [0, 0], sizes = [32, 128], strides = [1, 1]} : vector<128x128xbf16> to vector<32x128xbf16>
    %cst_52 = arith.constant dense<0.000000e+00> : vector<8x128xf32>
    %166 = tpu.matmul %164, %165, %cst_52 {dimension_numbers = #tpu.dot_dimension_numbers<[1], [0], [0], [1], [0, 0, 1, 1], [], []>} : vector<8x32xbf16>, vector<32x128xbf16>, vector<8x128xf32> -> vector<8x128xf32>
    %167 = arith.addf %144, %166 : vector<8x128xf32>
    %168 = vector.extract_strided_slice %31 {offsets = [8, 32], sizes = [8, 32], strides = [1, 1]} : vector<16x384xf32> to vector<8x32xf32>
    %169 = vector.extract_strided_slice %31 {offsets = [8, 160], sizes = [8, 32], strides = [1, 1]} : vector<16x384xf32> to vector<8x32xf32>
    %170 = vector.extract_strided_slice %31 {offsets = [8, 288], sizes = [8, 32], strides = [1, 1]} : vector<16x384xf32> to vector<8x32xf32>
    %cst_53 = arith.constant dense<0.000000e+00> : vector<8x8xf32>
    %171 = tpu.matmul %168, %169, %cst_53 {dimension_numbers = #tpu.dot_dimension_numbers<[1], [1], [0], [0], [0, 0, 1, 0], [], []>} : vector<8x32xf32>, vector<8x32xf32>, vector<8x8xf32> -> vector<8x8xf32>
    %cst_54 = arith.constant 0.176776692 : f32
    %172 = vector.broadcast %cst_54 : f32 to vector<8x8xf32>
    %173 = arith.mulf %171, %172 : vector<8x8xf32>
    %174 = vector.broadcast %143 : vector<1x8xf32> to vector<8x8xf32>
    %175 = arith.addf %173, %174 : vector<8x8xf32>
    %cst_55 = arith.constant dense<0xFF800000> : vector<8xf32>
    %176 = vector.multi_reduction <maximumf>, %175, %cst_55 [1] : vector<8x8xf32> to vector<8xf32>
    %177 = vector.shape_cast %176 : vector<8xf32> to vector<8x1xf32>
    %178 = vector.broadcast %177 : vector<8x1xf32> to vector<8x8xf32>
    %179 = arith.subf %175, %178 : vector<8x8xf32>
    %180 = math.exp %179 : vector<8x8xf32>
    %cst_56 = arith.constant dense<0.000000e+00> : vector<8xf32>
    %181 = vector.multi_reduction <add>, %180, %cst_56 [1] : vector<8x8xf32> to vector<8xf32>
    %182 = vector.shape_cast %181 : vector<8xf32> to vector<8x1xf32>
    %183 = tpu.reciprocal %182 {approx = true} : vector<8x1xf32> -> vector<8x1xf32>
    %184 = vector.broadcast %183 : vector<8x1xf32> to vector<8x8xf32>
    %185 = arith.mulf %180, %184 : vector<8x8xf32>
    %cst_57 = arith.constant dense<0.000000e+00> : vector<8x32xf32>
    %186 = tpu.matmul %185, %170, %cst_57 {dimension_numbers = #tpu.dot_dimension_numbers<[1], [0], [0], [1], [0, 0, 1, 1], [], []>} : vector<8x8xf32>, vector<8x32xf32>, vector<8x32xf32> -> vector<8x32xf32>
    %187 = arith.truncf %186 : vector<8x32xf32> to vector<8x32xbf16>
    %188 = vector.extract_strided_slice %32 {offsets = [32, 0], sizes = [32, 128], strides = [1, 1]} : vector<128x128xbf16> to vector<32x128xbf16>
    %cst_58 = arith.constant dense<0.000000e+00> : vector<8x128xf32>
    %189 = tpu.matmul %187, %188, %cst_58 {dimension_numbers = #tpu.dot_dimension_numbers<[1], [0], [0], [1], [0, 0, 1, 1], [], []>} : vector<8x32xbf16>, vector<32x128xbf16>, vector<8x128xf32> -> vector<8x128xf32>
    %190 = arith.addf %167, %189 : vector<8x128xf32>
    %191 = vector.extract_strided_slice %31 {offsets = [8, 64], sizes = [8, 32], strides = [1, 1]} : vector<16x384xf32> to vector<8x32xf32>
    %192 = vector.extract_strided_slice %31 {offsets = [8, 192], sizes = [8, 32], strides = [1, 1]} : vector<16x384xf32> to vector<8x32xf32>
    %193 = vector.extract_strided_slice %31 {offsets = [8, 320], sizes = [8, 32], strides = [1, 1]} : vector<16x384xf32> to vector<8x32xf32>
    %cst_59 = arith.constant dense<0.000000e+00> : vector<8x8xf32>
    %194 = tpu.matmul %191, %192, %cst_59 {dimension_numbers = #tpu.dot_dimension_numbers<[1], [1], [0], [0], [0, 0, 1, 0], [], []>} : vector<8x32xf32>, vector<8x32xf32>, vector<8x8xf32> -> vector<8x8xf32>
    %cst_60 = arith.constant 0.176776692 : f32
    %195 = vector.broadcast %cst_60 : f32 to vector<8x8xf32>
    %196 = arith.mulf %194, %195 : vector<8x8xf32>
    %197 = vector.broadcast %143 : vector<1x8xf32> to vector<8x8xf32>
    %198 = arith.addf %196, %197 : vector<8x8xf32>
    %cst_61 = arith.constant dense<0xFF800000> : vector<8xf32>
    %199 = vector.multi_reduction <maximumf>, %198, %cst_61 [1] : vector<8x8xf32> to vector<8xf32>
    %200 = vector.shape_cast %199 : vector<8xf32> to vector<8x1xf32>
    %201 = vector.broadcast %200 : vector<8x1xf32> to vector<8x8xf32>
    %202 = arith.subf %198, %201 : vector<8x8xf32>
    %203 = math.exp %202 : vector<8x8xf32>
    %cst_62 = arith.constant dense<0.000000e+00> : vector<8xf32>
    %204 = vector.multi_reduction <add>, %203, %cst_62 [1] : vector<8x8xf32> to vector<8xf32>
    %205 = vector.shape_cast %204 : vector<8xf32> to vector<8x1xf32>
    %206 = tpu.reciprocal %205 {approx = true} : vector<8x1xf32> -> vector<8x1xf32>
    %207 = vector.broadcast %206 : vector<8x1xf32> to vector<8x8xf32>
    %208 = arith.mulf %203, %207 : vector<8x8xf32>
    %cst_63 = arith.constant dense<0.000000e+00> : vector<8x32xf32>
    %209 = tpu.matmul %208, %193, %cst_63 {dimension_numbers = #tpu.dot_dimension_numbers<[1], [0], [0], [1], [0, 0, 1, 1], [], []>} : vector<8x8xf32>, vector<8x32xf32>, vector<8x32xf32> -> vector<8x32xf32>
    %210 = arith.truncf %209 : vector<8x32xf32> to vector<8x32xbf16>
    %211 = vector.extract_strided_slice %32 {offsets = [64, 0], sizes = [32, 128], strides = [1, 1]} : vector<128x128xbf16> to vector<32x128xbf16>
    %cst_64 = arith.constant dense<0.000000e+00> : vector<8x128xf32>
    %212 = tpu.matmul %210, %211, %cst_64 {dimension_numbers = #tpu.dot_dimension_numbers<[1], [0], [0], [1], [0, 0, 1, 1], [], []>} : vector<8x32xbf16>, vector<32x128xbf16>, vector<8x128xf32> -> vector<8x128xf32>
    %213 = arith.addf %190, %212 : vector<8x128xf32>
    %214 = vector.extract_strided_slice %31 {offsets = [8, 96], sizes = [8, 32], strides = [1, 1]} : vector<16x384xf32> to vector<8x32xf32>
    %215 = vector.extract_strided_slice %31 {offsets = [8, 224], sizes = [8, 32], strides = [1, 1]} : vector<16x384xf32> to vector<8x32xf32>
    %216 = vector.extract_strided_slice %31 {offsets = [8, 352], sizes = [8, 32], strides = [1, 1]} : vector<16x384xf32> to vector<8x32xf32>
    %cst_65 = arith.constant dense<0.000000e+00> : vector<8x8xf32>
    %217 = tpu.matmul %214, %215, %cst_65 {dimension_numbers = #tpu.dot_dimension_numbers<[1], [1], [0], [0], [0, 0, 1, 0], [], []>} : vector<8x32xf32>, vector<8x32xf32>, vector<8x8xf32> -> vector<8x8xf32>
    %cst_66 = arith.constant 0.176776692 : f32
    %218 = vector.broadcast %cst_66 : f32 to vector<8x8xf32>
    %219 = arith.mulf %217, %218 : vector<8x8xf32>
    %220 = vector.broadcast %143 : vector<1x8xf32> to vector<8x8xf32>
    %221 = arith.addf %219, %220 : vector<8x8xf32>
    %cst_67 = arith.constant dense<0xFF800000> : vector<8xf32>
    %222 = vector.multi_reduction <maximumf>, %221, %cst_67 [1] : vector<8x8xf32> to vector<8xf32>
    %223 = vector.shape_cast %222 : vector<8xf32> to vector<8x1xf32>
    %224 = vector.broadcast %223 : vector<8x1xf32> to vector<8x8xf32>
    %225 = arith.subf %221, %224 : vector<8x8xf32>
    %226 = math.exp %225 : vector<8x8xf32>
    %cst_68 = arith.constant dense<0.000000e+00> : vector<8xf32>
    %227 = vector.multi_reduction <add>, %226, %cst_68 [1] : vector<8x8xf32> to vector<8xf32>
    %228 = vector.shape_cast %227 : vector<8xf32> to vector<8x1xf32>
    %229 = tpu.reciprocal %228 {approx = true} : vector<8x1xf32> -> vector<8x1xf32>
    %230 = vector.broadcast %229 : vector<8x1xf32> to vector<8x8xf32>
    %231 = arith.mulf %226, %230 : vector<8x8xf32>
    %cst_69 = arith.constant dense<0.000000e+00> : vector<8x32xf32>
    %232 = tpu.matmul %231, %216, %cst_69 {dimension_numbers = #tpu.dot_dimension_numbers<[1], [0], [0], [1], [0, 0, 1, 1], [], []>} : vector<8x8xf32>, vector<8x32xf32>, vector<8x32xf32> -> vector<8x32xf32>
    %233 = arith.truncf %232 : vector<8x32xf32> to vector<8x32xbf16>
    %234 = vector.extract_strided_slice %32 {offsets = [96, 0], sizes = [32, 128], strides = [1, 1]} : vector<128x128xbf16> to vector<32x128xbf16>
    %cst_70 = arith.constant dense<0.000000e+00> : vector<8x128xf32>
    %235 = tpu.matmul %233, %234, %cst_70 {dimension_numbers = #tpu.dot_dimension_numbers<[1], [0], [0], [1], [0, 0, 1, 1], [], []>} : vector<8x32xbf16>, vector<32x128xbf16>, vector<8x128xf32> -> vector<8x128xf32>
    %236 = arith.addf %213, %235 : vector<8x128xf32>
    %237 = tpu.concatenate %134, %236 in 0 : vector<8x128xf32>, vector<8x128xf32> -> vector<16x128xf32>
    %c0_71 = arith.constant 0 : index
    %c0_72 = arith.constant 0 : index
    %238 = vector.load %arg8[%c0_71, %c0_72] : memref<1x128xf32, #tpu.memory_space<vmem>>, vector<1x128xf32>
    %239 = vector.broadcast %238 : vector<1x128xf32> to vector<16x128xf32>
    %240 = arith.addf %237, %239 : vector<16x128xf32>
    %241 = arith.addf %25, %240 : vector<16x128xf32>
    %c0_73 = arith.constant 0 : index
    %c0_74 = arith.constant 0 : index
    %242 = vector.load %arg9[%c0_73, %c0_74] : memref<1x128xf32, #tpu.memory_space<vmem>>, vector<1x128xf32>
    %c0_75 = arith.constant 0 : index
    %c0_76 = arith.constant 0 : index
    %243 = vector.load %arg10[%c0_75, %c0_76] : memref<1x128xf32, #tpu.memory_space<vmem>>, vector<1x128xf32>
    %cst_77 = arith.constant dense<0.000000e+00> : vector<16xf32>
    %244 = vector.multi_reduction <add>, %241, %cst_77 [1] : vector<16x128xf32> to vector<16xf32>
    %245 = vector.shape_cast %244 : vector<16xf32> to vector<16x1xf32>
    %cst_78 = arith.constant 1.280000e+02 : f32
    %246 = vector.broadcast %cst_78 : f32 to vector<16x1xf32>
    %247 = arith.divf %245, %246 : vector<16x1xf32>
    %248 = vector.broadcast %247 : vector<16x1xf32> to vector<16x128xf32>
    %249 = arith.subf %241, %248 : vector<16x128xf32>
    %250 = arith.mulf %249, %249 : vector<16x128xf32>
    %cst_79 = arith.constant dense<0.000000e+00> : vector<16xf32>
    %251 = vector.multi_reduction <add>, %250, %cst_79 [1] : vector<16x128xf32> to vector<16xf32>
    %252 = vector.shape_cast %251 : vector<16xf32> to vector<16x1xf32>
    %cst_80 = arith.constant 1.280000e+02 : f32
    %253 = vector.broadcast %cst_80 : f32 to vector<16x1xf32>
    %254 = arith.divf %252, %253 : vector<16x1xf32>
    %255 = vector.broadcast %247 : vector<16x1xf32> to vector<16x128xf32>
    %256 = arith.subf %241, %255 : vector<16x128xf32>
    %cst_81 = arith.constant 9.99999996E-13 : f32
    %257 = vector.broadcast %cst_81 : f32 to vector<16x1xf32>
    %258 = arith.addf %254, %257 : vector<16x1xf32>
    %259 = math.rsqrt %258 : vector<16x1xf32>
    %260 = vector.broadcast %259 : vector<16x1xf32> to vector<16x128xf32>
    %261 = arith.mulf %256, %260 : vector<16x128xf32>
    %262 = vector.broadcast %242 : vector<1x128xf32> to vector<16x128xf32>
    %263 = arith.mulf %261, %262 : vector<16x128xf32>
    %264 = vector.broadcast %243 : vector<1x128xf32> to vector<16x128xf32>
    %265 = arith.addf %263, %264 : vector<16x128xf32>
    %266 = arith.truncf %265 : vector<16x128xf32> to vector<16x128xbf16>
    %c0_82 = arith.constant 0 : index
    %c0_83 = arith.constant 0 : index
    %267 = vector.load %arg11[%c0_82, %c0_83] : memref<128x512xbf16, #tpu.memory_space<vmem>>, vector<128x512xbf16>
    %cst_84 = arith.constant dense<0.000000e+00> : vector<16x512xf32>
    %268 = tpu.matmul %266, %267, %cst_84 {dimension_numbers = #tpu.dot_dimension_numbers<[1], [0], [0], [1], [0, 0, 1, 1], [], []>} : vector<16x128xbf16>, vector<128x512xbf16>, vector<16x512xf32> -> vector<16x512xf32>
    %c0_85 = arith.constant 0 : index
    %c0_86 = arith.constant 0 : index
    %269 = vector.load %arg12[%c0_85, %c0_86] : memref<1x512xf32, #tpu.memory_space<vmem>>, vector<1x512xf32>
    %270 = vector.broadcast %269 : vector<1x512xf32> to vector<16x512xf32>
    %271 = arith.addf %268, %270 : vector<16x512xf32>
    %272 = arith.mulf %271, %271 : vector<16x512xf32>
    %273 = arith.mulf %271, %272 : vector<16x512xf32>
    %cst_87 = arith.constant 4.471500e-02 : f32
    %274 = vector.broadcast %cst_87 : f32 to vector<16x512xf32>
    %275 = arith.mulf %274, %273 : vector<16x512xf32>
    %276 = arith.addf %271, %275 : vector<16x512xf32>
    %cst_88 = arith.constant 0.797884583 : f32
    %277 = vector.broadcast %cst_88 : f32 to vector<16x512xf32>
    %278 = arith.mulf %277, %276 : vector<16x512xf32>
    %279 = math.tanh %278 : vector<16x512xf32>
    %cst_89 = arith.constant 1.000000e+00 : f32
    %280 = vector.broadcast %cst_89 : f32 to vector<16x512xf32>
    %281 = arith.addf %280, %279 : vector<16x512xf32>
    %cst_90 = arith.constant 5.000000e-01 : f32
    %282 = vector.broadcast %cst_90 : f32 to vector<16x512xf32>
    %283 = arith.mulf %282, %281 : vector<16x512xf32>
    %284 = arith.mulf %271, %283 : vector<16x512xf32>
    %285 = arith.truncf %284 : vector<16x512xf32> to vector<16x512xbf16>
    %c0_91 = arith.constant 0 : index
    %c0_92 = arith.constant 0 : index
    %286 = vector.load %arg13[%c0_91, %c0_92] : memref<512x128xbf16, #tpu.memory_space<vmem>>, vector<512x128xbf16>
    %cst_93 = arith.constant dense<0.000000e+00> : vector<16x128xf32>
    %287 = tpu.matmul %285, %286, %cst_93 {dimension_numbers = #tpu.dot_dimension_numbers<[1], [0], [0], [1], [0, 0, 1, 1], [], []>} : vector<16x512xbf16>, vector<512x128xbf16>, vector<16x128xf32> -> vector<16x128xf32>
    %c0_94 = arith.constant 0 : index
    %c0_95 = arith.constant 0 : index
    %288 = vector.load %arg14[%c0_94, %c0_95] : memref<1x128xf32, #tpu.memory_space<vmem>>, vector<1x128xf32>
    %289 = vector.broadcast %288 : vector<1x128xf32> to vector<16x128xf32>
    %290 = arith.addf %287, %289 : vector<16x128xf32>
    %291 = arith.addf %265, %290 : vector<16x128xf32>
    %c0_96 = arith.constant 0 : index
    %c0_97 = arith.constant 0 : index
    %292 = vector.load %arg15[%c0_96, %c0_97] : memref<1x128xf32, #tpu.memory_space<vmem>>, vector<1x128xf32>
    %c0_98 = arith.constant 0 : index
    %c0_99 = arith.constant 0 : index
    %293 = vector.load %arg16[%c0_98, %c0_99] : memref<1x128xf32, #tpu.memory_space<vmem>>, vector<1x128xf32>
    %cst_100 = arith.constant dense<0.000000e+00> : vector<16xf32>
    %294 = vector.multi_reduction <add>, %291, %cst_100 [1] : vector<16x128xf32> to vector<16xf32>
    %295 = vector.shape_cast %294 : vector<16xf32> to vector<16x1xf32>
    %cst_101 = arith.constant 1.280000e+02 : f32
    %296 = vector.broadcast %cst_101 : f32 to vector<16x1xf32>
    %297 = arith.divf %295, %296 : vector<16x1xf32>
    %298 = vector.broadcast %297 : vector<16x1xf32> to vector<16x128xf32>
    %299 = arith.subf %291, %298 : vector<16x128xf32>
    %300 = arith.mulf %299, %299 : vector<16x128xf32>
    %cst_102 = arith.constant dense<0.000000e+00> : vector<16xf32>
    %301 = vector.multi_reduction <add>, %300, %cst_102 [1] : vector<16x128xf32> to vector<16xf32>
    %302 = vector.shape_cast %301 : vector<16xf32> to vector<16x1xf32>
    %cst_103 = arith.constant 1.280000e+02 : f32
    %303 = vector.broadcast %cst_103 : f32 to vector<16x1xf32>
    %304 = arith.divf %302, %303 : vector<16x1xf32>
    %305 = vector.broadcast %297 : vector<16x1xf32> to vector<16x128xf32>
    %306 = arith.subf %291, %305 : vector<16x128xf32>
    %cst_104 = arith.constant 9.99999996E-13 : f32
    %307 = vector.broadcast %cst_104 : f32 to vector<16x1xf32>
    %308 = arith.addf %304, %307 : vector<16x1xf32>
    %309 = math.rsqrt %308 : vector<16x1xf32>
    %310 = vector.broadcast %309 : vector<16x1xf32> to vector<16x128xf32>
    %311 = arith.mulf %306, %310 : vector<16x128xf32>
    %312 = vector.broadcast %292 : vector<1x128xf32> to vector<16x128xf32>
    %313 = arith.mulf %311, %312 : vector<16x128xf32>
    %314 = vector.broadcast %293 : vector<1x128xf32> to vector<16x128xf32>
    %315 = arith.addf %313, %314 : vector<16x128xf32>
    %c2_i32_105 = arith.constant 2 : i32
    %316 = arith.muli %arg0, %c2_i32_105 : i32
    %c0_i32_106 = arith.constant 0 : i32
    %317 = arith.addi %316, %c0_i32_106 : i32
    %318 = arith.index_cast %317 : i32 to index
    %319 = memref.load %arg1[%318] : memref<2xi32, #tpu.memory_space<smem>>
    %320 = vector.broadcast %319 : i32 to vector<1x8xi32>
    %321 = arith.cmpi slt, %0, %320 : vector<1x8xi32>
    %322 = arith.extui %321 : vector<1x8xi1> to vector<1x8xi32>
    %323 = arith.sitofp %322 : vector<1x8xi32> to vector<1x8xf32>
    %324 = vector.extract_strided_slice %315 {offsets = [0, 0], sizes = [8, 128], strides = [1, 1]} : vector<16x128xf32> to vector<8x128xf32>
    %cst_107 = arith.constant dense<0.000000e+00> : vector<1x128xf32>
    %325 = tpu.matmul %323, %324, %cst_107 {dimension_numbers = #tpu.dot_dimension_numbers<[1], [0], [0], [1], [0, 0, 1, 1], [], []>} : vector<1x8xf32>, vector<8x128xf32>, vector<1x128xf32> -> vector<1x128xf32>
    %cst_108 = arith.constant dense<0.000000e+00> : vector<1xf32>
    %326 = vector.multi_reduction <add>, %323, %cst_108 [1] : vector<1x8xf32> to vector<1xf32>
    %327 = vector.shape_cast %326 : vector<1xf32> to vector<1x1xf32>
    %cst_109 = arith.constant 1.000000e+00 : f32
    %328 = vector.broadcast %cst_109 : f32 to vector<1x1xf32>
    %329 = arith.maximumf %327, %328 : vector<1x1xf32>
    %330 = tpu.reciprocal %329 {approx = true} : vector<1x1xf32> -> vector<1x1xf32>
    %331 = vector.broadcast %330 : vector<1x1xf32> to vector<1x128xf32>
    %332 = arith.mulf %325, %331 : vector<1x128xf32>
    %c0_110 = arith.constant 0 : index
    %c0_111 = arith.constant 0 : index
    %c0_112 = arith.constant 0 : index
    %333 = vector.load %arg17[%c0_110, %c0_111, %c0_112] : memref<2x1x128xf32, #tpu.memory_space<vmem>>, vector<1x1x128xf32>
    %334 = vector.shape_cast %333 : vector<1x1x128xf32> to vector<1x128xf32>
    %335 = vector.shape_cast %332 : vector<1x128xf32> to vector<1x1x128xf32>
    tpu.vector_store %arg17[%c0_110, %c0_111, %c0_112], %335 {strides = array<i32>} : memref<2x1x128xf32, #tpu.memory_space<vmem>>, vector<1x1x128xf32>,
    %c2_i32_113 = arith.constant 2 : i32
    %336 = arith.muli %arg0, %c2_i32_113 : i32
    %c1_i32_114 = arith.constant 1 : i32
    %337 = arith.addi %336, %c1_i32_114 : i32
    %338 = arith.index_cast %337 : i32 to index
    %339 = memref.load %arg1[%338] : memref<2xi32, #tpu.memory_space<smem>>
    %340 = vector.broadcast %339 : i32 to vector<1x8xi32>
    %341 = arith.cmpi slt, %0, %340 : vector<1x8xi32>
    %342 = arith.extui %341 : vector<1x8xi1> to vector<1x8xi32>
    %343 = arith.sitofp %342 : vector<1x8xi32> to vector<1x8xf32>
    %344 = vector.extract_strided_slice %315 {offsets = [8, 0], sizes = [8, 128], strides = [1, 1]} : vector<16x128xf32> to vector<8x128xf32>
    %cst_115 = arith.constant dense<0.000000e+00> : vector<1x128xf32>
    %345 = tpu.matmul %343, %344, %cst_115 {dimension_numbers = #tpu.dot_dimension_numbers<[1], [0], [0], [1], [0, 0, 1, 1], [], []>} : vector<1x8xf32>, vector<8x128xf32>, vector<1x128xf32> -> vector<1x128xf32>
    %cst_116 = arith.constant dense<0.000000e+00> : vector<1xf32>
    %346 = vector.multi_reduction <add>, %343, %cst_116 [1] : vector<1x8xf32> to vector<1xf32>
    %347 = vector.shape_cast %346 : vector<1xf32> to vector<1x1xf32>
    %cst_117 = arith.constant 1.000000e+00 : f32
    %348 = vector.broadcast %cst_117 : f32 to vector<1x1xf32>
    %349 = arith.maximumf %347, %348 : vector<1x1xf32>
    %350 = tpu.reciprocal %349 {approx = true} : vector<1x1xf32> -> vector<1x1xf32>
    %351 = vector.broadcast %350 : vector<1x1xf32> to vector<1x128xf32>
    %352 = arith.mulf %345, %351 : vector<1x128xf32>
    %c1 = arith.constant 1 : index
    %c0_118 = arith.constant 0 : index
    %c0_119 = arith.constant 0 : index
    %353 = vector.load %arg17[%c1, %c0_118, %c0_119] : memref<2x1x128xf32, #tpu.memory_space<vmem>>, vector<1x1x128xf32>
    %354 = vector.shape_cast %353 : vector<1x1x128xf32> to vector<1x128xf32>
    %355 = vector.shape_cast %352 : vector<1x128xf32> to vector<1x1x128xf32>
    tpu.vector_store %arg17[%c1, %c0_118, %c0_119], %355 {strides = array<i32>} : memref<2x1x128xf32, #tpu.memory_space<vmem>>, vector<1x1x128xf32>,
    return
  }
  func.func @transform_0(%arg0: i32, %arg1: memref<2xi32, #tpu.memory_space<smem>>) -> (i32, i32) {
    %c0_i32 = arith.constant 0 : i32
    %c0_i32_0 = arith.constant 0 : i32
    return %arg0, %c0_i32 : i32, i32
  }
  func.func @transform_1(%arg0: i32, %arg1: memref<2xi32, #tpu.memory_space<smem>>) -> (i32, i32) {
    %c0_i32 = arith.constant 0 : i32
    %c0_i32_0 = arith.constant 0 : i32
    %c0_i32_1 = arith.constant 0 : i32
    return %c0_i32, %c0_i32_0 : i32, i32
  }
  func.func @transform_2(%arg0: i32, %arg1: memref<2xi32, #tpu.memory_space<smem>>) -> (i32, i32) {
    %c0_i32 = arith.constant 0 : i32
    %c0_i32_0 = arith.constant 0 : i32
    %c0_i32_1 = arith.constant 0 : i32
    return %c0_i32, %c0_i32_0 : i32, i32
  }
  func.func @transform_3(%arg0: i32, %arg1: memref<2xi32, #tpu.memory_space<smem>>) -> (i32, i32) {
    %c0_i32 = arith.constant 0 : i32
    %c0_i32_0 = arith.constant 0 : i32
    %c0_i32_1 = arith.constant 0 : i32
    return %c0_i32, %c0_i32_0 : i32, i32
  }
  func.func @transform_4(%arg0: i32, %arg1: memref<2xi32, #tpu.memory_space<smem>>) -> (i32, i32) {
    %c0_i32 = arith.constant 0 : i32
    %c0_i32_0 = arith.constant 0 : i32
    %c0_i32_1 = arith.constant 0 : i32
    return %c0_i32, %c0_i32_0 : i32, i32
  }
  func.func @transform_5(%arg0: i32, %arg1: memref<2xi32, #tpu.memory_space<smem>>) -> (i32, i32) {
    %c0_i32 = arith.constant 0 : i32
    %c0_i32_0 = arith.constant 0 : i32
    %c0_i32_1 = arith.constant 0 : i32
    return %c0_i32, %c0_i32_0 : i32, i32
  }
  func.func @transform_6(%arg0: i32, %arg1: memref<2xi32, #tpu.memory_space<smem>>) -> (i32, i32) {
    %c0_i32 = arith.constant 0 : i32
    %c0_i32_0 = arith.constant 0 : i32
    %c0_i32_1 = arith.constant 0 : i32
    return %c0_i32, %c0_i32_0 : i32, i32
  }
  func.func @transform_7(%arg0: i32, %arg1: memref<2xi32, #tpu.memory_space<smem>>) -> (i32, i32) {
    %c0_i32 = arith.constant 0 : i32
    %c0_i32_0 = arith.constant 0 : i32
    %c0_i32_1 = arith.constant 0 : i32
    return %c0_i32, %c0_i32_0 : i32, i32
  }
  func.func @transform_8(%arg0: i32, %arg1: memref<2xi32, #tpu.memory_space<smem>>) -> (i32, i32) {
    %c0_i32 = arith.constant 0 : i32
    %c0_i32_0 = arith.constant 0 : i32
    %c0_i32_1 = arith.constant 0 : i32
    return %c0_i32, %c0_i32_0 : i32, i32
  }
  func.func @transform_9(%arg0: i32, %arg1: memref<2xi32, #tpu.memory_space<smem>>) -> (i32, i32) {
    %c0_i32 = arith.constant 0 : i32
    %c0_i32_0 = arith.constant 0 : i32
    %c0_i32_1 = arith.constant 0 : i32
    return %c0_i32, %c0_i32_0 : i32, i32
  }
  func.func @transform_10(%arg0: i32, %arg1: memref<2xi32, #tpu.memory_space<smem>>) -> (i32, i32) {
    %c0_i32 = arith.constant 0 : i32
    %c0_i32_0 = arith.constant 0 : i32
    %c0_i32_1 = arith.constant 0 : i32
    return %c0_i32, %c0_i32_0 : i32, i32
  }
  func.func @transform_11(%arg0: i32, %arg1: memref<2xi32, #tpu.memory_space<smem>>) -> (i32, i32) {
    %c0_i32 = arith.constant 0 : i32
    %c0_i32_0 = arith.constant 0 : i32
    %c0_i32_1 = arith.constant 0 : i32
    return %c0_i32, %c0_i32_0 : i32, i32
  }
  func.func @transform_12(%arg0: i32, %arg1: memref<2xi32, #tpu.memory_space<smem>>) -> (i32, i32) {
    %c0_i32 = arith.constant 0 : i32
    %c0_i32_0 = arith.constant 0 : i32
    %c0_i32_1 = arith.constant 0 : i32
    return %c0_i32, %c0_i32_0 : i32, i32
  }
  func.func @transform_13(%arg0: i32, %arg1: memref<2xi32, #tpu.memory_space<smem>>) -> (i32, i32) {
    %c0_i32 = arith.constant 0 : i32
    %c0_i32_0 = arith.constant 0 : i32
    %c0_i32_1 = arith.constant 0 : i32
    return %c0_i32, %c0_i32_0 : i32, i32
  }
  func.func @transform_14(%arg0: i32, %arg1: memref<2xi32, #tpu.memory_space<smem>>) -> (i32, i32) {
    %c0_i32 = arith.constant 0 : i32
    %c0_i32_0 = arith.constant 0 : i32
    %c0_i32_1 = arith.constant 0 : i32
    return %c0_i32, %c0_i32_0 : i32, i32
  }
  func.func @transform_15(%arg0: i32, %arg1: memref<2xi32, #tpu.memory_space<smem>>) -> (i32, i32, i32) {
    %c0_i32 = arith.constant 0 : i32
    %c0_i32_0 = arith.constant 0 : i32
    %c0_i32_1 = arith.constant 0 : i32
    return %arg0, %c0_i32, %c0_i32_0 : i32, i32, i32
  }
}

</mosaic_0001>

<llo_original>
// kernel: tpu_custom_call.1
$region0: #{tpu_custom_call.1}
  #allocation0 [shape = 'u32[]', space=smem, size = 0x4, offset = 0x4, fixed_abs, tag = 'smem constant byte address 0x4 - core index']
  #allocation1 [shape = 'u32[144,128]{1,0:T(1,128)}', space=vmem, size = 0x12000, scoped, tag = 'internal scratch']
  #allocation2 [shape = 's32[1]{0}', space=sflag, size = 0x4, scoped, tag = 'scoped memory for tpu_custom_call.1']
  #allocation3 [shape = 'u8[512]{0}', space=smem, size = 0x200, scoped, tag = 'prefetched SMEM operand 0']
  %s0 = inlined_call_operand.hbm [shape: s32[2], index: 0, kind: input, shape index: {}]
  %s1 = inlined_call_operand.hbm [shape: f32[16,128], index: 1, kind: input, shape index: {}]
  %s2 = inlined_call_operand.hbm [shape: f32[1,128], index: 2, kind: input, shape index: {}]
  %s3 = inlined_call_operand.hbm [shape: f32[1,128], index: 3, kind: input, shape index: {}]
  %s4 = inlined_call_operand.hbm [shape: bf16[128,384], index: 4, kind: input, shape index: {}]
  %s5 = inlined_call_operand.vmem [shape: f32[1,384], index: 5, kind: input, shape index: {}]
  %s6 = inlined_call_operand.hbm [shape: bf16[128,128], index: 6, kind: input, shape index: {}]
  %s7 = inlined_call_operand.vmem [shape: f32[1,128], index: 7, kind: input, shape index: {}]
  %s8 = inlined_call_operand.vmem [shape: f32[1,128], index: 8, kind: input, shape index: {}]
  %s9 = inlined_call_operand.vmem [shape: f32[1,128], index: 9, kind: input, shape index: {}]
  %s10 = inlined_call_operand.hbm [shape: bf16[128,512], index: 10, kind: input, shape index: {}]
  %s11 = inlined_call_operand.vmem [shape: f32[1,512], index: 11, kind: input, shape index: {}]
  %s12 = inlined_call_operand.hbm [shape: bf16[512,128], index: 12, kind: input, shape index: {}]
  %s13 = inlined_call_operand.vmem [shape: f32[1,128], index: 13, kind: input, shape index: {}]
  %s14 = inlined_call_operand.vmem [shape: f32[1,128], index: 14, kind: input, shape index: {}]
  %s15 = inlined_call_operand.vmem [shape: f32[1,128], index: 15, kind: input, shape index: {}]
  %s16 = inlined_call_operand.hbm [shape: f32[2,1,128], index: 16, kind: output, shape index: {}]
  %s17 = sld [smem:[#allocation0]]
  $region98: #{tpu_custom_call.1} parent=0
    _
  %s19 = ssub.s32 1, %s17
  %s20 = scalar_select 0, %s19, %s17
  %22 = dma.hbm_to_smem %s0, 16, [#allocation3], [#allocation2]
  %23 = dma.done [#allocation2], 16
  %24 = sfence
  $region1: #{tpu_custom_call.1} parent=0
    #allocation4 [shape = 'u8[8192]{0}', space=vmem, size = 0x2000, scoped, tag = 'input window, operand 1, single buffered']
    #allocation5 [shape = 's32[1]{0}', space=sflag, size = 0x4, scoped, tag = 'scoped memory for tpu_custom_call.1']
    #allocation6 [shape = 's32[1]{0}', space=sflag, size = 0x4, scoped, tag = 'scoped memory for tpu_custom_call.1']
    #allocation7 [shape = 'u8[512]{0}', space=vmem, size = 0x400, scoped, tag = 'input window, operand 2, single buffered']
    #allocation8 [shape = 's32[1]{0}', space=sflag, size = 0x4, scoped, tag = 'scoped memory for tpu_custom_call.1']
    #allocation9 [shape = 'u8[512]{0}', space=vmem, size = 0x400, scoped, tag = 'input window, operand 3, single buffered']
    #allocation10 [shape = 'u8[98304]{0}', space=vmem, size = 0x18000, scoped, tag = 'input window, operand 4, single buffered']
    #allocation11 [shape = 's32[1]{0}', space=sflag, size = 0x4, scoped, tag = 'scoped memory for tpu_custom_call.1']
    #allocation12 [shape = 'u8[32768]{0}', space=vmem, size = 0x8000, scoped, tag = 'input window, operand 6, single buffered']
    #allocation13 [shape = 'u8[131072]{0}', space=vmem, size = 0x20000, scoped, tag = 'input window, operand 10, single buffered']
    #allocation14 [shape = 's32[1]{0}', space=sflag, size = 0x4, scoped, tag = 'scoped memory for tpu_custom_call.1']
    #allocation15 [shape = 'u8[131072]{0}', space=vmem, size = 0x20000, scoped, tag = 'input window, operand 12, single buffered']
    #allocation16 [shape = 'u8[1024]{0}', space=vmem, size = 0x400, scoped, tag = 'output window, operand 0, single buffered']
    %25 = vsyncpa [#allocation5], 0
    %26 = vsyncpa [#allocation8], 0
    %27 = vsyncpa [#allocation11], 0
    %28 = vsyncpa [#allocation14], 0
    %29 = vsyncpa [#allocation6], 0
    // Predicated region
    $region2: #{tpu_custom_call.1} parent=1 // pred_check
      _
    $region3: #{tpu_custom_call.1} parent=1 // pred_check_branch
      %31 = sbr.rel (0) target = $region5
    $region4: #{tpu_custom_call.1} parent=1 // pred_region
      %s33 = ssub.s32 256, 256
      %34 = vsyncadd [#allocation5], %s33
      %s35 = sshll.u32 [#allocation4], 4
      %s36 = int_to_ptr.vmem [resolvable:$true] %s35
      %41 = dma.hbm_to_vmem [thread:$0]  %s1, 256, %s36, [#allocation5], 128, 128, 8
    $region5: #{tpu_custom_call.1} parent=1 // pred_fallthru
      _
    // Predicated region
    $region6: #{tpu_custom_call.1} parent=1 // pred_check
      _
    $region7: #{tpu_custom_call.1} parent=1 // pred_check_branch
      %43 = sbr.rel (0) target = $region9
    $region8: #{tpu_custom_call.1} parent=1 // pred_region
      %s45 = ssub.s32 16, 16
      %46 = vsyncadd [#allocation8], %s45
      %s48 = sshll.u32 [#allocation7], 4
      %s49 = int_to_ptr.vmem [resolvable:$true] %s48
      %51 = dma.hbm_to_vmem [thread:$0]  %s2, 16, %s49, [#allocation8]
    $region9: #{tpu_custom_call.1} parent=1 // pred_fallthru
      _
    // Predicated region
    $region10: #{tpu_custom_call.1} parent=1 // pred_check
      _
    $region11: #{tpu_custom_call.1} parent=1 // pred_check_branch
      %53 = sbr.rel (0) target = $region13
    $region12: #{tpu_custom_call.1} parent=1 // pred_region
      %s55 = ssub.s32 16, 16
      %56 = vsyncadd [#allocation8], %s55
      %s58 = sshll.u32 [#allocation9], 4
      %s59 = int_to_ptr.vmem [resolvable:$true] %s58
      %61 = dma.hbm_to_vmem [thread:$0]  %s3, 16, %s59, [#allocation8]
    $region13: #{tpu_custom_call.1} parent=1 // pred_fallthru
      _
    // Predicated region
    $region14: #{tpu_custom_call.1} parent=1 // pred_check
      _
    $region15: #{tpu_custom_call.1} parent=1 // pred_check_branch
      %63 = sbr.rel (0) target = $region17
    $region16: #{tpu_custom_call.1} parent=1 // pred_region
      %s65 = ssub.s32 3072, 3072
      %66 = vsyncadd [#allocation11], %s65
      %s67 = sshll.u32 [#allocation10], 4
      %s68 = int_to_ptr.vmem [resolvable:$true] %s67
      %73 = dma.hbm_to_vmem [thread:$0]  %s4, 3072, %s68, [#allocation11], 192, 192, 12
    $region17: #{tpu_custom_call.1} parent=1 // pred_fallthru
      _
    // Predicated region
    $region18: #{tpu_custom_call.1} parent=1 // pred_check
      _
    $region19: #{tpu_custom_call.1} parent=1 // pred_check_branch
      %75 = sbr.rel (0) target = $region21
    $region20: #{tpu_custom_call.1} parent=1 // pred_region
      _
    $region21: #{tpu_custom_call.1} parent=1 // pred_fallthru
      _
    // Predicated region
    $region22: #{tpu_custom_call.1} parent=1 // pred_check
      _
    $region23: #{tpu_custom_call.1} parent=1 // pred_check_branch
      %77 = sbr.rel (0) target = $region25
    $region24: #{tpu_custom_call.1} parent=1 // pred_region
      %s79 = ssub.s32 1024, 1024
      %80 = vsyncadd [#allocation11], %s79
      %s81 = sshll.u32 [#allocation12], 4
      %s82 = int_to_ptr.vmem [resolvable:$true] %s81
      %87 = dma.hbm_to_vmem [thread:$0]  %s6, 1024, %s82, [#allocation11], 64, 64, 4
    $region25: #{tpu_custom_call.1} parent=1 // pred_fallthru
      _
    // Predicated region
    $region26: #{tpu_custom_call.1} parent=1 // pred_check
      _
    $region27: #{tpu_custom_call.1} parent=1 // pred_check_branch
      %89 = sbr.rel (0) target = $region29
    $region28: #{tpu_custom_call.1} parent=1 // pred_region
      _
    $region29: #{tpu_custom_call.1} parent=1 // pred_fallthru
      _
    // Predicated region
    $region30: #{tpu_custom_call.1} parent=1 // pred_check
      _
    $region31: #{tpu_custom_call.1} parent=1 // pred_check_branch
      %91 = sbr.rel (0) target = $region33
    $region32: #{tpu_custom_call.1} parent=1 // pred_region
      _
    $region33: #{tpu_custom_call.1} parent=1 // pred_fallthru
      _
    // Predicated region
    $region34: #{tpu_custom_call.1} parent=1 // pred_check
      _
    $region35: #{tpu_custom_call.1} parent=1 // pred_check_branch
      %93 = sbr.rel (0) target = $region37
    $region36: #{tpu_custom_call.1} parent=1 // pred_region
      _
    $region37: #{tpu_custom_call.1} parent=1 // pred_fallthru
      _
    // Predicated region
    $region38: #{tpu_custom_call.1} parent=1 // pred_check
      _
    $region39: #{tpu_custom_call.1} parent=1 // pred_check_branch
      %95 = sbr.rel (0) target = $region41
    $region40: #{tpu_custom_call.1} parent=1 // pred_region
      %s97 = ssub.s32 4096, 4096
      %98 = vsyncadd [#allocation14], %s97
      %s99 = sshll.u32 [#allocation13], 4
      %s100 = int_to_ptr.vmem [resolvable:$true] %s99
      %105 = dma.hbm_to_vmem [thread:$0]  %s10, 4096, %s100, [#allocation14], 256, 256, 16
    $region41: #{tpu_custom_call.1} parent=1 // pred_fallthru
      _
    // Predicated region
    $region42: #{tpu_custom_call.1} parent=1 // pred_check
      _
    $region43: #{tpu_custom_call.1} parent=1 // pred_check_branch
      %107 = sbr.rel (0) target = $region45
    $region44: #{tpu_custom_call.1} parent=1 // pred_region
      _
    $region45: #{tpu_custom_call.1} parent=1 // pred_fallthru
      _
    // Predicated region
    $region46: #{tpu_custom_call.1} parent=1 // pred_check
      _
    $region47: #{tpu_custom_call.1} parent=1 // pred_check_branch
      %109 = sbr.rel (0) target = $region49
    $region48: #{tpu_custom_call.1} parent=1 // pred_region
      %s111 = ssub.s32 4096, 4096
      %112 = vsyncadd [#allocation14], %s111
      %s113 = sshll.u32 [#allocation15], 4
      %s114 = int_to_ptr.vmem [resolvable:$true] %s113
      %119 = dma.hbm_to_vmem [thread:$0]  %s12, 4096, %s114, [#allocation14], 64, 64, 4
    $region49: #{tpu_custom_call.1} parent=1 // pred_fallthru
      _
    // Predicated region
    $region50: #{tpu_custom_call.1} parent=1 // pred_check
      _
    $region51: #{tpu_custom_call.1} parent=1 // pred_check_branch
      %121 = sbr.rel (0) target = $region53
    $region52: #{tpu_custom_call.1} parent=1 // pred_region
      _
    $region53: #{tpu_custom_call.1} parent=1 // pred_fallthru
      _
    // Predicated region
    $region54: #{tpu_custom_call.1} parent=1 // pred_check
      _
    $region55: #{tpu_custom_call.1} parent=1 // pred_check_branch
      %123 = sbr.rel (0) target = $region57
    $region56: #{tpu_custom_call.1} parent=1 // pred_region
      _
    $region57: #{tpu_custom_call.1} parent=1 // pred_fallthru
      _
    // Predicated region
    $region58: #{tpu_custom_call.1} parent=1 // pred_check
      _
    $region59: #{tpu_custom_call.1} parent=1 // pred_check_branch
      %125 = sbr.rel (0) target = $region61
    $region60: #{tpu_custom_call.1} parent=1 // pred_region
      _
    $region61: #{tpu_custom_call.1} parent=1 // pred_fallthru
      _
    // Predicated region
    $region62: #{tpu_custom_call.1} parent=1 // pred_check
      _
    $region63: #{tpu_custom_call.1} parent=1 // pred_check_branch
      %127 = sbr.rel (0) target = $region65
    $region64: #{tpu_custom_call.1} parent=1 // pred_region
      %128 = dma.done [#allocation5], 256
    $region65: #{tpu_custom_call.1} parent=1 // pred_fallthru
      _
    // Predicated region
    $region66: #{tpu_custom_call.1} parent=1 // pred_check
      _
    $region67: #{tpu_custom_call.1} parent=1 // pred_check_branch
      %130 = sbr.rel (0) target = $region69
    $region68: #{tpu_custom_call.1} parent=1 // pred_region
      %131 = dma.done [#allocation8], 16
    $region69: #{tpu_custom_call.1} parent=1 // pred_fallthru
      _
    // Predicated region
    $region70: #{tpu_custom_call.1} parent=1 // pred_check
      _
    $region71: #{tpu_custom_call.1} parent=1 // pred_check_branch
      %133 = sbr.rel (0) target = $region73
    $region72: #{tpu_custom_call.1} parent=1 // pred_region
      %134 = dma.done [#allocation8], 16
    $region73: #{tpu_custom_call.1} parent=1 // pred_fallthru
      _
    // Predicated region
    $region74: #{tpu_custom_call.1} parent=1 // pred_check
      _
    $region75: #{tpu_custom_call.1} parent=1 // pred_check_branch
      %136 = sbr.rel (0) target = $region77
    $region76: #{tpu_custom_call.1} parent=1 // pred_region
      %137 = dma.done [#allocation11], 3072
    $region77: #{tpu_custom_call.1} parent=1 // pred_fallthru
      _
    // Predicated region
    $region78: #{tpu_custom_call.1} parent=1 // pred_check
      _
    $region79: #{tpu_custom_call.1} parent=1 // pred_check_branch
      %139 = sbr.rel (0) target = $region81
    $region80: #{tpu_custom_call.1} parent=1 // pred_region
      %140 = dma.done [#allocation11], 1024
    $region81: #{tpu_custom_call.1} parent=1 // pred_fallthru
      _
    // Predicated region
    $region82: #{tpu_custom_call.1} parent=1 // pred_check
      _
    $region83: #{tpu_custom_call.1} parent=1 // pred_check_branch
      %142 = sbr.rel (0) target = $region85
    $region84: #{tpu_custom_call.1} parent=1 // pred_region
      %143 = dma.done [#allocation14], 4096
    $region85: #{tpu_custom_call.1} parent=1 // pred_fallthru
      _
    // Predicated region
    $region86: #{tpu_custom_call.1} parent=1 // pred_check
      _
    $region87: #{tpu_custom_call.1} parent=1 // pred_check_branch
      %145 = sbr.rel (0) target = $region89
    $region88: #{tpu_custom_call.1} parent=1 // pred_region
      %146 = dma.done [#allocation14], 4096
    $region89: #{tpu_custom_call.1} parent=1 // pred_fallthru
      _
    %v148 = vlaneseq
    %v149 = vand.u32 %v148, 127
    %v150 = vld [vmem:[#allocation4] sm:$0xff]
    %v151 = vld [vmem:[#allocation4 + $0x8] sm:$0xff]
    %v152 = vld [vmem:[#allocation7] sm:$0x1]
    %v153 = vld [vmem:[#allocation9] sm:$0x1]
    %154 = vadd.xlane.f32.xlu0 %v150
    %v155 = vpop.xlane.xlu0 %154
    %156 = vadd.xlane.f32.xlu0 %v151
    %v157 = vpop.xlane.xlu0 %156
    %v158 = vrcp.pop 128.0
    %v159 = vmul.f32 %v155, %v158
    %v160 = vmul.f32 %v157, %v158
    %v161 = vsub.f32 %v150, %v159
    %v162 = vsub.f32 %v151, %v160
    %v163 = vmul.f32 %v161, %v161
    %v164 = vmul.f32 %v162, %v162
    %165 = vadd.xlane.f32.xlu0 %v163
    %v166 = vpop.xlane.xlu0 %165
    %167 = vadd.xlane.f32.xlu0 %v164
    %v168 = vpop.xlane.xlu0 %167
    %v169 = vmul.f32 %v166, %v158
    %v170 = vmul.f32 %v168, %v158
    %v171 = vadd.f32 %v169, 1e-12
    %v172 = vadd.f32 %v170, 1e-12
    %v173 = vrsqrt.pop %v171
    %v174 = vrsqrt.pop %v172
    %v175 = vmul.f32 %v161, %v173
    %v176 = vmul.f32 %v162, %v174
    %v178 = vlaneseq
    %v179 = vshrl.u32 %v178, 7
    %v180 = vsub.s32 0, %v179
    %v181 = vrot.slane %v152, %v180
    %v183 = vmul.f32 %v175, %v181
    %v184 = vmul.f32 %v176, %v181
    %v186 = vlaneseq
    %v187 = vshrl.u32 %v186, 7
    %v188 = vsub.s32 0, %v187
    %v189 = vrot.slane %v153, %v188
    %v191 = vadd.f32 %v183, %v189
    %v192 = vadd.f32 %v184, %v189
    %v193 = vpack.c.bf16 %v192, %v191
    %v194 = vld [vmem:[#allocation10] sm:$0xff]
    %v195 = vld [vmem:[#allocation10 + $0x8] sm:$0xf]
    %v196 = vld [vmem:[#allocation10 + $0xc] sm:$0xff]
    %v197 = vld [vmem:[#allocation10 + $0x14] sm:$0xf]
    %v198 = vld [vmem:[#allocation10 + $0x18] sm:$0xff]
    %v199 = vld [vmem:[#allocation10 + $0x20] sm:$0xf]
    %v200 = vld [vmem:[#allocation10 + $0x24] sm:$0xff]
    %v201 = vld [vmem:[#allocation10 + $0x2c] sm:$0xf]
    %v202 = vld [vmem:[#allocation10 + $0x30] sm:$0xff]
    %v203 = vld [vmem:[#allocation10 + $0x38] sm:$0xf]
    %v204 = vld [vmem:[#allocation10 + $0x3c] sm:$0xff]
    %v205 = vld [vmem:[#allocation10 + $0x44] sm:$0xf]
    %v206 = vld [vmem:[#allocation10 + $0x48] sm:$0xff]
    %v207 = vld [vmem:[#allocation10 + $0x50] sm:$0xf]
    %v208 = vld [vmem:[#allocation10 + $0x54] sm:$0xff]
    %v209 = vld [vmem:[#allocation10 + $0x5c] sm:$0xf]
    %v210 = vld [vmem:[#allocation10 + $0x60] sm:$0xff]
    %v211 = vld [vmem:[#allocation10 + $0x68] sm:$0xf]
    %v212 = vld [vmem:[#allocation10 + $0x6c] sm:$0xff]
    %v213 = vld [vmem:[#allocation10 + $0x74] sm:$0xf]
    %v214 = vld [vmem:[#allocation10 + $0x78] sm:$0xff]
    %v215 = vld [vmem:[#allocation10 + $0x80] sm:$0xf]
    %v216 = vld [vmem:[#allocation10 + $0x84] sm:$0xff]
    %v217 = vld [vmem:[#allocation10 + $0x8c] sm:$0xf]
    %v218 = vld [vmem:[#allocation10 + $0x90] sm:$0xff]
    %v219 = vld [vmem:[#allocation10 + $0x98] sm:$0xf]
    %v220 = vld [vmem:[#allocation10 + $0x9c] sm:$0xff]
    %v221 = vld [vmem:[#allocation10 + $0xa4] sm:$0xf]
    %v222 = vld [vmem:[#allocation10 + $0xa8] sm:$0xff]
    %v223 = vld [vmem:[#allocation10 + $0xb0] sm:$0xf]
    %v224 = vld [vmem:[#allocation10 + $0xb4] sm:$0xff]
    %v225 = vld [vmem:[#allocation10 + $0xbc] sm:$0xf]
    %v226 = vld [vmem:[%s5] sm:$0x7]
    %v228 = vlaneseq
    %v229 = vshrl.u32 %v228, 7
    %v230 = vsub.s32 0, %v229
    %v231 = vrot.slane %v226, %v230
    %v232 = vlaneseq
    %v233 = vshrl.u32 %v232, 7
    %v234 = vsub.s32 1, %v233
    %v235 = vrot.slane %v226, %v234
    %v236 = vlaneseq
    %v237 = vshrl.u32 %v236, 7
    %v238 = vsub.s32 2, %v237
    %v239 = vrot.slane %v226, %v238
    %v275 = vunpack.c.l.b16 %v194
    %v276 = vunpack.c.h.b16 %v194
    %v277 = vunpack.c.l.b16 %v195
    %v278 = vunpack.c.l.b16 %v196
    %v279 = vunpack.c.h.b16 %v196
    %v280 = vunpack.c.l.b16 %v197
    %v281 = vunpack.c.l.b16 %v198
    %v282 = vunpack.c.h.b16 %v198
    %v283 = vunpack.c.l.b16 %v199
    %v284 = vunpack.c.l.b16 %v200
    %v285 = vunpack.c.h.b16 %v200
    %v286 = vunpack.c.l.b16 %v201
    %v287 = vunpack.c.l.b16 %v202
    %v288 = vunpack.c.h.b16 %v202
    %v289 = vunpack.c.l.b16 %v203
    %v290 = vunpack.c.l.b16 %v204
    %v291 = vunpack.c.h.b16 %v204
    %v292 = vunpack.c.l.b16 %v205
    %v293 = vunpack.c.l.b16 %v206
    %v294 = vunpack.c.h.b16 %v206
    %v295 = vunpack.c.l.b16 %v207
    %v296 = vunpack.c.l.b16 %v208
    %v297 = vunpack.c.h.b16 %v208
    %v298 = vunpack.c.l.b16 %v209
    %v299 = vunpack.c.l.b16 %v210
    %v300 = vunpack.c.h.b16 %v210
    %v301 = vunpack.c.l.b16 %v211
    %v302 = vunpack.c.l.b16 %v212
    %v303 = vunpack.c.h.b16 %v212
    %v304 = vunpack.c.l.b16 %v213
    %v305 = vunpack.c.l.b16 %v214
    %v306 = vunpack.c.h.b16 %v214
    %v307 = vunpack.c.l.b16 %v215
    %v308 = vunpack.c.l.b16 %v216
    %v309 = vunpack.c.h.b16 %v216
    %v310 = vunpack.c.l.b16 %v217
    %v311 = vunpack.c.l.b16 %v218
    %v312 = vunpack.c.h.b16 %v218
    %v313 = vunpack.c.l.b16 %v219
    %v314 = vunpack.c.l.b16 %v220
    %v315 = vunpack.c.h.b16 %v220
    %v316 = vunpack.c.l.b16 %v221
    %v317 = vunpack.c.l.b16 %v222
    %v318 = vunpack.c.h.b16 %v222
    %v319 = vunpack.c.l.b16 %v223
    %v320 = vunpack.c.l.b16 %v224
    %v321 = vunpack.c.h.b16 %v224
    %v322 = vunpack.c.l.b16 %v225
    %v323 = vpack.c.b16 %v278, %v275
    %v324 = vpack.c.b16 %v279, %v276
    %v325 = vpack.c.b16 %v280, %v277
    %v326 = vpack.c.b16 %v284, %v281
    %v327 = vpack.c.b16 %v285, %v282
    %v328 = vpack.c.b16 %v286, %v283
    %v329 = vpack.c.b16 %v290, %v287
    %v330 = vpack.c.b16 %v291, %v288
    %v331 = vpack.c.b16 %v292, %v289
    %v332 = vpack.c.b16 %v296, %v293
    %v333 = vpack.c.b16 %v297, %v294
    %v334 = vpack.c.b16 %v298, %v295
    %v335 = vpack.c.b16 %v302, %v299
    %v336 = vpack.c.b16 %v303, %v300
    %v337 = vpack.c.b16 %v304, %v301
    %v338 = vpack.c.b16 %v308, %v305
    %v339 = vpack.c.b16 %v309, %v306
    %v340 = vpack.c.b16 %v310, %v307
    %v341 = vpack.c.b16 %v314, %v311
    %v342 = vpack.c.b16 %v315, %v312
    %v343 = vpack.c.b16 %v316, %v313
    %v344 = vpack.c.b16 %v320, %v317
    %v345 = vpack.c.b16 %v321, %v318
    %v346 = vpack.c.b16 %v322, %v319
    %371 = vmatprep.subr.bf16.mxu0 %v345
    %372 = vmatpush1.bf16.msra.mxu0 %v344
    %373 = vmatprep.subr.bf16.mxu0 %v342
    %374 = vmatpush1.bf16.msra.mxu0 %v341
    %375 = vmatprep.subr.bf16.mxu0 %v339
    %376 = vmatpush1.bf16.msra.mxu0 %v338
    %377 = vmatprep.subr.bf16.mxu0 %v336
    %378 = vmatpush1.bf16.msra.mxu0 %v335
    %379 = vmatprep.subr.bf16.mxu0 %v333
    %380 = vmatpush1.bf16.msra.mxu0 %v332
    %381 = vmatprep.subr.bf16.mxu0 %v330
    %382 = vmatpush1.bf16.msra.mxu0 %v329
    %383 = vmatprep.subr.bf16.mxu0 %v327
    %384 = vmatpush1.bf16.msra.mxu0 %v326
    %385 = vmatprep.subr.bf16.mxu0 %v324
    %386 = vmatpush1.bf16.msra.mxu0 %v323
    %387 = vmatprep.subr.bf16.mxu0 0
    %388 = vmatpush2.bf16.msra.mxu0 0
    %389 = vmatprep.subr.bf16.mxu0 0
    %390 = vmatpush2.bf16.msra.mxu0 0
    %391 = vmatprep.subr.bf16.mxu0 0
    %392 = vmatpush2.bf16.msra.mxu0 0
    %393 = vmatprep.subr.bf16.mxu0 0
    %394 = vmatpush2.bf16.msra.mxu0 0
    %395 = vmatprep.subr.bf16.mxu0 0
    %396 = vmatpush2.bf16.msra.mxu0 0
    %397 = vmatprep.subr.bf16.mxu0 0
    %398 = vmatpush2.bf16.msra.mxu0 0
    %399 = vmatprep.subr.bf16.mxu0 0
    %400 = vmatpush2.bf16.msra.mxu0 0
    %401 = vmatprep.subr.bf16.mxu0 0
    %402 = vmatpush2.bf16.msra.mxu0 0
    %403 = vmatprep.mubr.bf16.mxu0 0
    %404 = vmatmul.mubr.bf16.gmra.mxu0 %v193
    %v405 = vpop.f32.mrf.mxu0
    %v406 = vadd.f32 %v231, %v405
    %v407 = vpop.f32.mrf.mxu0
    %v408 = vadd.f32 %v235, %v407
    %v409 = vpop.f32.mrf.mxu0
    %v410 = vadd.f32 %v231, %v409
    %v411 = vpop.f32.mrf.mxu0
    %v412 = vadd.f32 %v235, %v411
    %413 = vdwg.mxu0
    %414 = vmatprep.subr.bf16.mxu0 0
    %415 = vmatpush1.bf16.msra.mxu0 %v346
    %416 = vmatprep.subr.bf16.mxu0 0
    %417 = vmatpush1.bf16.msra.mxu0 %v343
    %418 = vmatprep.subr.bf16.mxu0 0
    %419 = vmatpush1.bf16.msra.mxu0 %v340
    %420 = vmatprep.subr.bf16.mxu0 0
    %421 = vmatpush1.bf16.msra.mxu0 %v337
    %422 = vmatprep.subr.bf16.mxu0 0
    %423 = vmatpush1.bf16.msra.mxu0 %v334
    %424 = vmatprep.subr.bf16.mxu0 0
    %425 = vmatpush1.bf16.msra.mxu0 %v331
    %426 = vmatprep.subr.bf16.mxu0 0
    %427 = vmatpush1.bf16.msra.mxu0 %v328
    %428 = vmatprep.subr.bf16.mxu0 0
    %429 = vmatpush1.bf16.msra.mxu0 %v325
    %430 = vmatprep.subr.bf16.mxu0 0
    %431 = vmatpush2.bf16.msra.mxu0 0
    %432 = vmatprep.subr.bf16.mxu0 0
    %433 = vmatpush2.bf16.msra.mxu0 0
    %434 = vmatprep.subr.bf16.mxu0 0
    %435 = vmatpush2.bf16.msra.mxu0 0
    %436 = vmatprep.subr.bf16.mxu0 0
    %437 = vmatpush2.bf16.msra.mxu0 0
    %438 = vmatprep.subr.bf16.mxu0 0
    %439 = vmatpush2.bf16.msra.mxu0 0
    %440 = vmatprep.subr.bf16.mxu0 0
    %441 = vmatpush2.bf16.msra.mxu0 0
    %442 = vmatprep.subr.bf16.mxu0 0
    %443 = vmatpush2.bf16.msra.mxu0 0
    %444 = vmatprep.subr.bf16.mxu0 0
    %445 = vmatpush2.bf16.msra.mxu0 0
    %446 = vmatprep.mubr.bf16.mxu0 0
    %447 = vmatmul.mubr.bf16.gmra.mxu0 %v193
    %v448 = vpop.f32.mrf.mxu0
    %v449 = vadd.f32 %v239, %v448
    %v450 = vpop.f32.mrf.mxu0
    %v451 = vpop.f32.mrf.mxu0
    %v452 = vadd.f32 %v239, %v451
    %v453 = vpop.f32.mrf.mxu0
    %454 = vdwg.mxu0
    %v455 = vld [vmem:[#allocation12] sm:$0xf]
    %v456 = vld [vmem:[#allocation12 + $0x4] sm:$0xf]
    %v457 = vld [vmem:[#allocation12 + $0x8] sm:$0xf]
    %v458 = vld [vmem:[#allocation12 + $0xc] sm:$0xf]
    %v459 = vld [vmem:[#allocation12 + $0x10] sm:$0xf]
    %v460 = vld [vmem:[#allocation12 + $0x14] sm:$0xf]
    %v461 = vld [vmem:[#allocation12 + $0x18] sm:$0xf]
    %v462 = vld [vmem:[#allocation12 + $0x1c] sm:$0xf]
    %v463 = vld [vmem:[#allocation12 + $0x20] sm:$0xf]
    %v464 = vld [vmem:[#allocation12 + $0x24] sm:$0xf]
    %v465 = vld [vmem:[#allocation12 + $0x28] sm:$0xf]
    %v466 = vld [vmem:[#allocation12 + $0x2c] sm:$0xf]
    %v467 = vld [vmem:[#allocation12 + $0x30] sm:$0xf]
    %v468 = vld [vmem:[#allocation12 + $0x34] sm:$0xf]
    %v469 = vld [vmem:[#allocation12 + $0x38] sm:$0xf]
    %v470 = vld [vmem:[#allocation12 + $0x3c] sm:$0xf]
    %s471 = smul.u32 0, 2
    %s472 = sld [smem:[#allocation3 + %s471]]
    %v473 = vstv %s472
    %vm474 = vcmp.lt.s32.totalorder %v149, %v473
    %v475 = vsel %vm474, 0.0, -1e+09
    %vm476 = vcmask 261120
    %v478 = vsel %vm476, %v406, 0
    %v481 = vsel %vm476, %v408, 0
    %483 = vmatprep.subr.mxu0 0.0
    %484 = vmatpush1.xpose.msra.mxu0 0.0
    %485 = vmatprep.subr.mxu0 0.0
    %486 = vmatpush1.xpose.msra.mxu0 0.0
    %487 = vmatprep.subr.mxu0 0.0
    %488 = vmatpush1.xpose.msra.mxu0 0.0
    %489 = vmatprep.subr.mxu0 0.0
    %490 = vmatpush1.xpose.msra.mxu0 0.0
    %491 = vmatprep.subr.mxu0 0.0
    %492 = vmatpush1.xpose.msra.mxu0 0.0
    %493 = vmatprep.subr.mxu0 0.0
    %494 = vmatpush1.xpose.msra.mxu0 0.0
    %495 = vmatprep.subr.mxu0 0.0
    %496 = vmatpush1.xpose.msra.mxu0 0.0
    %497 = vmatprep.subr.mxu0 0.0
    %498 = vmatpush1.xpose.msra.mxu0 0.0
    %499 = vmatprep.subr.mxu0 0.0
    %500 = vmatpush1.xpose.msra.mxu0 0.0
    %501 = vmatprep.subr.mxu0 0.0
    %502 = vmatpush1.xpose.msra.mxu0 0.0
    %503 = vmatprep.subr.mxu0 0.0
    %504 = vmatpush1.xpose.msra.mxu0 0.0
    %505 = vmatprep.subr.mxu0 0.0
    %506 = vmatpush1.xpose.msra.mxu0 0.0
    %507 = vmatprep.subr.mxu0 0.0
    %508 = vmatpush1.xpose.msra.mxu0 0.0
    %509 = vmatprep.subr.mxu0 0.0
    %510 = vmatpush1.xpose.msra.mxu0 0.0
    %511 = vmatprep.subr.mxu0 0.0
    %512 = vmatpush1.xpose.msra.mxu0 0.0
    %513 = vmatprep.subr.mxu0 0.0
    %514 = vmatpush1.xpose.msra.mxu0 %v481
    %515 = vmatprep.subr.mxu0 0.0
    %516 = vmatpush2.xpose.msra.mxu0 0.0
    %517 = vmatprep.subr.mxu0 0.0
    %518 = vmatpush2.xpose.msra.mxu0 0.0
    %519 = vmatprep.subr.mxu0 0.0
    %520 = vmatpush2.xpose.msra.mxu0 0.0
    %521 = vmatprep.subr.mxu0 0.0
    %522 = vmatpush2.xpose.msra.mxu0 0.0
    %523 = vmatprep.subr.mxu0 0.0
    %524 = vmatpush2.xpose.msra.mxu0 0.0
    %525 = vmatprep.subr.mxu0 0.0
    %526 = vmatpush2.xpose.msra.mxu0 0.0
    %527 = vmatprep.subr.mxu0 0.0
    %528 = vmatpush2.xpose.msra.mxu0 0.0
    %529 = vmatprep.subr.mxu0 0.0
    %530 = vmatpush2.xpose.msra.mxu0 0.0
    %531 = vmatprep.subr.mxu0 0.0
    %532 = vmatpush2.xpose.msra.mxu0 0.0
    %533 = vmatprep.subr.mxu0 0.0
    %534 = vmatpush2.xpose.msra.mxu0 0.0
    %535 = vmatprep.subr.mxu0 0.0
    %536 = vmatpush2.xpose.msra.mxu0 0.0
    %537 = vmatprep.subr.mxu0 0.0
    %538 = vmatpush2.xpose.msra.mxu0 0.0
    %539 = vmatprep.subr.mxu0 0.0
    %540 = vmatpush2.xpose.msra.mxu0 0.0
    %541 = vmatprep.subr.mxu0 0.0
    %542 = vmatpush2.xpose.msra.mxu0 0.0
    %543 = vmatprep.subr.mxu0 0.0
    %544 = vmatpush2.xpose.msra.mxu0 0.0
    %545 = vmatprep.subr.mxu0 0.0
    %546 = vmatpush2.xpose.msra.mxu0 0.0
    %547 = vmatprep.mubr.f32.mxu0 0.0
    %548 = vmatmul.mubr.f32.gmra.mxu0 %v478
    %v549 = vpop.f32.mrf.mxu0
    %v550 = vadd.f32 0.0, %v549
    %v551 = vpop.f32.mrf.mxu0
    %552 = vdwg.mxu0
    %v553 = vmul.f32 %v550, 0.17677669
    %v554 = vadd.f32 %v553, %v475
    %vm555 = vcmask 64512
    %v556 = vsel %vm555, %v554, -inf
    %557 = vmax.xlane.f32.xlu0 %v556
    %v558 = vpop.xlane.xlu0 %557
    %v559 = vsub.f32 %v554, %v558
    %v560 = vmul.f32 %v559, 1.442695
    %v561 = vpow.pop %v560
    %v562 = vsel %vm555, %v561, 0.0
    %563 = vadd.xlane.f32.xlu0 %v562
    %v564 = vpop.xlane.xlu0 %563
    %v565 = vrcp.pop %v564
    %v566 = vmul.f32 %v561, %v565
    %v568 = vsel %vm555, %v566, 0
    %570 = vmatprep.subr.mxu0 0.0
    %571 = vmatpush1.msra.mxu0 0.0
    %572 = vmatprep.subr.mxu0 0.0
    %573 = vmatpush1.msra.mxu0 0.0
    %574 = vmatprep.subr.mxu0 0.0
    %575 = vmatpush1.msra.mxu0 0.0
    %576 = vmatprep.subr.mxu0 0.0
    %577 = vmatpush1.msra.mxu0 0.0
    %578 = vmatprep.subr.mxu0 0.0
    %579 = vmatpush1.msra.mxu0 0.0
    %580 = vmatprep.subr.mxu0 0.0
    %581 = vmatpush1.msra.mxu0 0.0
    %582 = vmatprep.subr.mxu0 0.0
    %583 = vmatpush1.msra.mxu0 0.0
    %584 = vmatprep.subr.mxu0 0.0
    %585 = vmatpush1.msra.mxu0 0.0
    %586 = vmatprep.subr.mxu0 0.0
    %587 = vmatpush1.msra.mxu0 0.0
    %588 = vmatprep.subr.mxu0 0.0
    %589 = vmatpush1.msra.mxu0 0.0
    %590 = vmatprep.subr.mxu0 0.0
    %591 = vmatpush1.msra.mxu0 0.0
    %592 = vmatprep.subr.mxu0 0.0
    %593 = vmatpush1.msra.mxu0 0.0
    %594 = vmatprep.subr.mxu0 0.0
    %595 = vmatpush1.msra.mxu0 0.0
    %596 = vmatprep.subr.mxu0 0.0
    %597 = vmatpush1.msra.mxu0 0.0
    %598 = vmatprep.subr.mxu0 0.0
    %599 = vmatpush1.msra.mxu0 0.0
    %600 = vmatprep.subr.mxu0 0.0
    %601 = vmatpush1.msra.mxu0 %v449
    %602 = vmatprep.subr.mxu0 0.0
    %603 = vmatpush2.msra.mxu0 0.0
    %604 = vmatprep.subr.mxu0 0.0
    %605 = vmatpush2.msra.mxu0 0.0
    %606 = vmatprep.subr.mxu0 0.0
    %607 = vmatpush2.msra.mxu0 0.0
    %608 = vmatprep.subr.mxu0 0.0
    %609 = vmatpush2.msra.mxu0 0.0
    %610 = vmatprep.subr.mxu0 0.0
    %611 = vmatpush2.msra.mxu0 0.0
    %612 = vmatprep.subr.mxu0 0.0
    %613 = vmatpush2.msra.mxu0 0.0
    %614 = vmatprep.subr.mxu0 0.0
    %615 = vmatpush2.msra.mxu0 0.0
    %616 = vmatprep.subr.mxu0 0.0
    %617 = vmatpush2.msra.mxu0 0.0
    %618 = vmatprep.subr.mxu0 0.0
    %619 = vmatpush2.msra.mxu0 0.0
    %620 = vmatprep.subr.mxu0 0.0
    %621 = vmatpush2.msra.mxu0 0.0
    %622 = vmatprep.subr.mxu0 0.0
    %623 = vmatpush2.msra.mxu0 0.0
    %624 = vmatprep.subr.mxu0 0.0
    %625 = vmatpush2.msra.mxu0 0.0
    %626 = vmatprep.subr.mxu0 0.0
    %627 = vmatpush2.msra.mxu0 0.0
    %628 = vmatprep.subr.mxu0 0.0
    %629 = vmatpush2.msra.mxu0 0.0
    %630 = vmatprep.subr.mxu0 0.0
    %631 = vmatpush2.msra.mxu0 0.0
    %632 = vmatprep.subr.mxu0 0.0
    %633 = vmatpush2.msra.mxu0 0.0
    %634 = vmatprep.mubr.f32.mxu0 0.0
    %635 = vmatmul.mubr.f32.gmra.mxu0 %v568
    %v636 = vpop.f32.mrf.mxu0
    %v637 = vadd.f32 0.0, %v636
    %v638 = vpop.f32.mrf.mxu0
    %639 = vdwg.mxu0
    %v640 = vpack.c.bf16 %v637, %v637
    %641 = vrot.lane.b32.xlu0 %v406, 96
    %v642 = vpop.permute.xlu0 %641
    %643 = vrot.lane.b32.xlu0 %v408, 96
    %v644 = vpop.permute.xlu0 %643
    %v645 = vsel %vm476, %v642, 0
    %v647 = vsel %vm476, %v644, 0
    %649 = vmatprep.subr.mxu0 0.0
    %650 = vmatpush1.xpose.msra.mxu0 0.0
    %651 = vmatprep.subr.mxu0 0.0
    %652 = vmatpush1.xpose.msra.mxu0 0.0
    %653 = vmatprep.subr.mxu0 0.0
    %654 = vmatpush1.xpose.msra.mxu0 0.0
    %655 = vmatprep.subr.mxu0 0.0
    %656 = vmatpush1.xpose.msra.mxu0 0.0
    %657 = vmatprep.subr.mxu0 0.0
    %658 = vmatpush1.xpose.msra.mxu0 0.0
    %659 = vmatprep.subr.mxu0 0.0
    %660 = vmatpush1.xpose.msra.mxu0 0.0
    %661 = vmatprep.subr.mxu0 0.0
    %662 = vmatpush1.xpose.msra.mxu0 0.0
    %663 = vmatprep.subr.mxu0 0.0
    %664 = vmatpush1.xpose.msra.mxu0 0.0
    %665 = vmatprep.subr.mxu0 0.0
    %666 = vmatpush1.xpose.msra.mxu0 0.0
    %667 = vmatprep.subr.mxu0 0.0
    %668 = vmatpush1.xpose.msra.mxu0 0.0
    %669 = vmatprep.subr.mxu0 0.0
    %670 = vmatpush1.xpose.msra.mxu0 0.0
    %671 = vmatprep.subr.mxu0 0.0
    %672 = vmatpush1.xpose.msra.mxu0 0.0
    %673 = vmatprep.subr.mxu0 0.0
    %674 = vmatpush1.xpose.msra.mxu0 0.0
    %675 = vmatprep.subr.mxu0 0.0
    %676 = vmatpush1.xpose.msra.mxu0 0.0
    %677 = vmatprep.subr.mxu0 0.0
    %678 = vmatpush1.xpose.msra.mxu0 0.0
    %679 = vmatprep.subr.mxu0 0.0
    %680 = vmatpush1.xpose.msra.mxu0 %v647
    %681 = vmatprep.subr.mxu0 0.0
    %682 = vmatpush2.xpose.msra.mxu0 0.0
    %683 = vmatprep.subr.mxu0 0.0
    %684 = vmatpush2.xpose.msra.mxu0 0.0
    %685 = vmatprep.subr.mxu0 0.0
    %686 = vmatpush2.xpose.msra.mxu0 0.0
    %687 = vmatprep.subr.mxu0 0.0
    %688 = vmatpush2.xpose.msra.mxu0 0.0
    %689 = vmatprep.subr.mxu0 0.0
    %690 = vmatpush2.xpose.msra.mxu0 0.0
    %691 = vmatprep.subr.mxu0 0.0
    %692 = vmatpush2.xpose.msra.mxu0 0.0
    %693 = vmatprep.subr.mxu0 0.0
    %694 = vmatpush2.xpose.msra.mxu0 0.0
    %695 = vmatprep.subr.mxu0 0.0
    %696 = vmatpush2.xpose.msra.mxu0 0.0
    %697 = vmatprep.subr.mxu0 0.0
    %698 = vmatpush2.xpose.msra.mxu0 0.0
    %699 = vmatprep.subr.mxu0 0.0
    %700 = vmatpush2.xpose.msra.mxu0 0.0
    %701 = vmatprep.subr.mxu0 0.0
    %702 = vmatpush2.xpose.msra.mxu0 0.0
    %703 = vmatprep.subr.mxu0 0.0
    %704 = vmatpush2.xpose.msra.mxu0 0.0
    %705 = vmatprep.subr.mxu0 0.0
    %706 = vmatpush2.xpose.msra.mxu0 0.0
    %707 = vmatprep.subr.mxu0 0.0
    %708 = vmatpush2.xpose.msra.mxu0 0.0
    %709 = vmatprep.subr.mxu0 0.0
    %710 = vmatpush2.xpose.msra.mxu0 0.0
    %711 = vmatprep.subr.mxu0 0.0
    %712 = vmatpush2.xpose.msra.mxu0 0.0
    %713 = vmatprep.mubr.f32.mxu0 0.0
    %714 = vmatmul.mubr.f32.gmra.mxu0 %v645
    %v715 = vpop.f32.mrf.mxu0
    %v716 = vadd.f32 0.0, %v715
    %v717 = vpop.f32.mrf.mxu0
    %718 = vdwg.mxu0
    %v719 = vmul.f32 %v716, 0.17677669
    %v720 = vadd.f32 %v719, %v475
    %v721 = vsel %vm555, %v720, -inf
    %722 = vmax.xlane.f32.xlu0 %v721
    %v723 = vpop.xlane.xlu0 %722
    %v724 = vsub.f32 %v720, %v723
    %v725 = vmul.f32 %v724, 1.442695
    %v726 = vpow.pop %v725
    %v727 = vsel %vm555, %v726, 0.0
    %728 = vadd.xlane.f32.xlu0 %v727
    %v729 = vpop.xlane.xlu0 %728
    %v730 = vrcp.pop %v729
    %v731 = vmul.f32 %v726, %v730
    %733 = vrot.lane.b32.xlu0 %v449, 96
    %v734 = vpop.permute.xlu0 %733
    %v737 = vsel %vm555, %v731, 0
    %739 = vmatprep.subr.mxu0 0.0
    %740 = vmatpush1.msra.mxu0 0.0
    %741 = vmatprep.subr.mxu0 0.0
    %742 = vmatpush1.msra.mxu0 0.0
    %743 = vmatprep.subr.mxu0 0.0
    %744 = vmatpush1.msra.mxu0 0.0
    %745 = vmatprep.subr.mxu0 0.0
    %746 = vmatpush1.msra.mxu0 0.0
    %747 = vmatprep.subr.mxu0 0.0
    %748 = vmatpush1.msra.mxu0 0.0
    %749 = vmatprep.subr.mxu0 0.0
    %750 = vmatpush1.msra.mxu0 0.0
    %751 = vmatprep.subr.mxu0 0.0
    %752 = vmatpush1.msra.mxu0 0.0
    %753 = vmatprep.subr.mxu0 0.0
    %754 = vmatpush1.msra.mxu0 0.0
    %755 = vmatprep.subr.mxu0 0.0
    %756 = vmatpush1.msra.mxu0 0.0
    %757 = vmatprep.subr.mxu0 0.0
    %758 = vmatpush1.msra.mxu0 0.0
    %759 = vmatprep.subr.mxu0 0.0
    %760 = vmatpush1.msra.mxu0 0.0
    %761 = vmatprep.subr.mxu0 0.0
    %762 = vmatpush1.msra.mxu0 0.0
    %763 = vmatprep.subr.mxu0 0.0
    %764 = vmatpush1.msra.mxu0 0.0
    %765 = vmatprep.subr.mxu0 0.0
    %766 = vmatpush1.msra.mxu0 0.0
    %767 = vmatprep.subr.mxu0 0.0
    %768 = vmatpush1.msra.mxu0 0.0
    %769 = vmatprep.subr.mxu0 0.0
    %770 = vmatpush1.msra.mxu0 %v734
    %771 = vmatprep.subr.mxu0 0.0
    %772 = vmatpush2.msra.mxu0 0.0
    %773 = vmatprep.subr.mxu0 0.0
    %774 = vmatpush2.msra.mxu0 0.0
    %775 = vmatprep.subr.mxu0 0.0
    %776 = vmatpush2.msra.mxu0 0.0
    %777 = vmatprep.subr.mxu0 0.0
    %778 = vmatpush2.msra.mxu0 0.0
    %779 = vmatprep.subr.mxu0 0.0
    %780 = vmatpush2.msra.mxu0 0.0
    %781 = vmatprep.subr.mxu0 0.0
    %782 = vmatpush2.msra.mxu0 0.0
    %783 = vmatprep.subr.mxu0 0.0
    %784 = vmatpush2.msra.mxu0 0.0
    %785 = vmatprep.subr.mxu0 0.0
    %786 = vmatpush2.msra.mxu0 0.0
    %787 = vmatprep.subr.mxu0 0.0
    %788 = vmatpush2.msra.mxu0 0.0
    %789 = vmatprep.subr.mxu0 0.0
    %790 = vmatpush2.msra.mxu0 0.0
    %791 = vmatprep.subr.mxu0 0.0
    %792 = vmatpush2.msra.mxu0 0.0
    %793 = vmatprep.subr.mxu0 0.0
    %794 = vmatpush2.msra.mxu0 0.0
    %795 = vmatprep.subr.mxu0 0.0
    %796 = vmatpush2.msra.mxu0 0.0
    %797 = vmatprep.subr.mxu0 0.0
    %798 = vmatpush2.msra.mxu0 0.0
    %799 = vmatprep.subr.mxu0 0.0
    %800 = vmatpush2.msra.mxu0 0.0
    %801 = vmatprep.subr.mxu0 0.0
    %802 = vmatpush2.msra.mxu0 0.0
    %803 = vmatprep.mubr.f32.mxu0 0.0
    %804 = vmatmul.mubr.f32.gmra.mxu0 %v737
    %v805 = vpop.f32.mrf.mxu0
    %v806 = vadd.f32 0.0, %v805
    %v807 = vpop.f32.mrf.mxu0
    %808 = vdwg.mxu0
    %v809 = vpack.c.bf16 %v806, %v806
    %v814 = vunpack.c.l.b16 %v459
    %v815 = vunpack.c.l.b16 %v460
    %v816 = vunpack.c.l.b16 %v461
    %v817 = vunpack.c.l.b16 %v462
    %v818 = vpack.c.b16 %v815, %v814
    %v819 = vpack.c.b16 %v817, %v816
    %v823 = vsel %vm476, %v809, 0
    %825 = vmatprep.subr.bf16.mxu0 0
    %826 = vmatpush1.bf16.msra.mxu0 0
    %827 = vmatprep.subr.bf16.mxu0 0
    %828 = vmatpush1.bf16.msra.mxu0 0
    %829 = vmatprep.subr.bf16.mxu0 0
    %830 = vmatpush1.bf16.msra.mxu0 0
    %831 = vmatprep.subr.bf16.mxu0 0
    %832 = vmatpush1.bf16.msra.mxu0 0
    %833 = vmatprep.subr.bf16.mxu0 0
    %834 = vmatpush1.bf16.msra.mxu0 0
    %835 = vmatprep.subr.bf16.mxu0 0
    %836 = vmatpush1.bf16.msra.mxu0 0
    %837 = vmatprep.subr.bf16.mxu0 0
    %838 = vmatpush1.bf16.msra.mxu0 %v819
    %839 = vmatprep.subr.bf16.mxu0 0
    %840 = vmatpush1.bf16.msra.mxu0 %v818
    %841 = vmatprep.subr.bf16.mxu0 0
    %842 = vmatpush2.bf16.msra.mxu0 0
    %843 = vmatprep.subr.bf16.mxu0 0
    %844 = vmatpush2.bf16.msra.mxu0 0
    %845 = vmatprep.subr.bf16.mxu0 0
    %846 = vmatpush2.bf16.msra.mxu0 0
    %847 = vmatprep.subr.bf16.mxu0 0
    %848 = vmatpush2.bf16.msra.mxu0 0
    %849 = vmatprep.subr.bf16.mxu0 0
    %850 = vmatpush2.bf16.msra.mxu0 0
    %851 = vmatprep.subr.bf16.mxu0 0
    %852 = vmatpush2.bf16.msra.mxu0 0
    %853 = vmatprep.subr.bf16.mxu0 0
    %854 = vmatpush2.bf16.msra.mxu0 0
    %855 = vmatprep.subr.bf16.mxu0 0
    %856 = vmatpush2.bf16.msra.mxu0 0
    %857 = vmatprep.mubr.bf16.mxu0 0
    %858 = vmatmul.mubr.bf16.gmra.mxu0 %v823
    %v859 = vpop.f32.mrf.mxu0
    %v860 = vadd.f32 0.0, %v859
    %v861 = vpop.f32.mrf.mxu0
    %v862 = vpop.f32.mrf.mxu0
    %v863 = vpop.f32.mrf.mxu0
    %864 = vdwg.mxu0
    %v869 = vunpack.c.l.b16 %v455
    %v870 = vunpack.c.l.b16 %v456
    %v871 = vunpack.c.l.b16 %v457
    %v872 = vunpack.c.l.b16 %v458
    %v873 = vpack.c.b16 %v870, %v869
    %v874 = vpack.c.b16 %v872, %v871
    %v878 = vsel %vm476, %v640, 0
    %880 = vmatprep.subr.bf16.mxu0 0
    %881 = vmatpush1.bf16.msra.mxu0 0
    %882 = vmatprep.subr.bf16.mxu0 0
    %883 = vmatpush1.bf16.msra.mxu0 0
    %884 = vmatprep.subr.bf16.mxu0 0
    %885 = vmatpush1.bf16.msra.mxu0 0
    %886 = vmatprep.subr.bf16.mxu0 0
    %887 = vmatpush1.bf16.msra.mxu0 0
    %888 = vmatprep.subr.bf16.mxu0 0
    %889 = vmatpush1.bf16.msra.mxu0 0
    %890 = vmatprep.subr.bf16.mxu0 0
    %891 = vmatpush1.bf16.msra.mxu0 0
    %892 = vmatprep.subr.bf16.mxu0 0
    %893 = vmatpush1.bf16.msra.mxu0 %v874
    %894 = vmatprep.subr.bf16.mxu0 0
    %895 = vmatpush1.bf16.msra.mxu0 %v873
    %896 = vmatprep.subr.bf16.mxu0 0
    %897 = vmatpush2.bf16.msra.mxu0 0
    %898 = vmatprep.subr.bf16.mxu0 0
    %899 = vmatpush2.bf16.msra.mxu0 0
    %900 = vmatprep.subr.bf16.mxu0 0
    %901 = vmatpush2.bf16.msra.mxu0 0
    %902 = vmatprep.subr.bf16.mxu0 0
    %903 = vmatpush2.bf16.msra.mxu0 0
    %904 = vmatprep.subr.bf16.mxu0 0
    %905 = vmatpush2.bf16.msra.mxu0 0
    %906 = vmatprep.subr.bf16.mxu0 0
    %907 = vmatpush2.bf16.msra.mxu0 0
    %908 = vmatprep.subr.bf16.mxu0 0
    %909 = vmatpush2.bf16.msra.mxu0 0
    %910 = vmatprep.subr.bf16.mxu0 0
    %911 = vmatpush2.bf16.msra.mxu0 0
    %912 = vmatprep.mubr.bf16.mxu0 0
    %913 = vmatmul.mubr.bf16.gmra.mxu0 %v878
    %v914 = vpop.f32.mrf.mxu0
    %v915 = vadd.f32 %v860, %v914
    %v916 = vpop.f32.mrf.mxu0
    %v917 = vpop.f32.mrf.mxu0
    %v918 = vpop.f32.mrf.mxu0
    %919 = vdwg.mxu0
    %920 = vrot.lane.b32.xlu0 %v406, 64
    %v921 = vpop.permute.xlu0 %920
    %922 = vrot.lane.b32.xlu0 %v408, 64
    %v923 = vpop.permute.xlu0 %922
    %v924 = vsel %vm476, %v921, 0
    %v926 = vsel %vm476, %v923, 0
    %928 = vmatprep.subr.mxu0 0.0
    %929 = vmatpush1.xpose.msra.mxu0 0.0
    %930 = vmatprep.subr.mxu0 0.0
    %931 = vmatpush1.xpose.msra.mxu0 0.0
    %932 = vmatprep.subr.mxu0 0.0
    %933 = vmatpush1.xpose.msra.mxu0 0.0
    %934 = vmatprep.subr.mxu0 0.0
    %935 = vmatpush1.xpose.msra.mxu0 0.0
    %936 = vmatprep.subr.mxu0 0.0
    %937 = vmatpush1.xpose.msra.mxu0 0.0
    %938 = vmatprep.subr.mxu0 0.0
    %939 = vmatpush1.xpose.msra.mxu0 0.0
    %940 = vmatprep.subr.mxu0 0.0
    %941 = vmatpush1.xpose.msra.mxu0 0.0
    %942 = vmatprep.subr.mxu0 0.0
    %943 = vmatpush1.xpose.msra.mxu0 0.0
    %944 = vmatprep.subr.mxu0 0.0
    %945 = vmatpush1.xpose.msra.mxu0 0.0
    %946 = vmatprep.subr.mxu0 0.0
    %947 = vmatpush1.xpose.msra.mxu0 0.0
    %948 = vmatprep.subr.mxu0 0.0
    %949 = vmatpush1.xpose.msra.mxu0 0.0
    %950 = vmatprep.subr.mxu0 0.0
    %951 = vmatpush1.xpose.msra.mxu0 0.0
    %952 = vmatprep.subr.mxu0 0.0
    %953 = vmatpush1.xpose.msra.mxu0 0.0
    %954 = vmatprep.subr.mxu0 0.0
    %955 = vmatpush1.xpose.msra.mxu0 0.0
    %956 = vmatprep.subr.mxu0 0.0
    %957 = vmatpush1.xpose.msra.mxu0 0.0
    %958 = vmatprep.subr.mxu0 0.0
    %959 = vmatpush1.xpose.msra.mxu0 %v926
    %960 = vmatprep.subr.mxu0 0.0
    %961 = vmatpush2.xpose.msra.mxu0 0.0
    %962 = vmatprep.subr.mxu0 0.0
    %963 = vmatpush2.xpose.msra.mxu0 0.0
    %964 = vmatprep.subr.mxu0 0.0
    %965 = vmatpush2.xpose.msra.mxu0 0.0
    %966 = vmatprep.subr.mxu0 0.0
    %967 = vmatpush2.xpose.msra.mxu0 0.0
    %968 = vmatprep.subr.mxu0 0.0
    %969 = vmatpush2.xpose.msra.mxu0 0.0
    %970 = vmatprep.subr.mxu0 0.0
    %971 = vmatpush2.xpose.msra.mxu0 0.0
    %972 = vmatprep.subr.mxu0 0.0
    %973 = vmatpush2.xpose.msra.mxu0 0.0
    %974 = vmatprep.subr.mxu0 0.0
    %975 = vmatpush2.xpose.msra.mxu0 0.0
    %976 = vmatprep.subr.mxu0 0.0
    %977 = vmatpush2.xpose.msra.mxu0 0.0
    %978 = vmatprep.subr.mxu0 0.0
    %979 = vmatpush2.xpose.msra.mxu0 0.0
    %980 = vmatprep.subr.mxu0 0.0
    %981 = vmatpush2.xpose.msra.mxu0 0.0
    %982 = vmatprep.subr.mxu0 0.0
    %983 = vmatpush2.xpose.msra.mxu0 0.0
    %984 = vmatprep.subr.mxu0 0.0
    %985 = vmatpush2.xpose.msra.mxu0 0.0
    %986 = vmatprep.subr.mxu0 0.0
    %987 = vmatpush2.xpose.msra.mxu0 0.0
    %988 = vmatprep.subr.mxu0 0.0
    %989 = vmatpush2.xpose.msra.mxu0 0.0
    %990 = vmatprep.subr.mxu0 0.0
    %991 = vmatpush2.xpose.msra.mxu0 0.0
    %992 = vmatprep.mubr.f32.mxu0 0.0
    %993 = vmatmul.mubr.f32.gmra.mxu0 %v924
    %v994 = vpop.f32.mrf.mxu0
    %v995 = vadd.f32 0.0, %v994
    %v996 = vpop.f32.mrf.mxu0
    %997 = vdwg.mxu0
    %v998 = vmul.f32 %v995, 0.17677669
    %v999 = vadd.f32 %v998, %v475
    %v1000 = vsel %vm555, %v999, -inf
    %1001 = vmax.xlane.f32.xlu0 %v1000
    %v1002 = vpop.xlane.xlu0 %1001
    %v1003 = vsub.f32 %v999, %v1002
    %v1004 = vmul.f32 %v1003, 1.442695
    %v1005 = vpow.pop %v1004
    %v1006 = vsel %vm555, %v1005, 0.0
    %1007 = vadd.xlane.f32.xlu0 %v1006
    %v1008 = vpop.xlane.xlu0 %1007
    %v1009 = vrcp.pop %v1008
    %v1010 = vmul.f32 %v1005, %v1009
    %1011 = vrot.lane.b32.xlu0 %v449, 64
    %v1012 = vpop.permute.xlu0 %1011
    %v1015 = vsel %vm555, %v1010, 0
    %1017 = vmatprep.subr.mxu0 0.0
    %1018 = vmatpush1.msra.mxu0 0.0
    %1019 = vmatprep.subr.mxu0 0.0
    %1020 = vmatpush1.msra.mxu0 0.0
    %1021 = vmatprep.subr.mxu0 0.0
    %1022 = vmatpush1.msra.mxu0 0.0
    %1023 = vmatprep.subr.mxu0 0.0
    %1024 = vmatpush1.msra.mxu0 0.0
    %1025 = vmatprep.subr.mxu0 0.0
    %1026 = vmatpush1.msra.mxu0 0.0
    %1027 = vmatprep.subr.mxu0 0.0
    %1028 = vmatpush1.msra.mxu0 0.0
    %1029 = vmatprep.subr.mxu0 0.0
    %1030 = vmatpush1.msra.mxu0 0.0
    %1031 = vmatprep.subr.mxu0 0.0
    %1032 = vmatpush1.msra.mxu0 0.0
    %1033 = vmatprep.subr.mxu0 0.0
    %1034 = vmatpush1.msra.mxu0 0.0
    %1035 = vmatprep.subr.mxu0 0.0
    %1036 = vmatpush1.msra.mxu0 0.0
    %1037 = vmatprep.subr.mxu0 0.0
    %1038 = vmatpush1.msra.mxu0 0.0
    %1039 = vmatprep.subr.mxu0 0.0
    %1040 = vmatpush1.msra.mxu0 0.0
    %1041 = vmatprep.subr.mxu0 0.0
    %1042 = vmatpush1.msra.mxu0 0.0
    %1043 = vmatprep.subr.mxu0 0.0
    %1044 = vmatpush1.msra.mxu0 0.0
    %1045 = vmatprep.subr.mxu0 0.0
    %1046 = vmatpush1.msra.mxu0 0.0
    %1047 = vmatprep.subr.mxu0 0.0
    %1048 = vmatpush1.msra.mxu0 %v1012
    %1049 = vmatprep.subr.mxu0 0.0
    %1050 = vmatpush2.msra.mxu0 0.0
    %1051 = vmatprep.subr.mxu0 0.0
    %1052 = vmatpush2.msra.mxu0 0.0
    %1053 = vmatprep.subr.mxu0 0.0
    %1054 = vmatpush2.msra.mxu0 0.0
    %1055 = vmatprep.subr.mxu0 0.0
    %1056 = vmatpush2.msra.mxu0 0.0
    %1057 = vmatprep.subr.mxu0 0.0
    %1058 = vmatpush2.msra.mxu0 0.0
    %1059 = vmatprep.subr.mxu0 0.0
    %1060 = vmatpush2.msra.mxu0 0.0
    %1061 = vmatprep.subr.mxu0 0.0
    %1062 = vmatpush2.msra.mxu0 0.0
    %1063 = vmatprep.subr.mxu0 0.0
    %1064 = vmatpush2.msra.mxu0 0.0
    %1065 = vmatprep.subr.mxu0 0.0
    %1066 = vmatpush2.msra.mxu0 0.0
    %1067 = vmatprep.subr.mxu0 0.0
    %1068 = vmatpush2.msra.mxu0 0.0
    %1069 = vmatprep.subr.mxu0 0.0
    %1070 = vmatpush2.msra.mxu0 0.0
    %1071 = vmatprep.subr.mxu0 0.0
    %1072 = vmatpush2.msra.mxu0 0.0
    %1073 = vmatprep.subr.mxu0 0.0
    %1074 = vmatpush2.msra.mxu0 0.0
    %1075 = vmatprep.subr.mxu0 0.0
    %1076 = vmatpush2.msra.mxu0 0.0
    %1077 = vmatprep.subr.mxu0 0.0
    %1078 = vmatpush2.msra.mxu0 0.0
    %1079 = vmatprep.subr.mxu0 0.0
    %1080 = vmatpush2.msra.mxu0 0.0
    %1081 = vmatprep.mubr.f32.mxu0 0.0
    %1082 = vmatmul.mubr.f32.gmra.mxu0 %v1015
    %v1083 = vpop.f32.mrf.mxu0
    %v1084 = vadd.f32 0.0, %v1083
    %v1085 = vpop.f32.mrf.mxu0
    %1086 = vdwg.mxu0
    %v1087 = vpack.c.bf16 %v1084, %v1084
    %v1092 = vunpack.c.l.b16 %v463
    %v1093 = vunpack.c.l.b16 %v464
    %v1094 = vunpack.c.l.b16 %v465
    %v1095 = vunpack.c.l.b16 %v466
    %v1096 = vpack.c.b16 %v1093, %v1092
    %v1097 = vpack.c.b16 %v1095, %v1094
    %v1101 = vsel %vm476, %v1087, 0
    %1103 = vmatprep.subr.bf16.mxu0 0
    %1104 = vmatpush1.bf16.msra.mxu0 0
    %1105 = vmatprep.subr.bf16.mxu0 0
    %1106 = vmatpush1.bf16.msra.mxu0 0
    %1107 = vmatprep.subr.bf16.mxu0 0
    %1108 = vmatpush1.bf16.msra.mxu0 0
    %1109 = vmatprep.subr.bf16.mxu0 0
    %1110 = vmatpush1.bf16.msra.mxu0 0
    %1111 = vmatprep.subr.bf16.mxu0 0
    %1112 = vmatpush1.bf16.msra.mxu0 0
    %1113 = vmatprep.subr.bf16.mxu0 0
    %1114 = vmatpush1.bf16.msra.mxu0 0
    %1115 = vmatprep.subr.bf16.mxu0 0
    %1116 = vmatpush1.bf16.msra.mxu0 %v1097
    %1117 = vmatprep.subr.bf16.mxu0 0
    %1118 = vmatpush1.bf16.msra.mxu0 %v1096
    %1119 = vmatprep.subr.bf16.mxu0 0
    %1120 = vmatpush2.bf16.msra.mxu0 0
    %1121 = vmatprep.subr.bf16.mxu0 0
    %1122 = vmatpush2.bf16.msra.mxu0 0
    %1123 = vmatprep.subr.bf16.mxu0 0
    %1124 = vmatpush2.bf16.msra.mxu0 0
    %1125 = vmatprep.subr.bf16.mxu0 0
    %1126 = vmatpush2.bf16.msra.mxu0 0
    %1127 = vmatprep.subr.bf16.mxu0 0
    %1128 = vmatpush2.bf16.msra.mxu0 0
    %1129 = vmatprep.subr.bf16.mxu0 0
    %1130 = vmatpush2.bf16.msra.mxu0 0
    %1131 = vmatprep.subr.bf16.mxu0 0
    %1132 = vmatpush2.bf16.msra.mxu0 0
    %1133 = vmatprep.subr.bf16.mxu0 0
    %1134 = vmatpush2.bf16.msra.mxu0 0
    %1135 = vmatprep.mubr.bf16.mxu0 0
    %1136 = vmatmul.mubr.bf16.gmra.mxu0 %v1101
    %v1137 = vpop.f32.mrf.mxu0
    %v1138 = vadd.f32 0.0, %v1137
    %v1139 = vpop.f32.mrf.mxu0
    %v1140 = vpop.f32.mrf.mxu0
    %v1141 = vpop.f32.mrf.mxu0
    %1142 = vdwg.mxu0
    %v1143 = vadd.f32 %v915, %v1138
    %1144 = vrot.lane.b32.xlu0 %v406, 32
    %v1145 = vpop.permute.xlu0 %1144
    %1146 = vrot.lane.b32.xlu0 %v408, 32
    %v1147 = vpop.permute.xlu0 %1146
    %v1148 = vsel %vm476, %v1145, 0
    %v1150 = vsel %vm476, %v1147, 0
    %1152 = vmatprep.subr.mxu0 0.0
    %1153 = vmatpush1.xpose.msra.mxu0 0.0
    %1154 = vmatprep.subr.mxu0 0.0
    %1155 = vmatpush1.xpose.msra.mxu0 0.0
    %1156 = vmatprep.subr.mxu0 0.0
    %1157 = vmatpush1.xpose.msra.mxu0 0.0
    %1158 = vmatprep.subr.mxu0 0.0
    %1159 = vmatpush1.xpose.msra.mxu0 0.0
    %1160 = vmatprep.subr.mxu0 0.0
    %1161 = vmatpush1.xpose.msra.mxu0 0.0
    %1162 = vmatprep.subr.mxu0 0.0
    %1163 = vmatpush1.xpose.msra.mxu0 0.0
    %1164 = vmatprep.subr.mxu0 0.0
    %1165 = vmatpush1.xpose.msra.mxu0 0.0
    %1166 = vmatprep.subr.mxu0 0.0
    %1167 = vmatpush1.xpose.msra.mxu0 0.0
    %1168 = vmatprep.subr.mxu0 0.0
    %1169 = vmatpush1.xpose.msra.mxu0 0.0
    %1170 = vmatprep.subr.mxu0 0.0
    %1171 = vmatpush1.xpose.msra.mxu0 0.0
    %1172 = vmatprep.subr.mxu0 0.0
    %1173 = vmatpush1.xpose.msra.mxu0 0.0
    %1174 = vmatprep.subr.mxu0 0.0
    %1175 = vmatpush1.xpose.msra.mxu0 0.0
    %1176 = vmatprep.subr.mxu0 0.0
    %1177 = vmatpush1.xpose.msra.mxu0 0.0
    %1178 = vmatprep.subr.mxu0 0.0
    %1179 = vmatpush1.xpose.msra.mxu0 0.0
    %1180 = vmatprep.subr.mxu0 0.0
    %1181 = vmatpush1.xpose.msra.mxu0 0.0
    %1182 = vmatprep.subr.mxu0 0.0
    %1183 = vmatpush1.xpose.msra.mxu0 %v1150
    %1184 = vmatprep.subr.mxu0 0.0
    %1185 = vmatpush2.xpose.msra.mxu0 0.0
    %1186 = vmatprep.subr.mxu0 0.0
    %1187 = vmatpush2.xpose.msra.mxu0 0.0
    %1188 = vmatprep.subr.mxu0 0.0
    %1189 = vmatpush2.xpose.msra.mxu0 0.0
    %1190 = vmatprep.subr.mxu0 0.0
    %1191 = vmatpush2.xpose.msra.mxu0 0.0
    %1192 = vmatprep.subr.mxu0 0.0
    %1193 = vmatpush2.xpose.msra.mxu0 0.0
    %1194 = vmatprep.subr.mxu0 0.0
    %1195 = vmatpush2.xpose.msra.mxu0 0.0
    %1196 = vmatprep.subr.mxu0 0.0
    %1197 = vmatpush2.xpose.msra.mxu0 0.0
    %1198 = vmatprep.subr.mxu0 0.0
    %1199 = vmatpush2.xpose.msra.mxu0 0.0
    %1200 = vmatprep.subr.mxu0 0.0
    %1201 = vmatpush2.xpose.msra.mxu0 0.0
    %1202 = vmatprep.subr.mxu0 0.0
    %1203 = vmatpush2.xpose.msra.mxu0 0.0
    %1204 = vmatprep.subr.mxu0 0.0
    %1205 = vmatpush2.xpose.msra.mxu0 0.0
    %1206 = vmatprep.subr.mxu0 0.0
    %1207 = vmatpush2.xpose.msra.mxu0 0.0
    %1208 = vmatprep.subr.mxu0 0.0
    %1209 = vmatpush2.xpose.msra.mxu0 0.0
    %1210 = vmatprep.subr.mxu0 0.0
    %1211 = vmatpush2.xpose.msra.mxu0 0.0
    %1212 = vmatprep.subr.mxu0 0.0
    %1213 = vmatpush2.xpose.msra.mxu0 0.0
    %1214 = vmatprep.subr.mxu0 0.0
    %1215 = vmatpush2.xpose.msra.mxu0 0.0
    %1216 = vmatprep.mubr.f32.mxu0 0.0
    %1217 = vmatmul.mubr.f32.gmra.mxu0 %v1148
    %v1218 = vpop.f32.mrf.mxu0
    %v1219 = vadd.f32 0.0, %v1218
    %v1220 = vpop.f32.mrf.mxu0
    %1221 = vdwg.mxu0
    %v1222 = vmul.f32 %v1219, 0.17677669
    %v1223 = vadd.f32 %v1222, %v475
    %v1224 = vsel %vm555, %v1223, -inf
    %1225 = vmax.xlane.f32.xlu0 %v1224
    %v1226 = vpop.xlane.xlu0 %1225
    %v1227 = vsub.f32 %v1223, %v1226
    %v1228 = vmul.f32 %v1227, 1.442695
    %v1229 = vpow.pop %v1228
    %v1230 = vsel %vm555, %v1229, 0.0
    %1231 = vadd.xlane.f32.xlu0 %v1230
    %v1232 = vpop.xlane.xlu0 %1231
    %v1233 = vrcp.pop %v1232
    %v1234 = vmul.f32 %v1229, %v1233
    %1235 = vrot.lane.b32.xlu0 %v449, 32
    %v1236 = vpop.permute.xlu0 %1235
    %v1239 = vsel %vm555, %v1234, 0
    %1241 = vmatprep.subr.mxu0 0.0
    %1242 = vmatpush1.msra.mxu0 0.0
    %1243 = vmatprep.subr.mxu0 0.0
    %1244 = vmatpush1.msra.mxu0 0.0
    %1245 = vmatprep.subr.mxu0 0.0
    %1246 = vmatpush1.msra.mxu0 0.0
    %1247 = vmatprep.subr.mxu0 0.0
    %1248 = vmatpush1.msra.mxu0 0.0
    %1249 = vmatprep.subr.mxu0 0.0
    %1250 = vmatpush1.msra.mxu0 0.0
    %1251 = vmatprep.subr.mxu0 0.0
    %1252 = vmatpush1.msra.mxu0 0.0
    %1253 = vmatprep.subr.mxu0 0.0
    %1254 = vmatpush1.msra.mxu0 0.0
    %1255 = vmatprep.subr.mxu0 0.0
    %1256 = vmatpush1.msra.mxu0 0.0
    %1257 = vmatprep.subr.mxu0 0.0
    %1258 = vmatpush1.msra.mxu0 0.0
    %1259 = vmatprep.subr.mxu0 0.0
    %1260 = vmatpush1.msra.mxu0 0.0
    %1261 = vmatprep.subr.mxu0 0.0
    %1262 = vmatpush1.msra.mxu0 0.0
    %1263 = vmatprep.subr.mxu0 0.0
    %1264 = vmatpush1.msra.mxu0 0.0
    %1265 = vmatprep.subr.mxu0 0.0
    %1266 = vmatpush1.msra.mxu0 0.0
    %1267 = vmatprep.subr.mxu0 0.0
    %1268 = vmatpush1.msra.mxu0 0.0
    %1269 = vmatprep.subr.mxu0 0.0
    %1270 = vmatpush1.msra.mxu0 0.0
    %1271 = vmatprep.subr.mxu0 0.0
    %1272 = vmatpush1.msra.mxu0 %v1236
    %1273 = vmatprep.subr.mxu0 0.0
    %1274 = vmatpush2.msra.mxu0 0.0
    %1275 = vmatprep.subr.mxu0 0.0
    %1276 = vmatpush2.msra.mxu0 0.0
    %1277 = vmatprep.subr.mxu0 0.0
    %1278 = vmatpush2.msra.mxu0 0.0
    %1279 = vmatprep.subr.mxu0 0.0
    %1280 = vmatpush2.msra.mxu0 0.0
    %1281 = vmatprep.subr.mxu0 0.0
    %1282 = vmatpush2.msra.mxu0 0.0
    %1283 = vmatprep.subr.mxu0 0.0
    %1284 = vmatpush2.msra.mxu0 0.0
    %1285 = vmatprep.subr.mxu0 0.0
    %1286 = vmatpush2.msra.mxu0 0.0
    %1287 = vmatprep.subr.mxu0 0.0
    %1288 = vmatpush2.msra.mxu0 0.0
    %1289 = vmatprep.subr.mxu0 0.0
    %1290 = vmatpush2.msra.mxu0 0.0
    %1291 = vmatprep.subr.mxu0 0.0
    %1292 = vmatpush2.msra.mxu0 0.0
    %1293 = vmatprep.subr.mxu0 0.0
    %1294 = vmatpush2.msra.mxu0 0.0
    %1295 = vmatprep.subr.mxu0 0.0
    %1296 = vmatpush2.msra.mxu0 0.0
    %1297 = vmatprep.subr.mxu0 0.0
    %1298 = vmatpush2.msra.mxu0 0.0
    %1299 = vmatprep.subr.mxu0 0.0
    %1300 = vmatpush2.msra.mxu0 0.0
    %1301 = vmatprep.subr.mxu0 0.0
    %1302 = vmatpush2.msra.mxu0 0.0
    %1303 = vmatprep.subr.mxu0 0.0
    %1304 = vmatpush2.msra.mxu0 0.0
    %1305 = vmatprep.mubr.f32.mxu0 0.0
    %1306 = vmatmul.mubr.f32.gmra.mxu0 %v1239
    %v1307 = vpop.f32.mrf.mxu0
    %v1308 = vadd.f32 0.0, %v1307
    %v1309 = vpop.f32.mrf.mxu0
    %1310 = vdwg.mxu0
    %v1311 = vpack.c.bf16 %v1308, %v1308
    %v1316 = vunpack.c.l.b16 %v467
    %v1317 = vunpack.c.l.b16 %v468
    %v1318 = vunpack.c.l.b16 %v469
    %v1319 = vunpack.c.l.b16 %v470
    %v1320 = vpack.c.b16 %v1317, %v1316
    %v1321 = vpack.c.b16 %v1319, %v1318
    %v1325 = vsel %vm476, %v1311, 0
    %1327 = vmatprep.subr.bf16.mxu0 0
    %1328 = vmatpush1.bf16.msra.mxu0 0
    %1329 = vmatprep.subr.bf16.mxu0 0
    %1330 = vmatpush1.bf16.msra.mxu0 0
    %1331 = vmatprep.subr.bf16.mxu0 0
    %1332 = vmatpush1.bf16.msra.mxu0 0
    %1333 = vmatprep.subr.bf16.mxu0 0
    %1334 = vmatpush1.bf16.msra.mxu0 0
    %1335 = vmatprep.subr.bf16.mxu0 0
    %1336 = vmatpush1.bf16.msra.mxu0 0
    %1337 = vmatprep.subr.bf16.mxu0 0
    %1338 = vmatpush1.bf16.msra.mxu0 0
    %1339 = vmatprep.subr.bf16.mxu0 0
    %1340 = vmatpush1.bf16.msra.mxu0 %v1321
    %1341 = vmatprep.subr.bf16.mxu0 0
    %1342 = vmatpush1.bf16.msra.mxu0 %v1320
    %1343 = vmatprep.subr.bf16.mxu0 0
    %1344 = vmatpush2.bf16.msra.mxu0 0
    %1345 = vmatprep.subr.bf16.mxu0 0
    %1346 = vmatpush2.bf16.msra.mxu0 0
    %1347 = vmatprep.subr.bf16.mxu0 0
    %1348 = vmatpush2.bf16.msra.mxu0 0
    %1349 = vmatprep.subr.bf16.mxu0 0
    %1350 = vmatpush2.bf16.msra.mxu0 0
    %1351 = vmatprep.subr.bf16.mxu0 0
    %1352 = vmatpush2.bf16.msra.mxu0 0
    %1353 = vmatprep.subr.bf16.mxu0 0
    %1354 = vmatpush2.bf16.msra.mxu0 0
    %1355 = vmatprep.subr.bf16.mxu0 0
    %1356 = vmatpush2.bf16.msra.mxu0 0
    %1357 = vmatprep.subr.bf16.mxu0 0
    %1358 = vmatpush2.bf16.msra.mxu0 0
    %1359 = vmatprep.mubr.bf16.mxu0 0
    %1360 = vmatmul.mubr.bf16.gmra.mxu0 %v1325
    %v1361 = vpop.f32.mrf.mxu0
    %v1362 = vadd.f32 0.0, %v1361
    %v1363 = vpop.f32.mrf.mxu0
    %v1364 = vpop.f32.mrf.mxu0
    %v1365 = vpop.f32.mrf.mxu0
    %1366 = vdwg.mxu0
    %v1367 = vadd.f32 %v1143, %v1362
    %s1368 = sadd.s32 %s471, 1
    %s1369 = sld [smem:[#allocation3 + %s1368]]
    %v1370 = vstv %s1369
    %vm1371 = vcmp.lt.s32.totalorder %v149, %v1370
    %v1372 = vsel %vm1371, 0.0, -1e+09
    %v1374 = vsel %vm476, %v410, 0
    %v1377 = vsel %vm476, %v412, 0
    %1379 = vmatprep.subr.mxu0 0.0
    %1380 = vmatpush1.xpose.msra.mxu0 0.0
    %1381 = vmatprep.subr.mxu0 0.0
    %1382 = vmatpush1.xpose.msra.mxu0 0.0
    %1383 = vmatprep.subr.mxu0 0.0
    %1384 = vmatpush1.xpose.msra.mxu0 0.0
    %1385 = vmatprep.subr.mxu0 0.0
    %1386 = vmatpush1.xpose.msra.mxu0 0.0
    %1387 = vmatprep.subr.mxu0 0.0
    %1388 = vmatpush1.xpose.msra.mxu0 0.0
    %1389 = vmatprep.subr.mxu0 0.0
    %1390 = vmatpush1.xpose.msra.mxu0 0.0
    %1391 = vmatprep.subr.mxu0 0.0
    %1392 = vmatpush1.xpose.msra.mxu0 0.0
    %1393 = vmatprep.subr.mxu0 0.0
    %1394 = vmatpush1.xpose.msra.mxu0 0.0
    %1395 = vmatprep.subr.mxu0 0.0
    %1396 = vmatpush1.xpose.msra.mxu0 0.0
    %1397 = vmatprep.subr.mxu0 0.0
    %1398 = vmatpush1.xpose.msra.mxu0 0.0
    %1399 = vmatprep.subr.mxu0 0.0
    %1400 = vmatpush1.xpose.msra.mxu0 0.0
    %1401 = vmatprep.subr.mxu0 0.0
    %1402 = vmatpush1.xpose.msra.mxu0 0.0
    %1403 = vmatprep.subr.mxu0 0.0
    %1404 = vmatpush1.xpose.msra.mxu0 0.0
    %1405 = vmatprep.subr.mxu0 0.0
    %1406 = vmatpush1.xpose.msra.mxu0 0.0
    %1407 = vmatprep.subr.mxu0 0.0
    %1408 = vmatpush1.xpose.msra.mxu0 0.0
    %1409 = vmatprep.subr.mxu0 0.0
    %1410 = vmatpush1.xpose.msra.mxu0 %v1377
    %1411 = vmatprep.subr.mxu0 0.0
    %1412 = vmatpush2.xpose.msra.mxu0 0.0
    %1413 = vmatprep.subr.mxu0 0.0
    %1414 = vmatpush2.xpose.msra.mxu0 0.0
    %1415 = vmatprep.subr.mxu0 0.0
    %1416 = vmatpush2.xpose.msra.mxu0 0.0
    %1417 = vmatprep.subr.mxu0 0.0
    %1418 = vmatpush2.xpose.msra.mxu0 0.0
    %1419 = vmatprep.subr.mxu0 0.0
    %1420 = vmatpush2.xpose.msra.mxu0 0.0
    %1421 = vmatprep.subr.mxu0 0.0
    %1422 = vmatpush2.xpose.msra.mxu0 0.0
    %1423 = vmatprep.subr.mxu0 0.0
    %1424 = vmatpush2.xpose.msra.mxu0 0.0
    %1425 = vmatprep.subr.mxu0 0.0
    %1426 = vmatpush2.xpose.msra.mxu0 0.0
    %1427 = vmatprep.subr.mxu0 0.0
    %1428 = vmatpush2.xpose.msra.mxu0 0.0
    %1429 = vmatprep.subr.mxu0 0.0
    %1430 = vmatpush2.xpose.msra.mxu0 0.0
    %1431 = vmatprep.subr.mxu0 0.0
    %1432 = vmatpush2.xpose.msra.mxu0 0.0
    %1433 = vmatprep.subr.mxu0 0.0
    %1434 = vmatpush2.xpose.msra.mxu0 0.0
    %1435 = vmatprep.subr.mxu0 0.0
    %1436 = vmatpush2.xpose.msra.mxu0 0.0
    %1437 = vmatprep.subr.mxu0 0.0
    %1438 = vmatpush2.xpose.msra.mxu0 0.0
    %1439 = vmatprep.subr.mxu0 0.0
    %1440 = vmatpush2.xpose.msra.mxu0 0.0
    %1441 = vmatprep.subr.mxu0 0.0
    %1442 = vmatpush2.xpose.msra.mxu0 0.0
    %1443 = vmatprep.mubr.f32.mxu0 0.0
    %1444 = vmatmul.mubr.f32.gmra.mxu0 %v1374
    %v1445 = vpop.f32.mrf.mxu0
    %v1446 = vadd.f32 0.0, %v1445
    %v1447 = vpop.f32.mrf.mxu0
    %1448 = vdwg.mxu0
    %v1449 = vmul.f32 %v1446, 0.17677669
    %v1450 = vadd.f32 %v1449, %v1372
    %v1451 = vsel %vm555, %v1450, -inf
    %1452 = vmax.xlane.f32.xlu0 %v1451
    %v1453 = vpop.xlane.xlu0 %1452
    %v1454 = vsub.f32 %v1450, %v1453
    %v1455 = vmul.f32 %v1454, 1.442695
    %v1456 = vpow.pop %v1455
    %v1457 = vsel %vm555, %v1456, 0.0
    %1458 = vadd.xlane.f32.xlu0 %v1457
    %v1459 = vpop.xlane.xlu0 %1458
    %v1460 = vrcp.pop %v1459
    %v1461 = vmul.f32 %v1456, %v1460
    %v1463 = vsel %vm555, %v1461, 0
    %1465 = vmatprep.subr.mxu0 0.0
    %1466 = vmatpush1.msra.mxu0 0.0
    %1467 = vmatprep.subr.mxu0 0.0
    %1468 = vmatpush1.msra.mxu0 0.0
    %1469 = vmatprep.subr.mxu0 0.0
    %1470 = vmatpush1.msra.mxu0 0.0
    %1471 = vmatprep.subr.mxu0 0.0
    %1472 = vmatpush1.msra.mxu0 0.0
    %1473 = vmatprep.subr.mxu0 0.0
    %1474 = vmatpush1.msra.mxu0 0.0
    %1475 = vmatprep.subr.mxu0 0.0
    %1476 = vmatpush1.msra.mxu0 0.0
    %1477 = vmatprep.subr.mxu0 0.0
    %1478 = vmatpush1.msra.mxu0 0.0
    %1479 = vmatprep.subr.mxu0 0.0
    %1480 = vmatpush1.msra.mxu0 0.0
    %1481 = vmatprep.subr.mxu0 0.0
    %1482 = vmatpush1.msra.mxu0 0.0
    %1483 = vmatprep.subr.mxu0 0.0
    %1484 = vmatpush1.msra.mxu0 0.0
    %1485 = vmatprep.subr.mxu0 0.0
    %1486 = vmatpush1.msra.mxu0 0.0
    %1487 = vmatprep.subr.mxu0 0.0
    %1488 = vmatpush1.msra.mxu0 0.0
    %1489 = vmatprep.subr.mxu0 0.0
    %1490 = vmatpush1.msra.mxu0 0.0
    %1491 = vmatprep.subr.mxu0 0.0
    %1492 = vmatpush1.msra.mxu0 0.0
    %1493 = vmatprep.subr.mxu0 0.0
    %1494 = vmatpush1.msra.mxu0 0.0
    %1495 = vmatprep.subr.mxu0 0.0
    %1496 = vmatpush1.msra.mxu0 %v452
    %1497 = vmatprep.subr.mxu0 0.0
    %1498 = vmatpush2.msra.mxu0 0.0
    %1499 = vmatprep.subr.mxu0 0.0
    %1500 = vmatpush2.msra.mxu0 0.0
    %1501 = vmatprep.subr.mxu0 0.0
    %1502 = vmatpush2.msra.mxu0 0.0
    %1503 = vmatprep.subr.mxu0 0.0
    %1504 = vmatpush2.msra.mxu0 0.0
    %1505 = vmatprep.subr.mxu0 0.0
    %1506 = vmatpush2.msra.mxu0 0.0
    %1507 = vmatprep.subr.mxu0 0.0
    %1508 = vmatpush2.msra.mxu0 0.0
    %1509 = vmatprep.subr.mxu0 0.0
    %1510 = vmatpush2.msra.mxu0 0.0
    %1511 = vmatprep.subr.mxu0 0.0
    %1512 = vmatpush2.msra.mxu0 0.0
    %1513 = vmatprep.subr.mxu0 0.0
    %1514 = vmatpush2.msra.mxu0 0.0
    %1515 = vmatprep.subr.mxu0 0.0
    %1516 = vmatpush2.msra.mxu0 0.0
    %1517 = vmatprep.subr.mxu0 0.0
    %1518 = vmatpush2.msra.mxu0 0.0
    %1519 = vmatprep.subr.mxu0 0.0
    %1520 = vmatpush2.msra.mxu0 0.0
    %1521 = vmatprep.subr.mxu0 0.0
    %1522 = vmatpush2.msra.mxu0 0.0
    %1523 = vmatprep.subr.mxu0 0.0
    %1524 = vmatpush2.msra.mxu0 0.0
    %1525 = vmatprep.subr.mxu0 0.0
    %1526 = vmatpush2.msra.mxu0 0.0
    %1527 = vmatprep.subr.mxu0 0.0
    %1528 = vmatpush2.msra.mxu0 0.0
    %1529 = vmatprep.mubr.f32.mxu0 0.0
    %1530 = vmatmul.mubr.f32.gmra.mxu0 %v1463
    %v1531 = vpop.f32.mrf.mxu0
    %v1532 = vadd.f32 0.0, %v1531
    %v1533 = vpop.f32.mrf.mxu0
    %1534 = vdwg.mxu0
    %v1535 = vpack.c.bf16 %v1532, %v1532
    %1536 = vrot.lane.b32.xlu0 %v410, 96
    %v1537 = vpop.permute.xlu0 %1536
    %1538 = vrot.lane.b32.xlu0 %v412, 96
    %v1539 = vpop.permute.xlu0 %1538
    %v1540 = vsel %vm476, %v1537, 0
    %v1542 = vsel %vm476, %v1539, 0
    %1544 = vmatprep.subr.mxu0 0.0
    %1545 = vmatpush1.xpose.msra.mxu0 0.0
    %1546 = vmatprep.subr.mxu0 0.0
    %1547 = vmatpush1.xpose.msra.mxu0 0.0
    %1548 = vmatprep.subr.mxu0 0.0
    %1549 = vmatpush1.xpose.msra.mxu0 0.0
    %1550 = vmatprep.subr.mxu0 0.0
    %1551 = vmatpush1.xpose.msra.mxu0 0.0
    %1552 = vmatprep.subr.mxu0 0.0
    %1553 = vmatpush1.xpose.msra.mxu0 0.0
    %1554 = vmatprep.subr.mxu0 0.0
    %1555 = vmatpush1.xpose.msra.mxu0 0.0
    %1556 = vmatprep.subr.mxu0 0.0
    %1557 = vmatpush1.xpose.msra.mxu0 0.0
    %1558 = vmatprep.subr.mxu0 0.0
    %1559 = vmatpush1.xpose.msra.mxu0 0.0
    %1560 = vmatprep.subr.mxu0 0.0
    %1561 = vmatpush1.xpose.msra.mxu0 0.0
    %1562 = vmatprep.subr.mxu0 0.0
    %1563 = vmatpush1.xpose.msra.mxu0 0.0
    %1564 = vmatprep.subr.mxu0 0.0
    %1565 = vmatpush1.xpose.msra.mxu0 0.0
    %1566 = vmatprep.subr.mxu0 0.0
    %1567 = vmatpush1.xpose.msra.mxu0 0.0
    %1568 = vmatprep.subr.mxu0 0.0
    %1569 = vmatpush1.xpose.msra.mxu0 0.0
    %1570 = vmatprep.subr.mxu0 0.0
    %1571 = vmatpush1.xpose.msra.mxu0 0.0
    %1572 = vmatprep.subr.mxu0 0.0
    %1573 = vmatpush1.xpose.msra.mxu0 0.0
    %1574 = vmatprep.subr.mxu0 0.0
    %1575 = vmatpush1.xpose.msra.mxu0 %v1542
    %1576 = vmatprep.subr.mxu0 0.0
    %1577 = vmatpush2.xpose.msra.mxu0 0.0
    %1578 = vmatprep.subr.mxu0 0.0
    %1579 = vmatpush2.xpose.msra.mxu0 0.0
    %1580 = vmatprep.subr.mxu0 0.0
    %1581 = vmatpush2.xpose.msra.mxu0 0.0
    %1582 = vmatprep.subr.mxu0 0.0
    %1583 = vmatpush2.xpose.msra.mxu0 0.0
    %1584 = vmatprep.subr.mxu0 0.0
    %1585 = vmatpush2.xpose.msra.mxu0 0.0
    %1586 = vmatprep.subr.mxu0 0.0
    %1587 = vmatpush2.xpose.msra.mxu0 0.0
    %1588 = vmatprep.subr.mxu0 0.0
    %1589 = vmatpush2.xpose.msra.mxu0 0.0
    %1590 = vmatprep.subr.mxu0 0.0
    %1591 = vmatpush2.xpose.msra.mxu0 0.0
    %1592 = vmatprep.subr.mxu0 0.0
    %1593 = vmatpush2.xpose.msra.mxu0 0.0
    %1594 = vmatprep.subr.mxu0 0.0
    %1595 = vmatpush2.xpose.msra.mxu0 0.0
    %1596 = vmatprep.subr.mxu0 0.0
    %1597 = vmatpush2.xpose.msra.mxu0 0.0
    %1598 = vmatprep.subr.mxu0 0.0
    %1599 = vmatpush2.xpose.msra.mxu0 0.0
    %1600 = vmatprep.subr.mxu0 0.0
    %1601 = vmatpush2.xpose.msra.mxu0 0.0
    %1602 = vmatprep.subr.mxu0 0.0
    %1603 = vmatpush2.xpose.msra.mxu0 0.0
    %1604 = vmatprep.subr.mxu0 0.0
    %1605 = vmatpush2.xpose.msra.mxu0 0.0
    %1606 = vmatprep.subr.mxu0 0.0
    %1607 = vmatpush2.xpose.msra.mxu0 0.0
    %1608 = vmatprep.mubr.f32.mxu0 0.0
    %1609 = vmatmul.mubr.f32.gmra.mxu0 %v1540
    %v1610 = vpop.f32.mrf.mxu0
    %v1611 = vadd.f32 0.0, %v1610
    %v1612 = vpop.f32.mrf.mxu0
    %1613 = vdwg.mxu0
    %v1614 = vmul.f32 %v1611, 0.17677669
    %v1615 = vadd.f32 %v1614, %v1372
    %v1616 = vsel %vm555, %v1615, -inf
    %1617 = vmax.xlane.f32.xlu0 %v1616
    %v1618 = vpop.xlane.xlu0 %1617
    %v1619 = vsub.f32 %v1615, %v1618
    %v1620 = vmul.f32 %v1619, 1.442695
    %v1621 = vpow.pop %v1620
    %v1622 = vsel %vm555, %v1621, 0.0
    %1623 = vadd.xlane.f32.xlu0 %v1622
    %v1624 = vpop.xlane.xlu0 %1623
    %v1625 = vrcp.pop %v1624
    %v1626 = vmul.f32 %v1621, %v1625
    %1628 = vrot.lane.b32.xlu0 %v452, 96
    %v1629 = vpop.permute.xlu0 %1628
    %v1632 = vsel %vm555, %v1626, 0
    %1634 = vmatprep.subr.mxu0 0.0
    %1635 = vmatpush1.msra.mxu0 0.0
    %1636 = vmatprep.subr.mxu0 0.0
    %1637 = vmatpush1.msra.mxu0 0.0
    %1638 = vmatprep.subr.mxu0 0.0
    %1639 = vmatpush1.msra.mxu0 0.0
    %1640 = vmatprep.subr.mxu0 0.0
    %1641 = vmatpush1.msra.mxu0 0.0
    %1642 = vmatprep.subr.mxu0 0.0
    %1643 = vmatpush1.msra.mxu0 0.0
    %1644 = vmatprep.subr.mxu0 0.0
    %1645 = vmatpush1.msra.mxu0 0.0
    %1646 = vmatprep.subr.mxu0 0.0
    %1647 = vmatpush1.msra.mxu0 0.0
    %1648 = vmatprep.subr.mxu0 0.0
    %1649 = vmatpush1.msra.mxu0 0.0
    %1650 = vmatprep.subr.mxu0 0.0
    %1651 = vmatpush1.msra.mxu0 0.0
    %1652 = vmatprep.subr.mxu0 0.0
    %1653 = vmatpush1.msra.mxu0 0.0
    %1654 = vmatprep.subr.mxu0 0.0
    %1655 = vmatpush1.msra.mxu0 0.0
    %1656 = vmatprep.subr.mxu0 0.0
    %1657 = vmatpush1.msra.mxu0 0.0
    %1658 = vmatprep.subr.mxu0 0.0
    %1659 = vmatpush1.msra.mxu0 0.0
    %1660 = vmatprep.subr.mxu0 0.0
    %1661 = vmatpush1.msra.mxu0 0.0
    %1662 = vmatprep.subr.mxu0 0.0
    %1663 = vmatpush1.msra.mxu0 0.0
    %1664 = vmatprep.subr.mxu0 0.0
    %1665 = vmatpush1.msra.mxu0 %v1629
    %1666 = vmatprep.subr.mxu0 0.0
    %1667 = vmatpush2.msra.mxu0 0.0
    %1668 = vmatprep.subr.mxu0 0.0
    %1669 = vmatpush2.msra.mxu0 0.0
    %1670 = vmatprep.subr.mxu0 0.0
    %1671 = vmatpush2.msra.mxu0 0.0
    %1672 = vmatprep.subr.mxu0 0.0
    %1673 = vmatpush2.msra.mxu0 0.0
    %1674 = vmatprep.subr.mxu0 0.0
    %1675 = vmatpush2.msra.mxu0 0.0
    %1676 = vmatprep.subr.mxu0 0.0
    %1677 = vmatpush2.msra.mxu0 0.0
    %1678 = vmatprep.subr.mxu0 0.0
    %1679 = vmatpush2.msra.mxu0 0.0
    %1680 = vmatprep.subr.mxu0 0.0
    %1681 = vmatpush2.msra.mxu0 0.0
    %1682 = vmatprep.subr.mxu0 0.0
    %1683 = vmatpush2.msra.mxu0 0.0
    %1684 = vmatprep.subr.mxu0 0.0
    %1685 = vmatpush2.msra.mxu0 0.0
    %1686 = vmatprep.subr.mxu0 0.0
    %1687 = vmatpush2.msra.mxu0 0.0
    %1688 = vmatprep.subr.mxu0 0.0
    %1689 = vmatpush2.msra.mxu0 0.0
    %1690 = vmatprep.subr.mxu0 0.0
    %1691 = vmatpush2.msra.mxu0 0.0
    %1692 = vmatprep.subr.mxu0 0.0
    %1693 = vmatpush2.msra.mxu0 0.0
    %1694 = vmatprep.subr.mxu0 0.0
    %1695 = vmatpush2.msra.mxu0 0.0
    %1696 = vmatprep.subr.mxu0 0.0
    %1697 = vmatpush2.msra.mxu0 0.0
    %1698 = vmatprep.mubr.f32.mxu0 0.0
    %1699 = vmatmul.mubr.f32.gmra.mxu0 %v1632
    %v1700 = vpop.f32.mrf.mxu0
    %v1701 = vadd.f32 0.0, %v1700
    %v1702 = vpop.f32.mrf.mxu0
    %1703 = vdwg.mxu0
    %v1704 = vpack.c.bf16 %v1701, %v1701
    %v1706 = vsel %vm476, %v1704, 0
    %1708 = vmatprep.subr.bf16.mxu0 0
    %1709 = vmatpush1.bf16.msra.mxu0 0
    %1710 = vmatprep.subr.bf16.mxu0 0
    %1711 = vmatpush1.bf16.msra.mxu0 0
    %1712 = vmatprep.subr.bf16.mxu0 0
    %1713 = vmatpush1.bf16.msra.mxu0 0
    %1714 = vmatprep.subr.bf16.mxu0 0
    %1715 = vmatpush1.bf16.msra.mxu0 0
    %1716 = vmatprep.subr.bf16.mxu0 0
    %1717 = vmatpush1.bf16.msra.mxu0 0
    %1718 = vmatprep.subr.bf16.mxu0 0
    %1719 = vmatpush1.bf16.msra.mxu0 0
    %1720 = vmatprep.subr.bf16.mxu0 0
    %1721 = vmatpush1.bf16.msra.mxu0 %v819
    %1722 = vmatprep.subr.bf16.mxu0 0
    %1723 = vmatpush1.bf16.msra.mxu0 %v818
    %1724 = vmatprep.subr.bf16.mxu0 0
    %1725 = vmatpush2.bf16.msra.mxu0 0
    %1726 = vmatprep.subr.bf16.mxu0 0
    %1727 = vmatpush2.bf16.msra.mxu0 0
    %1728 = vmatprep.subr.bf16.mxu0 0
    %1729 = vmatpush2.bf16.msra.mxu0 0
    %1730 = vmatprep.subr.bf16.mxu0 0
    %1731 = vmatpush2.bf16.msra.mxu0 0
    %1732 = vmatprep.subr.bf16.mxu0 0
    %1733 = vmatpush2.bf16.msra.mxu0 0
    %1734 = vmatprep.subr.bf16.mxu0 0
    %1735 = vmatpush2.bf16.msra.mxu0 0
    %1736 = vmatprep.subr.bf16.mxu0 0
    %1737 = vmatpush2.bf16.msra.mxu0 0
    %1738 = vmatprep.subr.bf16.mxu0 0
    %1739 = vmatpush2.bf16.msra.mxu0 0
    %1740 = vmatprep.mubr.bf16.mxu0 0
    %1741 = vmatmul.mubr.bf16.gmra.mxu0 %v1706
    %v1742 = vpop.f32.mrf.mxu0
    %v1743 = vadd.f32 0.0, %v1742
    %v1744 = vpop.f32.mrf.mxu0
    %v1745 = vpop.f32.mrf.mxu0
    %v1746 = vpop.f32.mrf.mxu0
    %1747 = vdwg.mxu0
    %v1749 = vsel %vm476, %v1535, 0
    %1751 = vmatprep.subr.bf16.mxu0 0
    %1752 = vmatpush1.bf16.msra.mxu0 0
    %1753 = vmatprep.subr.bf16.mxu0 0
    %1754 = vmatpush1.bf16.msra.mxu0 0
    %1755 = vmatprep.subr.bf16.mxu0 0
    %1756 = vmatpush1.bf16.msra.mxu0 0
    %1757 = vmatprep.subr.bf16.mxu0 0
    %1758 = vmatpush1.bf16.msra.mxu0 0
    %1759 = vmatprep.subr.bf16.mxu0 0
    %1760 = vmatpush1.bf16.msra.mxu0 0
    %1761 = vmatprep.subr.bf16.mxu0 0
    %1762 = vmatpush1.bf16.msra.mxu0 0
    %1763 = vmatprep.subr.bf16.mxu0 0
    %1764 = vmatpush1.bf16.msra.mxu0 %v874
    %1765 = vmatprep.subr.bf16.mxu0 0
    %1766 = vmatpush1.bf16.msra.mxu0 %v873
    %1767 = vmatprep.subr.bf16.mxu0 0
    %1768 = vmatpush2.bf16.msra.mxu0 0
    %1769 = vmatprep.subr.bf16.mxu0 0
    %1770 = vmatpush2.bf16.msra.mxu0 0
    %1771 = vmatprep.subr.bf16.mxu0 0
    %1772 = vmatpush2.bf16.msra.mxu0 0
    %1773 = vmatprep.subr.bf16.mxu0 0
    %1774 = vmatpush2.bf16.msra.mxu0 0
    %1775 = vmatprep.subr.bf16.mxu0 0
    %1776 = vmatpush2.bf16.msra.mxu0 0
    %1777 = vmatprep.subr.bf16.mxu0 0
    %1778 = vmatpush2.bf16.msra.mxu0 0
    %1779 = vmatprep.subr.bf16.mxu0 0
    %1780 = vmatpush2.bf16.msra.mxu0 0
    %1781 = vmatprep.subr.bf16.mxu0 0
    %1782 = vmatpush2.bf16.msra.mxu0 0
    %1783 = vmatprep.mubr.bf16.mxu0 0
    %1784 = vmatmul.mubr.bf16.gmra.mxu0 %v1749
    %v1785 = vpop.f32.mrf.mxu0
    %v1786 = vadd.f32 %v1743, %v1785
    %v1787 = vpop.f32.mrf.mxu0
    %v1788 = vpop.f32.mrf.mxu0
    %v1789 = vpop.f32.mrf.mxu0
    %1790 = vdwg.mxu0
    %1791 = vrot.lane.b32.xlu0 %v410, 64
    %v1792 = vpop.permute.xlu0 %1791
    %1793 = vrot.lane.b32.xlu0 %v412, 64
    %v1794 = vpop.permute.xlu0 %1793
    %v1795 = vsel %vm476, %v1792, 0
    %v1797 = vsel %vm476, %v1794, 0
    %1799 = vmatprep.subr.mxu0 0.0
    %1800 = vmatpush1.xpose.msra.mxu0 0.0
    %1801 = vmatprep.subr.mxu0 0.0
    %1802 = vmatpush1.xpose.msra.mxu0 0.0
    %1803 = vmatprep.subr.mxu0 0.0
    %1804 = vmatpush1.xpose.msra.mxu0 0.0
    %1805 = vmatprep.subr.mxu0 0.0
    %1806 = vmatpush1.xpose.msra.mxu0 0.0
    %1807 = vmatprep.subr.mxu0 0.0
    %1808 = vmatpush1.xpose.msra.mxu0 0.0
    %1809 = vmatprep.subr.mxu0 0.0
    %1810 = vmatpush1.xpose.msra.mxu0 0.0
    %1811 = vmatprep.subr.mxu0 0.0
    %1812 = vmatpush1.xpose.msra.mxu0 0.0
    %1813 = vmatprep.subr.mxu0 0.0
    %1814 = vmatpush1.xpose.msra.mxu0 0.0
    %1815 = vmatprep.subr.mxu0 0.0
    %1816 = vmatpush1.xpose.msra.mxu0 0.0
    %1817 = vmatprep.subr.mxu0 0.0
    %1818 = vmatpush1.xpose.msra.mxu0 0.0
    %1819 = vmatprep.subr.mxu0 0.0
    %1820 = vmatpush1.xpose.msra.mxu0 0.0
    %1821 = vmatprep.subr.mxu0 0.0
    %1822 = vmatpush1.xpose.msra.mxu0 0.0
    %1823 = vmatprep.subr.mxu0 0.0
    %1824 = vmatpush1.xpose.msra.mxu0 0.0
    %1825 = vmatprep.subr.mxu0 0.0
    %1826 = vmatpush1.xpose.msra.mxu0 0.0
    %1827 = vmatprep.subr.mxu0 0.0
    %1828 = vmatpush1.xpose.msra.mxu0 0.0
    %1829 = vmatprep.subr.mxu0 0.0
    %1830 = vmatpush1.xpose.msra.mxu0 %v1797
    %1831 = vmatprep.subr.mxu0 0.0
    %1832 = vmatpush2.xpose.msra.mxu0 0.0
    %1833 = vmatprep.subr.mxu0 0.0
    %1834 = vmatpush2.xpose.msra.mxu0 0.0
    %1835 = vmatprep.subr.mxu0 0.0
    %1836 = vmatpush2.xpose.msra.mxu0 0.0
    %1837 = vmatprep.subr.mxu0 0.0
    %1838 = vmatpush2.xpose.msra.mxu0 0.0
    %1839 = vmatprep.subr.mxu0 0.0
    %1840 = vmatpush2.xpose.msra.mxu0 0.0
    %1841 = vmatprep.subr.mxu0 0.0
    %1842 = vmatpush2.xpose.msra.mxu0 0.0
    %1843 = vmatprep.subr.mxu0 0.0
    %1844 = vmatpush2.xpose.msra.mxu0 0.0
    %1845 = vmatprep.subr.mxu0 0.0
    %1846 = vmatpush2.xpose.msra.mxu0 0.0
    %1847 = vmatprep.subr.mxu0 0.0
    %1848 = vmatpush2.xpose.msra.mxu0 0.0
    %1849 = vmatprep.subr.mxu0 0.0
    %1850 = vmatpush2.xpose.msra.mxu0 0.0
    %1851 = vmatprep.subr.mxu0 0.0
    %1852 = vmatpush2.xpose.msra.mxu0 0.0
    %1853 = vmatprep.subr.mxu0 0.0
    %1854 = vmatpush2.xpose.msra.mxu0 0.0
    %1855 = vmatprep.subr.mxu0 0.0
    %1856 = vmatpush2.xpose.msra.mxu0 0.0
    %1857 = vmatprep.subr.mxu0 0.0
    %1858 = vmatpush2.xpose.msra.mxu0 0.0
    %1859 = vmatprep.subr.mxu0 0.0
    %1860 = vmatpush2.xpose.msra.mxu0 0.0
    %1861 = vmatprep.subr.mxu0 0.0
    %1862 = vmatpush2.xpose.msra.mxu0 0.0
    %1863 = vmatprep.mubr.f32.mxu0 0.0
    %1864 = vmatmul.mubr.f32.gmra.mxu0 %v1795
    %v1865 = vpop.f32.mrf.mxu0
    %v1866 = vadd.f32 0.0, %v1865
    %v1867 = vpop.f32.mrf.mxu0
    %1868 = vdwg.mxu0
    %v1869 = vmul.f32 %v1866, 0.17677669
    %v1870 = vadd.f32 %v1869, %v1372
    %v1871 = vsel %vm555, %v1870, -inf
    %1872 = vmax.xlane.f32.xlu0 %v1871
    %v1873 = vpop.xlane.xlu0 %1872
    %v1874 = vsub.f32 %v1870, %v1873
    %v1875 = vmul.f32 %v1874, 1.442695
    %v1876 = vpow.pop %v1875
    %v1877 = vsel %vm555, %v1876, 0.0
    %1878 = vadd.xlane.f32.xlu0 %v1877
    %v1879 = vpop.xlane.xlu0 %1878
    %v1880 = vrcp.pop %v1879
    %v1881 = vmul.f32 %v1876, %v1880
    %1882 = vrot.lane.b32.xlu0 %v452, 64
    %v1883 = vpop.permute.xlu0 %1882
    %v1886 = vsel %vm555, %v1881, 0
    %1888 = vmatprep.subr.mxu0 0.0
    %1889 = vmatpush1.msra.mxu0 0.0
    %1890 = vmatprep.subr.mxu0 0.0
    %1891 = vmatpush1.msra.mxu0 0.0
    %1892 = vmatprep.subr.mxu0 0.0
    %1893 = vmatpush1.msra.mxu0 0.0
    %1894 = vmatprep.subr.mxu0 0.0
    %1895 = vmatpush1.msra.mxu0 0.0
    %1896 = vmatprep.subr.mxu0 0.0
    %1897 = vmatpush1.msra.mxu0 0.0
    %1898 = vmatprep.subr.mxu0 0.0
    %1899 = vmatpush1.msra.mxu0 0.0
    %1900 = vmatprep.subr.mxu0 0.0
    %1901 = vmatpush1.msra.mxu0 0.0
    %1902 = vmatprep.subr.mxu0 0.0
    %1903 = vmatpush1.msra.mxu0 0.0
    %1904 = vmatprep.subr.mxu0 0.0
    %1905 = vmatpush1.msra.mxu0 0.0
    %1906 = vmatprep.subr.mxu0 0.0
    %1907 = vmatpush1.msra.mxu0 0.0
    %1908 = vmatprep.subr.mxu0 0.0
    %1909 = vmatpush1.msra.mxu0 0.0
    %1910 = vmatprep.subr.mxu0 0.0
    %1911 = vmatpush1.msra.mxu0 0.0
    %1912 = vmatprep.subr.mxu0 0.0
    %1913 = vmatpush1.msra.mxu0 0.0
    %1914 = vmatprep.subr.mxu0 0.0
    %1915 = vmatpush1.msra.mxu0 0.0
    %1916 = vmatprep.subr.mxu0 0.0
    %1917 = vmatpush1.msra.mxu0 0.0
    %1918 = vmatprep.subr.mxu0 0.0
    %1919 = vmatpush1.msra.mxu0 %v1883
    %1920 = vmatprep.subr.mxu0 0.0
    %1921 = vmatpush2.msra.mxu0 0.0
    %1922 = vmatprep.subr.mxu0 0.0
    %1923 = vmatpush2.msra.mxu0 0.0
    %1924 = vmatprep.subr.mxu0 0.0
    %1925 = vmatpush2.msra.mxu0 0.0
    %1926 = vmatprep.subr.mxu0 0.0
    %1927 = vmatpush2.msra.mxu0 0.0
    %1928 = vmatprep.subr.mxu0 0.0
    %1929 = vmatpush2.msra.mxu0 0.0
    %1930 = vmatprep.subr.mxu0 0.0
    %1931 = vmatpush2.msra.mxu0 0.0
    %1932 = vmatprep.subr.mxu0 0.0
    %1933 = vmatpush2.msra.mxu0 0.0
    %1934 = vmatprep.subr.mxu0 0.0
    %1935 = vmatpush2.msra.mxu0 0.0
    %1936 = vmatprep.subr.mxu0 0.0
    %1937 = vmatpush2.msra.mxu0 0.0
    %1938 = vmatprep.subr.mxu0 0.0
    %1939 = vmatpush2.msra.mxu0 0.0
    %1940 = vmatprep.subr.mxu0 0.0
    %1941 = vmatpush2.msra.mxu0 0.0
    %1942 = vmatprep.subr.mxu0 0.0
    %1943 = vmatpush2.msra.mxu0 0.0
    %1944 = vmatprep.subr.mxu0 0.0
    %1945 = vmatpush2.msra.mxu0 0.0
    %1946 = vmatprep.subr.mxu0 0.0
    %1947 = vmatpush2.msra.mxu0 0.0
    %1948 = vmatprep.subr.mxu0 0.0
    %1949 = vmatpush2.msra.mxu0 0.0
    %1950 = vmatprep.subr.mxu0 0.0
    %1951 = vmatpush2.msra.mxu0 0.0
    %1952 = vmatprep.mubr.f32.mxu0 0.0
    %1953 = vmatmul.mubr.f32.gmra.mxu0 %v1886
    %v1954 = vpop.f32.mrf.mxu0
    %v1955 = vadd.f32 0.0, %v1954
    %v1956 = vpop.f32.mrf.mxu0
    %1957 = vdwg.mxu0
    %v1958 = vpack.c.bf16 %v1955, %v1955
    %v1960 = vsel %vm476, %v1958, 0
    %1962 = vmatprep.subr.bf16.mxu0 0
    %1963 = vmatpush1.bf16.msra.mxu0 0
    %1964 = vmatprep.subr.bf16.mxu0 0
    %1965 = vmatpush1.bf16.msra.mxu0 0
    %1966 = vmatprep.subr.bf16.mxu0 0
    %1967 = vmatpush1.bf16.msra.mxu0 0
    %1968 = vmatprep.subr.bf16.mxu0 0
    %1969 = vmatpush1.bf16.msra.mxu0 0
    %1970 = vmatprep.subr.bf16.mxu0 0
    %1971 = vmatpush1.bf16.msra.mxu0 0
    %1972 = vmatprep.subr.bf16.mxu0 0
    %1973 = vmatpush1.bf16.msra.mxu0 0
    %1974 = vmatprep.subr.bf16.mxu0 0
    %1975 = vmatpush1.bf16.msra.mxu0 %v1097
    %1976 = vmatprep.subr.bf16.mxu0 0
    %1977 = vmatpush1.bf16.msra.mxu0 %v1096
    %1978 = vmatprep.subr.bf16.mxu0 0
    %1979 = vmatpush2.bf16.msra.mxu0 0
    %1980 = vmatprep.subr.bf16.mxu0 0
    %1981 = vmatpush2.bf16.msra.mxu0 0
    %1982 = vmatprep.subr.bf16.mxu0 0
    %1983 = vmatpush2.bf16.msra.mxu0 0
    %1984 = vmatprep.subr.bf16.mxu0 0
    %1985 = vmatpush2.bf16.msra.mxu0 0
    %1986 = vmatprep.subr.bf16.mxu0 0
    %1987 = vmatpush2.bf16.msra.mxu0 0
    %1988 = vmatprep.subr.bf16.mxu0 0
    %1989 = vmatpush2.bf16.msra.mxu0 0
    %1990 = vmatprep.subr.bf16.mxu0 0
    %1991 = vmatpush2.bf16.msra.mxu0 0
    %1992 = vmatprep.subr.bf16.mxu0 0
    %1993 = vmatpush2.bf16.msra.mxu0 0
    %1994 = vmatprep.mubr.bf16.mxu0 0
    %1995 = vmatmul.mubr.bf16.gmra.mxu0 %v1960
    %v1996 = vpop.f32.mrf.mxu0
    %v1997 = vadd.f32 0.0, %v1996
    %v1998 = vpop.f32.mrf.mxu0
    %v1999 = vpop.f32.mrf.mxu0
    %v2000 = vpop.f32.mrf.mxu0
    %2001 = vdwg.mxu0
    %v2002 = vadd.f32 %v1786, %v1997
    %2003 = vrot.lane.b32.xlu0 %v410, 32
    %v2004 = vpop.permute.xlu0 %2003
    %2005 = vrot.lane.b32.xlu0 %v412, 32
    %v2006 = vpop.permute.xlu0 %2005
    %v2007 = vsel %vm476, %v2004, 0
    %v2009 = vsel %vm476, %v2006, 0
    %2011 = vmatprep.subr.mxu0 0.0
    %2012 = vmatpush1.xpose.msra.mxu0 0.0
    %2013 = vmatprep.subr.mxu0 0.0
    %2014 = vmatpush1.xpose.msra.mxu0 0.0
    %2015 = vmatprep.subr.mxu0 0.0
    %2016 = vmatpush1.xpose.msra.mxu0 0.0
    %2017 = vmatprep.subr.mxu0 0.0
    %2018 = vmatpush1.xpose.msra.mxu0 0.0
    %2019 = vmatprep.subr.mxu0 0.0
    %2020 = vmatpush1.xpose.msra.mxu0 0.0
    %2021 = vmatprep.subr.mxu0 0.0
    %2022 = vmatpush1.xpose.msra.mxu0 0.0
    %2023 = vmatprep.subr.mxu0 0.0
    %2024 = vmatpush1.xpose.msra.mxu0 0.0
    %2025 = vmatprep.subr.mxu0 0.0
    %2026 = vmatpush1.xpose.msra.mxu0 0.0
    %2027 = vmatprep.subr.mxu0 0.0
    %2028 = vmatpush1.xpose.msra.mxu0 0.0
    %2029 = vmatprep.subr.mxu0 0.0
    %2030 = vmatpush1.xpose.msra.mxu0 0.0
    %2031 = vmatprep.subr.mxu0 0.0
    %2032 = vmatpush1.xpose.msra.mxu0 0.0
    %2033 = vmatprep.subr.mxu0 0.0
    %2034 = vmatpush1.xpose.msra.mxu0 0.0
    %2035 = vmatprep.subr.mxu0 0.0
    %2036 = vmatpush1.xpose.msra.mxu0 0.0
    %2037 = vmatprep.subr.mxu0 0.0
    %2038 = vmatpush1.xpose.msra.mxu0 0.0
    %2039 = vmatprep.subr.mxu0 0.0
    %2040 = vmatpush1.xpose.msra.mxu0 0.0
    %2041 = vmatprep.subr.mxu0 0.0
    %2042 = vmatpush1.xpose.msra.mxu0 %v2009
    %2043 = vmatprep.subr.mxu0 0.0
    %2044 = vmatpush2.xpose.msra.mxu0 0.0
    %2045 = vmatprep.subr.mxu0 0.0
    %2046 = vmatpush2.xpose.msra.mxu0 0.0
    %2047 = vmatprep.subr.mxu0 0.0
    %2048 = vmatpush2.xpose.msra.mxu0 0.0
    %2049 = vmatprep.subr.mxu0 0.0
    %2050 = vmatpush2.xpose.msra.mxu0 0.0
    %2051 = vmatprep.subr.mxu0 0.0
    %2052 = vmatpush2.xpose.msra.mxu0 0.0
    %2053 = vmatprep.subr.mxu0 0.0
    %2054 = vmatpush2.xpose.msra.mxu0 0.0
    %2055 = vmatprep.subr.mxu0 0.0
    %2056 = vmatpush2.xpose.msra.mxu0 0.0
    %2057 = vmatprep.subr.mxu0 0.0
    %2058 = vmatpush2.xpose.msra.mxu0 0.0
    %2059 = vmatprep.subr.mxu0 0.0
    %2060 = vmatpush2.xpose.msra.mxu0 0.0
    %2061 = vmatprep.subr.mxu0 0.0
    %2062 = vmatpush2.xpose.msra.mxu0 0.0
    %2063 = vmatprep.subr.mxu0 0.0
    %2064 = vmatpush2.xpose.msra.mxu0 0.0
    %2065 = vmatprep.subr.mxu0 0.0
    %2066 = vmatpush2.xpose.msra.mxu0 0.0
    %2067 = vmatprep.subr.mxu0 0.0
    %2068 = vmatpush2.xpose.msra.mxu0 0.0
    %2069 = vmatprep.subr.mxu0 0.0
    %2070 = vmatpush2.xpose.msra.mxu0 0.0
    %2071 = vmatprep.subr.mxu0 0.0
    %2072 = vmatpush2.xpose.msra.mxu0 0.0
    %2073 = vmatprep.subr.mxu0 0.0
    %2074 = vmatpush2.xpose.msra.mxu0 0.0
    %2075 = vmatprep.mubr.f32.mxu0 0.0
    %2076 = vmatmul.mubr.f32.gmra.mxu0 %v2007
    %v2077 = vpop.f32.mrf.mxu0
    %v2078 = vadd.f32 0.0, %v2077
    %v2079 = vpop.f32.mrf.mxu0
    %2080 = vdwg.mxu0
    %v2081 = vmul.f32 %v2078, 0.17677669
    %v2082 = vadd.f32 %v2081, %v1372
    %v2083 = vsel %vm555, %v2082, -inf
    %2084 = vmax.xlane.f32.xlu0 %v2083
    %v2085 = vpop.xlane.xlu0 %2084
    %v2086 = vsub.f32 %v2082, %v2085
    %v2087 = vmul.f32 %v2086, 1.442695
    %v2088 = vpow.pop %v2087
    %v2089 = vsel %vm555, %v2088, 0.0
    %2090 = vadd.xlane.f32.xlu0 %v2089
    %v2091 = vpop.xlane.xlu0 %2090
    %v2092 = vrcp.pop %v2091
    %v2093 = vmul.f32 %v2088, %v2092
    %2094 = vrot.lane.b32.xlu0 %v452, 32
    %v2095 = vpop.permute.xlu0 %2094
    %v2098 = vsel %vm555, %v2093, 0
    %2100 = vmatprep.subr.mxu0 0.0
    %2101 = vmatpush1.msra.mxu0 0.0
    %2102 = vmatprep.subr.mxu0 0.0
    %2103 = vmatpush1.msra.mxu0 0.0
    %2104 = vmatprep.subr.mxu0 0.0
    %2105 = vmatpush1.msra.mxu0 0.0
    %2106 = vmatprep.subr.mxu0 0.0
    %2107 = vmatpush1.msra.mxu0 0.0
    %2108 = vmatprep.subr.mxu0 0.0
    %2109 = vmatpush1.msra.mxu0 0.0
    %2110 = vmatprep.subr.mxu0 0.0
    %2111 = vmatpush1.msra.mxu0 0.0
    %2112 = vmatprep.subr.mxu0 0.0
    %2113 = vmatpush1.msra.mxu0 0.0
    %2114 = vmatprep.subr.mxu0 0.0
    %2115 = vmatpush1.msra.mxu0 0.0
    %2116 = vmatprep.subr.mxu0 0.0
    %2117 = vmatpush1.msra.mxu0 0.0
    %2118 = vmatprep.subr.mxu0 0.0
    %2119 = vmatpush1.msra.mxu0 0.0
    %2120 = vmatprep.subr.mxu0 0.0
    %2121 = vmatpush1.msra.mxu0 0.0
    %2122 = vmatprep.subr.mxu0 0.0
    %2123 = vmatpush1.msra.mxu0 0.0
    %2124 = vmatprep.subr.mxu0 0.0
    %2125 = vmatpush1.msra.mxu0 0.0
    %2126 = vmatprep.subr.mxu0 0.0
    %2127 = vmatpush1.msra.mxu0 0.0
    %2128 = vmatprep.subr.mxu0 0.0
    %2129 = vmatpush1.msra.mxu0 0.0
    %2130 = vmatprep.subr.mxu0 0.0
    %2131 = vmatpush1.msra.mxu0 %v2095
    %2132 = vmatprep.subr.mxu0 0.0
    %2133 = vmatpush2.msra.mxu0 0.0
    %2134 = vmatprep.subr.mxu0 0.0
    %2135 = vmatpush2.msra.mxu0 0.0
    %2136 = vmatprep.subr.mxu0 0.0
    %2137 = vmatpush2.msra.mxu0 0.0
    %2138 = vmatprep.subr.mxu0 0.0
    %2139 = vmatpush2.msra.mxu0 0.0
    %2140 = vmatprep.subr.mxu0 0.0
    %2141 = vmatpush2.msra.mxu0 0.0
    %2142 = vmatprep.subr.mxu0 0.0
    %2143 = vmatpush2.msra.mxu0 0.0
    %2144 = vmatprep.subr.mxu0 0.0
    %2145 = vmatpush2.msra.mxu0 0.0
    %2146 = vmatprep.subr.mxu0 0.0
    %2147 = vmatpush2.msra.mxu0 0.0
    %2148 = vmatprep.subr.mxu0 0.0
    %2149 = vmatpush2.msra.mxu0 0.0
    %2150 = vmatprep.subr.mxu0 0.0
    %2151 = vmatpush2.msra.mxu0 0.0
    %2152 = vmatprep.subr.mxu0 0.0
    %2153 = vmatpush2.msra.mxu0 0.0
    %2154 = vmatprep.subr.mxu0 0.0
    %2155 = vmatpush2.msra.mxu0 0.0
    %2156 = vmatprep.subr.mxu0 0.0
    %2157 = vmatpush2.msra.mxu0 0.0
    %2158 = vmatprep.subr.mxu0 0.0
    %2159 = vmatpush2.msra.mxu0 0.0
    %2160 = vmatprep.subr.mxu0 0.0
    %2161 = vmatpush2.msra.mxu0 0.0
    %2162 = vmatprep.subr.mxu0 0.0
    %2163 = vmatpush2.msra.mxu0 0.0
    %2164 = vmatprep.mubr.f32.mxu0 0.0
    %2165 = vmatmul.mubr.f32.gmra.mxu0 %v2098
    %v2166 = vpop.f32.mrf.mxu0
    %v2167 = vadd.f32 0.0, %v2166
    %v2168 = vpop.f32.mrf.mxu0
    %2169 = vdwg.mxu0
    %v2170 = vpack.c.bf16 %v2167, %v2167
    %v2172 = vsel %vm476, %v2170, 0
    %2174 = vmatprep.subr.bf16.mxu0 0
    %2175 = vmatpush1.bf16.msra.mxu0 0
    %2176 = vmatprep.subr.bf16.mxu0 0
    %2177 = vmatpush1.bf16.msra.mxu0 0
    %2178 = vmatprep.subr.bf16.mxu0 0
    %2179 = vmatpush1.bf16.msra.mxu0 0
    %2180 = vmatprep.subr.bf16.mxu0 0
    %2181 = vmatpush1.bf16.msra.mxu0 0
    %2182 = vmatprep.subr.bf16.mxu0 0
    %2183 = vmatpush1.bf16.msra.mxu0 0
    %2184 = vmatprep.subr.bf16.mxu0 0
    %2185 = vmatpush1.bf16.msra.mxu0 0
    %2186 = vmatprep.subr.bf16.mxu0 0
    %2187 = vmatpush1.bf16.msra.mxu0 %v1321
    %2188 = vmatprep.subr.bf16.mxu0 0
    %2189 = vmatpush1.bf16.msra.mxu0 %v1320
    %2190 = vmatprep.subr.bf16.mxu0 0
    %2191 = vmatpush2.bf16.msra.mxu0 0
    %2192 = vmatprep.subr.bf16.mxu0 0
    %2193 = vmatpush2.bf16.msra.mxu0 0
    %2194 = vmatprep.subr.bf16.mxu0 0
    %2195 = vmatpush2.bf16.msra.mxu0 0
    %2196 = vmatprep.subr.bf16.mxu0 0
    %2197 = vmatpush2.bf16.msra.mxu0 0
    %2198 = vmatprep.subr.bf16.mxu0 0
    %2199 = vmatpush2.bf16.msra.mxu0 0
    %2200 = vmatprep.subr.bf16.mxu0 0
    %2201 = vmatpush2.bf16.msra.mxu0 0
    %2202 = vmatprep.subr.bf16.mxu0 0
    %2203 = vmatpush2.bf16.msra.mxu0 0
    %2204 = vmatprep.subr.bf16.mxu0 0
    %2205 = vmatpush2.bf16.msra.mxu0 0
    %2206 = vmatprep.mubr.bf16.mxu0 0
    %2207 = vmatmul.mubr.bf16.gmra.mxu0 %v2172
    %v2208 = vpop.f32.mrf.mxu0
    %v2209 = vadd.f32 0.0, %v2208
    %v2210 = vpop.f32.mrf.mxu0
    %v2211 = vpop.f32.mrf.mxu0
    %v2212 = vpop.f32.mrf.mxu0
    %2213 = vdwg.mxu0
    %v2214 = vadd.f32 %v2002, %v2209
    %v2215 = vld [vmem:[%s7] sm:$0x1]
    %v2217 = vlaneseq
    %v2218 = vshrl.u32 %v2217, 7
    %v2219 = vsub.s32 0, %v2218
    %v2220 = vrot.slane %v2215, %v2219
    %v2222 = vadd.f32 %v1367, %v2220
    %v2223 = vadd.f32 %v2214, %v2220
    %v2224 = vadd.f32 %v191, %v2222
    %v2225 = vadd.f32 %v192, %v2223
    %v2226 = vld [vmem:[%s8] sm:$0x1]
    %v2227 = vld [vmem:[%s9] sm:$0x1]
    %2228 = vadd.xlane.f32.xlu0 %v2224
    %v2229 = vpop.xlane.xlu0 %2228
    %2230 = vadd.xlane.f32.xlu0 %v2225
    %v2231 = vpop.xlane.xlu0 %2230
    %v2232 = vmul.f32 %v2229, %v158
    %v2233 = vmul.f32 %v2231, %v158
    %v2234 = vsub.f32 %v2224, %v2232
    %v2235 = vsub.f32 %v2225, %v2233
    %v2236 = vmul.f32 %v2234, %v2234
    %v2237 = vmul.f32 %v2235, %v2235
    %2238 = vadd.xlane.f32.xlu0 %v2236
    %v2239 = vpop.xlane.xlu0 %2238
    %2240 = vadd.xlane.f32.xlu0 %v2237
    %v2241 = vpop.xlane.xlu0 %2240
    %v2242 = vmul.f32 %v2239, %v158
    %v2243 = vmul.f32 %v2241, %v158
    %v2244 = vadd.f32 %v2242, 1e-12
    %v2245 = vadd.f32 %v2243, 1e-12
    %v2246 = vrsqrt.pop %v2244
    %v2247 = vrsqrt.pop %v2245
    %v2248 = vmul.f32 %v2234, %v2246
    %v2249 = vmul.f32 %v2235, %v2247
    %v2251 = vlaneseq
    %v2252 = vshrl.u32 %v2251, 7
    %v2253 = vsub.s32 0, %v2252
    %v2254 = vrot.slane %v2226, %v2253
    %v2256 = vmul.f32 %v2248, %v2254
    %v2257 = vmul.f32 %v2249, %v2254
    %v2259 = vlaneseq
    %v2260 = vshrl.u32 %v2259, 7
    %v2261 = vsub.s32 0, %v2260
    %v2262 = vrot.slane %v2227, %v2261
    %v2264 = vadd.f32 %v2256, %v2262
    %v2265 = vadd.f32 %v2257, %v2262
    %v2266 = vpack.c.bf16 %v2265, %v2264
    %v2267 = vld [vmem:[#allocation13] sm:$0xff]
    %v2268 = vld [vmem:[#allocation13 + $0x8] sm:$0xff]
    %v2269 = vld [vmem:[#allocation13 + $0x10] sm:$0xff]
    %v2270 = vld [vmem:[#allocation13 + $0x18] sm:$0xff]
    %v2271 = vld [vmem:[#allocation13 + $0x20] sm:$0xff]
    %v2272 = vld [vmem:[#allocation13 + $0x28] sm:$0xff]
    %v2273 = vld [vmem:[#allocation13 + $0x30] sm:$0xff]
    %v2274 = vld [vmem:[#allocation13 + $0x38] sm:$0xff]
    %v2275 = vld [vmem:[#allocation13 + $0x40] sm:$0xff]
    %v2276 = vld [vmem:[#allocation13 + $0x48] sm:$0xff]
    %v2277 = vld [vmem:[#allocation13 + $0x50] sm:$0xff]
    %v2278 = vld [vmem:[#allocation13 + $0x58] sm:$0xff]
    %v2279 = vld [vmem:[#allocation13 + $0x60] sm:$0xff]
    %v2280 = vld [vmem:[#allocation13 + $0x68] sm:$0xff]
    %v2281 = vld [vmem:[#allocation13 + $0x70] sm:$0xff]
    %v2282 = vld [vmem:[#allocation13 + $0x78] sm:$0xff]
    %v2283 = vld [vmem:[#allocation13 + $0x80] sm:$0xff]
    %v2284 = vld [vmem:[#allocation13 + $0x88] sm:$0xff]
    %v2285 = vld [vmem:[#allocation13 + $0x90] sm:$0xff]
    %v2286 = vld [vmem:[#allocation13 + $0x98] sm:$0xff]
    %v2287 = vld [vmem:[#allocation13 + $0xa0] sm:$0xff]
    %v2288 = vld [vmem:[#allocation13 + $0xa8] sm:$0xff]
    %v2289 = vld [vmem:[#allocation13 + $0xb0] sm:$0xff]
    %v2290 = vld [vmem:[#allocation13 + $0xb8] sm:$0xff]
    %v2291 = vld [vmem:[#allocation13 + $0xc0] sm:$0xff]
    %v2292 = vld [vmem:[#allocation13 + $0xc8] sm:$0xff]
    %v2293 = vld [vmem:[#allocation13 + $0xd0] sm:$0xff]
    %v2294 = vld [vmem:[#allocation13 + $0xd8] sm:$0xff]
    %v2295 = vld [vmem:[#allocation13 + $0xe0] sm:$0xff]
    %v2296 = vld [vmem:[#allocation13 + $0xe8] sm:$0xff]
    %v2297 = vld [vmem:[#allocation13 + $0xf0] sm:$0xff]
    %v2298 = vld [vmem:[#allocation13 + $0xf8] sm:$0xff]
    %v2299 = vld [vmem:[%s11] sm:$0xf]
    %v2301 = vlaneseq
    %v2302 = vshrl.u32 %v2301, 7
    %v2303 = vsub.s32 0, %v2302
    %v2304 = vrot.slane %v2299, %v2303
    %v2305 = vlaneseq
    %v2306 = vshrl.u32 %v2305, 7
    %v2307 = vsub.s32 1, %v2306
    %v2308 = vrot.slane %v2299, %v2307
    %v2309 = vlaneseq
    %v2310 = vshrl.u32 %v2309, 7
    %v2311 = vsub.s32 2, %v2310
    %v2312 = vrot.slane %v2299, %v2311
    %v2313 = vlaneseq
    %v2314 = vshrl.u32 %v2313, 7
    %v2315 = vsub.s32 3, %v2314
    %v2316 = vrot.slane %v2299, %v2315
    %v2353 = vunpack.c.l.b16 %v2267
    %v2354 = vunpack.c.h.b16 %v2267
    %v2355 = vunpack.c.l.b16 %v2268
    %v2356 = vunpack.c.h.b16 %v2268
    %v2357 = vunpack.c.l.b16 %v2269
    %v2358 = vunpack.c.h.b16 %v2269
    %v2359 = vunpack.c.l.b16 %v2270
    %v2360 = vunpack.c.h.b16 %v2270
    %v2361 = vunpack.c.l.b16 %v2271
    %v2362 = vunpack.c.h.b16 %v2271
    %v2363 = vunpack.c.l.b16 %v2272
    %v2364 = vunpack.c.h.b16 %v2272
    %v2365 = vunpack.c.l.b16 %v2273
    %v2366 = vunpack.c.h.b16 %v2273
    %v2367 = vunpack.c.l.b16 %v2274
    %v2368 = vunpack.c.h.b16 %v2274
    %v2369 = vunpack.c.l.b16 %v2275
    %v2370 = vunpack.c.h.b16 %v2275
    %v2371 = vunpack.c.l.b16 %v2276
    %v2372 = vunpack.c.h.b16 %v2276
    %v2373 = vunpack.c.l.b16 %v2277
    %v2374 = vunpack.c.h.b16 %v2277
    %v2375 = vunpack.c.l.b16 %v2278
    %v2376 = vunpack.c.h.b16 %v2278
    %v2377 = vunpack.c.l.b16 %v2279
    %v2378 = vunpack.c.h.b16 %v2279
    %v2379 = vunpack.c.l.b16 %v2280
    %v2380 = vunpack.c.h.b16 %v2280
    %v2381 = vunpack.c.l.b16 %v2281
    %v2382 = vunpack.c.h.b16 %v2281
    %v2383 = vunpack.c.l.b16 %v2282
    %v2384 = vunpack.c.h.b16 %v2282
    %v2385 = vunpack.c.l.b16 %v2283
    %v2386 = vunpack.c.h.b16 %v2283
    %v2387 = vunpack.c.l.b16 %v2284
    %v2388 = vunpack.c.h.b16 %v2284
    %v2389 = vunpack.c.l.b16 %v2285
    %v2390 = vunpack.c.h.b16 %v2285
    %v2391 = vunpack.c.l.b16 %v2286
    %v2392 = vunpack.c.h.b16 %v2286
    %v2393 = vunpack.c.l.b16 %v2287
    %v2394 = vunpack.c.h.b16 %v2287
    %v2395 = vunpack.c.l.b16 %v2288
    %v2396 = vunpack.c.h.b16 %v2288
    %v2397 = vunpack.c.l.b16 %v2289
    %v2398 = vunpack.c.h.b16 %v2289
    %v2399 = vunpack.c.l.b16 %v2290
    %v2400 = vunpack.c.h.b16 %v2290
    %v2401 = vunpack.c.l.b16 %v2291
    %v2402 = vunpack.c.h.b16 %v2291
    %v2403 = vunpack.c.l.b16 %v2292
    %v2404 = vunpack.c.h.b16 %v2292
    %v2405 = vunpack.c.l.b16 %v2293
    %v2406 = vunpack.c.h.b16 %v2293
    %v2407 = vunpack.c.l.b16 %v2294
    %v2408 = vunpack.c.h.b16 %v2294
    %v2409 = vunpack.c.l.b16 %v2295
    %v2410 = vunpack.c.h.b16 %v2295
    %v2411 = vunpack.c.l.b16 %v2296
    %v2412 = vunpack.c.h.b16 %v2296
    %v2413 = vunpack.c.l.b16 %v2297
    %v2414 = vunpack.c.h.b16 %v2297
    %v2415 = vunpack.c.l.b16 %v2298
    %v2416 = vunpack.c.h.b16 %v2298
    %v2417 = vpack.c.b16 %v2357, %v2353
    %v2418 = vpack.c.b16 %v2358, %v2354
    %v2419 = vpack.c.b16 %v2359, %v2355
    %v2420 = vpack.c.b16 %v2360, %v2356
    %v2421 = vpack.c.b16 %v2365, %v2361
    %v2422 = vpack.c.b16 %v2366, %v2362
    %v2423 = vpack.c.b16 %v2367, %v2363
    %v2424 = vpack.c.b16 %v2368, %v2364
    %v2425 = vpack.c.b16 %v2373, %v2369
    %v2426 = vpack.c.b16 %v2374, %v2370
    %v2427 = vpack.c.b16 %v2375, %v2371
    %v2428 = vpack.c.b16 %v2376, %v2372
    %v2429 = vpack.c.b16 %v2381, %v2377
    %v2430 = vpack.c.b16 %v2382, %v2378
    %v2431 = vpack.c.b16 %v2383, %v2379
    %v2432 = vpack.c.b16 %v2384, %v2380
    %v2433 = vpack.c.b16 %v2389, %v2385
    %v2434 = vpack.c.b16 %v2390, %v2386
    %v2435 = vpack.c.b16 %v2391, %v2387
    %v2436 = vpack.c.b16 %v2392, %v2388
    %v2437 = vpack.c.b16 %v2397, %v2393
    %v2438 = vpack.c.b16 %v2398, %v2394
    %v2439 = vpack.c.b16 %v2399, %v2395
    %v2440 = vpack.c.b16 %v2400, %v2396
    %v2441 = vpack.c.b16 %v2405, %v2401
    %v2442 = vpack.c.b16 %v2406, %v2402
    %v2443 = vpack.c.b16 %v2407, %v2403
    %v2444 = vpack.c.b16 %v2408, %v2404
    %v2445 = vpack.c.b16 %v2413, %v2409
    %v2446 = vpack.c.b16 %v2414, %v2410
    %v2447 = vpack.c.b16 %v2415, %v2411
    %v2448 = vpack.c.b16 %v2416, %v2412
    %2481 = vmatprep.subr.bf16.mxu0 %v2446
    %2482 = vmatpush1.bf16.msra.mxu0 %v2445
    %2483 = vmatprep.subr.bf16.mxu0 %v2442
    %2484 = vmatpush1.bf16.msra.mxu0 %v2441
    %2485 = vmatprep.subr.bf16.mxu0 %v2438
    %2486 = vmatpush1.bf16.msra.mxu0 %v2437
    %2487 = vmatprep.subr.bf16.mxu0 %v2434
    %2488 = vmatpush1.bf16.msra.mxu0 %v2433
    %2489 = vmatprep.subr.bf16.mxu0 %v2430
    %2490 = vmatpush1.bf16.msra.mxu0 %v2429
    %2491 = vmatprep.subr.bf16.mxu0 %v2426
    %2492 = vmatpush1.bf16.msra.mxu0 %v2425
    %2493 = vmatprep.subr.bf16.mxu0 %v2422
    %2494 = vmatpush1.bf16.msra.mxu0 %v2421
    %2495 = vmatprep.subr.bf16.mxu0 %v2418
    %2496 = vmatpush1.bf16.msra.mxu0 %v2417
    %2497 = vmatprep.subr.bf16.mxu0 0
    %2498 = vmatpush2.bf16.msra.mxu0 0
    %2499 = vmatprep.subr.bf16.mxu0 0
    %2500 = vmatpush2.bf16.msra.mxu0 0
    %2501 = vmatprep.subr.bf16.mxu0 0
    %2502 = vmatpush2.bf16.msra.mxu0 0
    %2503 = vmatprep.subr.bf16.mxu0 0
    %2504 = vmatpush2.bf16.msra.mxu0 0
    %2505 = vmatprep.subr.bf16.mxu0 0
    %2506 = vmatpush2.bf16.msra.mxu0 0
    %2507 = vmatprep.subr.bf16.mxu0 0
    %2508 = vmatpush2.bf16.msra.mxu0 0
    %2509 = vmatprep.subr.bf16.mxu0 0
    %2510 = vmatpush2.bf16.msra.mxu0 0
    %2511 = vmatprep.subr.bf16.mxu0 0
    %2512 = vmatpush2.bf16.msra.mxu0 0
    %2513 = vmatprep.mubr.bf16.mxu0 0
    %2514 = vmatmul.mubr.bf16.gmra.mxu0 %v2266
    %v2515 = vpop.f32.mrf.mxu0
    %v2516 = vadd.f32 %v2304, %v2515
    %v2517 = vpop.f32.mrf.mxu0
    %v2518 = vadd.f32 %v2308, %v2517
    %v2519 = vpop.f32.mrf.mxu0
    %v2520 = vadd.f32 %v2304, %v2519
    %v2521 = vpop.f32.mrf.mxu0
    %v2522 = vadd.f32 %v2308, %v2521
    %2523 = vdwg.mxu0
    %2524 = vmatprep.subr.bf16.mxu0 %v2448
    %2525 = vmatpush1.bf16.msra.mxu0 %v2447
    %2526 = vmatprep.subr.bf16.mxu0 %v2444
    %2527 = vmatpush1.bf16.msra.mxu0 %v2443
    %2528 = vmatprep.subr.bf16.mxu0 %v2440
    %2529 = vmatpush1.bf16.msra.mxu0 %v2439
    %2530 = vmatprep.subr.bf16.mxu0 %v2436
    %2531 = vmatpush1.bf16.msra.mxu0 %v2435
    %2532 = vmatprep.subr.bf16.mxu0 %v2432
    %2533 = vmatpush1.bf16.msra.mxu0 %v2431
    %2534 = vmatprep.subr.bf16.mxu0 %v2428
    %2535 = vmatpush1.bf16.msra.mxu0 %v2427
    %2536 = vmatprep.subr.bf16.mxu0 %v2424
    %2537 = vmatpush1.bf16.msra.mxu0 %v2423
    %2538 = vmatprep.subr.bf16.mxu0 %v2420
    %2539 = vmatpush1.bf16.msra.mxu0 %v2419
    %2540 = vmatprep.subr.bf16.mxu0 0
    %2541 = vmatpush2.bf16.msra.mxu0 0
    %2542 = vmatprep.subr.bf16.mxu0 0
    %2543 = vmatpush2.bf16.msra.mxu0 0
    %2544 = vmatprep.subr.bf16.mxu0 0
    %2545 = vmatpush2.bf16.msra.mxu0 0
    %2546 = vmatprep.subr.bf16.mxu0 0
    %2547 = vmatpush2.bf16.msra.mxu0 0
    %2548 = vmatprep.subr.bf16.mxu0 0
    %2549 = vmatpush2.bf16.msra.mxu0 0
    %2550 = vmatprep.subr.bf16.mxu0 0
    %2551 = vmatpush2.bf16.msra.mxu0 0
    %2552 = vmatprep.subr.bf16.mxu0 0
    %2553 = vmatpush2.bf16.msra.mxu0 0
    %2554 = vmatprep.subr.bf16.mxu0 0
    %2555 = vmatpush2.bf16.msra.mxu0 0
    %2556 = vmatprep.mubr.bf16.mxu0 0
    %2557 = vmatmul.mubr.bf16.gmra.mxu0 %v2266
    %v2558 = vpop.f32.mrf.mxu0
    %v2559 = vadd.f32 %v2312, %v2558
    %v2560 = vpop.f32.mrf.mxu0
    %v2561 = vadd.f32 %v2316, %v2560
    %v2562 = vpop.f32.mrf.mxu0
    %v2563 = vadd.f32 %v2312, %v2562
    %v2564 = vpop.f32.mrf.mxu0
    %v2565 = vadd.f32 %v2316, %v2564
    %2566 = vdwg.mxu0
    %v2567 = vmul.f32 %v2516, %v2516
    %v2568 = vmul.f32 %v2518, %v2518
    %v2569 = vmul.f32 %v2559, %v2559
    %v2570 = vmul.f32 %v2561, %v2561
    %v2571 = vmul.f32 %v2520, %v2520
    %v2572 = vmul.f32 %v2522, %v2522
    %v2573 = vmul.f32 %v2563, %v2563
    %v2574 = vmul.f32 %v2565, %v2565
    %v2575 = vmul.f32 %v2516, %v2567
    %v2576 = vmul.f32 %v2518, %v2568
    %v2577 = vmul.f32 %v2559, %v2569
    %v2578 = vmul.f32 %v2561, %v2570
    %v2579 = vmul.f32 %v2520, %v2571
    %v2580 = vmul.f32 %v2522, %v2572
    %v2581 = vmul.f32 %v2563, %v2573
    %v2582 = vmul.f32 %v2565, %v2574
    %v2583 = vmul.f32 %v2575, 0.044715
    %v2584 = vmul.f32 %v2576, 0.044715
    %v2585 = vmul.f32 %v2577, 0.044715
    %v2586 = vmul.f32 %v2578, 0.044715
    %v2587 = vmul.f32 %v2579, 0.044715
    %v2588 = vmul.f32 %v2580, 0.044715
    %v2589 = vmul.f32 %v2581, 0.044715
    %v2590 = vmul.f32 %v2582, 0.044715
    %v2591 = vadd.f32 %v2516, %v2583
    %v2592 = vadd.f32 %v2518, %v2584
    %v2593 = vadd.f32 %v2559, %v2585
    %v2594 = vadd.f32 %v2561, %v2586
    %v2595 = vadd.f32 %v2520, %v2587
    %v2596 = vadd.f32 %v2522, %v2588
    %v2597 = vadd.f32 %v2563, %v2589
    %v2598 = vadd.f32 %v2565, %v2590
    %v2599 = vmul.f32 %v2591, 0.7978846
    %v2600 = vmul.f32 %v2592, 0.7978846
    %v2601 = vmul.f32 %v2593, 0.7978846
    %v2602 = vmul.f32 %v2594, 0.7978846
    %v2603 = vmul.f32 %v2595, 0.7978846
    %v2604 = vmul.f32 %v2596, 0.7978846
    %v2605 = vmul.f32 %v2597, 0.7978846
    %v2606 = vmul.f32 %v2598, 0.7978846
    %v2607 = vtanh.pop %v2599
    %v2608 = vtanh.pop %v2600
    %v2609 = vtanh.pop %v2601
    %v2610 = vtanh.pop %v2602
    %v2611 = vtanh.pop %v2603
    %v2612 = vtanh.pop %v2604
    %v2613 = vtanh.pop %v2605
    %v2614 = vtanh.pop %v2606
    %v2615 = vadd.f32 %v2607, 1.0
    %v2616 = vadd.f32 %v2608, 1.0
    %v2617 = vadd.f32 %v2609, 1.0
    %v2618 = vadd.f32 %v2610, 1.0
    %v2619 = vadd.f32 %v2611, 1.0
    %v2620 = vadd.f32 %v2612, 1.0
    %v2621 = vadd.f32 %v2613, 1.0
    %v2622 = vadd.f32 %v2614, 1.0
    %v2623 = vmul.f32 %v2615, 0.5
    %v2624 = vmul.f32 %v2616, 0.5
    %v2625 = vmul.f32 %v2617, 0.5
    %v2626 = vmul.f32 %v2618, 0.5
    %v2627 = vmul.f32 %v2619, 0.5
    %v2628 = vmul.f32 %v2620, 0.5
    %v2629 = vmul.f32 %v2621, 0.5
    %v2630 = vmul.f32 %v2622, 0.5
    %v2631 = vmul.f32 %v2516, %v2623
    %v2632 = vmul.f32 %v2518, %v2624
    %v2633 = vmul.f32 %v2559, %v2625
    %v2634 = vmul.f32 %v2561, %v2626
    %v2635 = vmul.f32 %v2520, %v2627
    %v2636 = vmul.f32 %v2522, %v2628
    %v2637 = vmul.f32 %v2563, %v2629
    %v2638 = vmul.f32 %v2565, %v2630
    %v2639 = vpack.c.bf16 %v2635, %v2631
    %v2640 = vpack.c.bf16 %v2636, %v2632
    %v2641 = vpack.c.bf16 %v2637, %v2633
    %v2642 = vpack.c.bf16 %v2638, %v2634
    %v2643 = vld [vmem:[#allocation15] sm:$0xf]
    %v2644 = vld [vmem:[#allocation15 + $0x4] sm:$0xf]
    %v2645 = vld [vmem:[#allocation15 + $0x8] sm:$0xf]
    %v2646 = vld [vmem:[#allocation15 + $0xc] sm:$0xf]
    %v2647 = vld [vmem:[#allocation15 + $0x10] sm:$0xf]
    %v2648 = vld [vmem:[#allocation15 + $0x14] sm:$0xf]
    %v2649 = vld [vmem:[#allocation15 + $0x18] sm:$0xf]
    %v2650 = vld [vmem:[#allocation15 + $0x1c] sm:$0xf]
    %v2651 = vld [vmem:[#allocation15 + $0x20] sm:$0xf]
    %v2652 = vld [vmem:[#allocation15 + $0x24] sm:$0xf]
    %v2653 = vld [vmem:[#allocation15 + $0x28] sm:$0xf]
    %v2654 = vld [vmem:[#allocation15 + $0x2c] sm:$0xf]
    %v2655 = vld [vmem:[#allocation15 + $0x30] sm:$0xf]
    %v2656 = vld [vmem:[#allocation15 + $0x34] sm:$0xf]
    %v2657 = vld [vmem:[#allocation15 + $0x38] sm:$0xf]
    %v2658 = vld [vmem:[#allocation15 + $0x3c] sm:$0xf]
    %v2659 = vld [vmem:[#allocation15 + $0x40] sm:$0xf]
    %v2660 = vld [vmem:[#allocation15 + $0x44] sm:$0xf]
    %v2661 = vld [vmem:[#allocation15 + $0x48] sm:$0xf]
    %v2662 = vld [vmem:[#allocation15 + $0x4c] sm:$0xf]
    %v2663 = vld [vmem:[#allocation15 + $0x50] sm:$0xf]
    %v2664 = vld [vmem:[#allocation15 + $0x54] sm:$0xf]
    %v2665 = vld [vmem:[#allocation15 + $0x58] sm:$0xf]
    %v2666 = vld [vmem:[#allocation15 + $0x5c] sm:$0xf]
    %v2667 = vld [vmem:[#allocation15 + $0x60] sm:$0xf]
    %v2668 = vld [vmem:[#allocation15 + $0x64] sm:$0xf]
    %v2669 = vld [vmem:[#allocation15 + $0x68] sm:$0xf]
    %v2670 = vld [vmem:[#allocation15 + $0x6c] sm:$0xf]
    %v2671 = vld [vmem:[#allocation15 + $0x70] sm:$0xf]
    %v2672 = vld [vmem:[#allocation15 + $0x74] sm:$0xf]
    %v2673 = vld [vmem:[#allocation15 + $0x78] sm:$0xf]
    %v2674 = vld [vmem:[#allocation15 + $0x7c] sm:$0xf]
    %v2675 = vld [vmem:[#allocation15 + $0x80] sm:$0xf]
    %v2676 = vld [vmem:[#allocation15 + $0x84] sm:$0xf]
    %v2677 = vld [vmem:[#allocation15 + $0x88] sm:$0xf]
    %v2678 = vld [vmem:[#allocation15 + $0x8c] sm:$0xf]
    %v2679 = vld [vmem:[#allocation15 + $0x90] sm:$0xf]
    %v2680 = vld [vmem:[#allocation15 + $0x94] sm:$0xf]
    %v2681 = vld [vmem:[#allocation15 + $0x98] sm:$0xf]
    %v2682 = vld [vmem:[#allocation15 + $0x9c] sm:$0xf]
    %v2683 = vld [vmem:[#allocation15 + $0xa0] sm:$0xf]
    %v2684 = vld [vmem:[#allocation15 + $0xa4] sm:$0xf]
    %v2685 = vld [vmem:[#allocation15 + $0xa8] sm:$0xf]
    %v2686 = vld [vmem:[#allocation15 + $0xac] sm:$0xf]
    %v2687 = vld [vmem:[#allocation15 + $0xb0] sm:$0xf]
    %v2688 = vld [vmem:[#allocation15 + $0xb4] sm:$0xf]
    %v2689 = vld [vmem:[#allocation15 + $0xb8] sm:$0xf]
    %v2690 = vld [vmem:[#allocation15 + $0xbc] sm:$0xf]
    %v2691 = vld [vmem:[#allocation15 + $0xc0] sm:$0xf]
    %v2692 = vld [vmem:[#allocation15 + $0xc4] sm:$0xf]
    %v2693 = vld [vmem:[#allocation15 + $0xc8] sm:$0xf]
    %v2694 = vld [vmem:[#allocation15 + $0xcc] sm:$0xf]
    %v2695 = vld [vmem:[#allocation15 + $0xd0] sm:$0xf]
    %v2696 = vld [vmem:[#allocation15 + $0xd4] sm:$0xf]
    %v2697 = vld [vmem:[#allocation15 + $0xd8] sm:$0xf]
    %v2698 = vld [vmem:[#allocation15 + $0xdc] sm:$0xf]
    %v2699 = vld [vmem:[#allocation15 + $0xe0] sm:$0xf]
    %v2700 = vld [vmem:[#allocation15 + $0xe4] sm:$0xf]
    %v2701 = vld [vmem:[#allocation15 + $0xe8] sm:$0xf]
    %v2702 = vld [vmem:[#allocation15 + $0xec] sm:$0xf]
    %v2703 = vld [vmem:[#allocation15 + $0xf0] sm:$0xf]
    %v2704 = vld [vmem:[#allocation15 + $0xf4] sm:$0xf]
    %v2705 = vld [vmem:[#allocation15 + $0xf8] sm:$0xf]
    %v2706 = vld [vmem:[#allocation15 + $0xfc] sm:$0xf]
    %v2707 = vld [vmem:[%s13] sm:$0x1]
    %v2709 = vlaneseq
    %v2710 = vshrl.u32 %v2709, 7
    %v2711 = vsub.s32 0, %v2710
    %v2712 = vrot.slane %v2707, %v2711
    %v2778 = vunpack.c.l.b16 %v2643
    %v2779 = vunpack.c.l.b16 %v2644
    %v2780 = vunpack.c.l.b16 %v2645
    %v2781 = vunpack.c.l.b16 %v2646
    %v2782 = vunpack.c.l.b16 %v2647
    %v2783 = vunpack.c.l.b16 %v2648
    %v2784 = vunpack.c.l.b16 %v2649
    %v2785 = vunpack.c.l.b16 %v2650
    %v2786 = vunpack.c.l.b16 %v2651
    %v2787 = vunpack.c.l.b16 %v2652
    %v2788 = vunpack.c.l.b16 %v2653
    %v2789 = vunpack.c.l.b16 %v2654
    %v2790 = vunpack.c.l.b16 %v2655
    %v2791 = vunpack.c.l.b16 %v2656
    %v2792 = vunpack.c.l.b16 %v2657
    %v2793 = vunpack.c.l.b16 %v2658
    %v2794 = vunpack.c.l.b16 %v2659
    %v2795 = vunpack.c.l.b16 %v2660
    %v2796 = vunpack.c.l.b16 %v2661
    %v2797 = vunpack.c.l.b16 %v2662
    %v2798 = vunpack.c.l.b16 %v2663
    %v2799 = vunpack.c.l.b16 %v2664
    %v2800 = vunpack.c.l.b16 %v2665
    %v2801 = vunpack.c.l.b16 %v2666
    %v2802 = vunpack.c.l.b16 %v2667
    %v2803 = vunpack.c.l.b16 %v2668
    %v2804 = vunpack.c.l.b16 %v2669
    %v2805 = vunpack.c.l.b16 %v2670
    %v2806 = vunpack.c.l.b16 %v2671
    %v2807 = vunpack.c.l.b16 %v2672
    %v2808 = vunpack.c.l.b16 %v2673
    %v2809 = vunpack.c.l.b16 %v2674
    %v2810 = vunpack.c.l.b16 %v2675
    %v2811 = vunpack.c.l.b16 %v2676
    %v2812 = vunpack.c.l.b16 %v2677
    %v2813 = vunpack.c.l.b16 %v2678
    %v2814 = vunpack.c.l.b16 %v2679
    %v2815 = vunpack.c.l.b16 %v2680
    %v2816 = vunpack.c.l.b16 %v2681
    %v2817 = vunpack.c.l.b16 %v2682
    %v2818 = vunpack.c.l.b16 %v2683
    %v2819 = vunpack.c.l.b16 %v2684
    %v2820 = vunpack.c.l.b16 %v2685
    %v2821 = vunpack.c.l.b16 %v2686
    %v2822 = vunpack.c.l.b16 %v2687
    %v2823 = vunpack.c.l.b16 %v2688
    %v2824 = vunpack.c.l.b16 %v2689
    %v2825 = vunpack.c.l.b16 %v2690
    %v2826 = vunpack.c.l.b16 %v2691
    %v2827 = vunpack.c.l.b16 %v2692
    %v2828 = vunpack.c.l.b16 %v2693
    %v2829 = vunpack.c.l.b16 %v2694
    %v2830 = vunpack.c.l.b16 %v2695
    %v2831 = vunpack.c.l.b16 %v2696
    %v2832 = vunpack.c.l.b16 %v2697
    %v2833 = vunpack.c.l.b16 %v2698
    %v2834 = vunpack.c.l.b16 %v2699
    %v2835 = vunpack.c.l.b16 %v2700
    %v2836 = vunpack.c.l.b16 %v2701
    %v2837 = vunpack.c.l.b16 %v2702
    %v2838 = vunpack.c.l.b16 %v2703
    %v2839 = vunpack.c.l.b16 %v2704
    %v2840 = vunpack.c.l.b16 %v2705
    %v2841 = vunpack.c.l.b16 %v2706
    %v2842 = vpack.c.b16 %v2779, %v2778
    %v2843 = vpack.c.b16 %v2781, %v2780
    %v2844 = vpack.c.b16 %v2783, %v2782
    %v2845 = vpack.c.b16 %v2785, %v2784
    %v2846 = vpack.c.b16 %v2787, %v2786
    %v2847 = vpack.c.b16 %v2789, %v2788
    %v2848 = vpack.c.b16 %v2791, %v2790
    %v2849 = vpack.c.b16 %v2793, %v2792
    %v2850 = vpack.c.b16 %v2795, %v2794
    %v2851 = vpack.c.b16 %v2797, %v2796
    %v2852 = vpack.c.b16 %v2799, %v2798
    %v2853 = vpack.c.b16 %v2801, %v2800
    %v2854 = vpack.c.b16 %v2803, %v2802
    %v2855 = vpack.c.b16 %v2805, %v2804
    %v2856 = vpack.c.b16 %v2807, %v2806
    %v2857 = vpack.c.b16 %v2809, %v2808
    %v2858 = vpack.c.b16 %v2811, %v2810
    %v2859 = vpack.c.b16 %v2813, %v2812
    %v2860 = vpack.c.b16 %v2815, %v2814
    %v2861 = vpack.c.b16 %v2817, %v2816
    %v2862 = vpack.c.b16 %v2819, %v2818
    %v2863 = vpack.c.b16 %v2821, %v2820
    %v2864 = vpack.c.b16 %v2823, %v2822
    %v2865 = vpack.c.b16 %v2825, %v2824
    %v2866 = vpack.c.b16 %v2827, %v2826
    %v2867 = vpack.c.b16 %v2829, %v2828
    %v2868 = vpack.c.b16 %v2831, %v2830
    %v2869 = vpack.c.b16 %v2833, %v2832
    %v2870 = vpack.c.b16 %v2835, %v2834
    %v2871 = vpack.c.b16 %v2837, %v2836
    %v2872 = vpack.c.b16 %v2839, %v2838
    %v2873 = vpack.c.b16 %v2841, %v2840
    %2906 = vmatprep.subr.bf16.mxu0 0
    %2907 = vmatpush1.bf16.msra.mxu0 %v2849
    %2908 = vmatprep.subr.bf16.mxu0 0
    %2909 = vmatpush1.bf16.msra.mxu0 %v2848
    %2910 = vmatprep.subr.bf16.mxu0 0
    %2911 = vmatpush1.bf16.msra.mxu0 %v2847
    %2912 = vmatprep.subr.bf16.mxu0 0
    %2913 = vmatpush1.bf16.msra.mxu0 %v2846
    %2914 = vmatprep.subr.bf16.mxu0 0
    %2915 = vmatpush1.bf16.msra.mxu0 %v2845
    %2916 = vmatprep.subr.bf16.mxu0 0
    %2917 = vmatpush1.bf16.msra.mxu0 %v2844
    %2918 = vmatprep.subr.bf16.mxu0 0
    %2919 = vmatpush1.bf16.msra.mxu0 %v2843
    %2920 = vmatprep.subr.bf16.mxu0 0
    %2921 = vmatpush1.bf16.msra.mxu0 %v2842
    %2922 = vmatprep.subr.bf16.mxu0 0
    %2923 = vmatpush2.bf16.msra.mxu0 %v2857
    %2924 = vmatprep.subr.bf16.mxu0 0
    %2925 = vmatpush2.bf16.msra.mxu0 %v2856
    %2926 = vmatprep.subr.bf16.mxu0 0
    %2927 = vmatpush2.bf16.msra.mxu0 %v2855
    %2928 = vmatprep.subr.bf16.mxu0 0
    %2929 = vmatpush2.bf16.msra.mxu0 %v2854
    %2930 = vmatprep.subr.bf16.mxu0 0
    %2931 = vmatpush2.bf16.msra.mxu0 %v2853
    %2932 = vmatprep.subr.bf16.mxu0 0
    %2933 = vmatpush2.bf16.msra.mxu0 %v2852
    %2934 = vmatprep.subr.bf16.mxu0 0
    %2935 = vmatpush2.bf16.msra.mxu0 %v2851
    %2936 = vmatprep.subr.bf16.mxu0 0
    %2937 = vmatpush2.bf16.msra.mxu0 %v2850
    %2938 = vmatprep.mubr.bf16.mxu0 %v2640
    %2939 = vmatmul.mubr.bf16.gmra.mxu0 %v2639
    %v2940 = vpop.f32.mrf.mxu0
    %v2941 = vadd.f32 %v2712, %v2940
    %v2942 = vpop.f32.mrf.mxu0
    %v2943 = vpop.f32.mrf.mxu0
    %v2944 = vadd.f32 %v2712, %v2943
    %v2945 = vpop.f32.mrf.mxu0
    %2946 = vdwg.mxu0
    %2947 = vmatprep.subr.bf16.mxu0 0
    %2948 = vmatpush1.bf16.msra.mxu0 %v2865
    %2949 = vmatprep.subr.bf16.mxu0 0
    %2950 = vmatpush1.bf16.msra.mxu0 %v2864
    %2951 = vmatprep.subr.bf16.mxu0 0
    %2952 = vmatpush1.bf16.msra.mxu0 %v2863
    %2953 = vmatprep.subr.bf16.mxu0 0
    %2954 = vmatpush1.bf16.msra.mxu0 %v2862
    %2955 = vmatprep.subr.bf16.mxu0 0
    %2956 = vmatpush1.bf16.msra.mxu0 %v2861
    %2957 = vmatprep.subr.bf16.mxu0 0
    %2958 = vmatpush1.bf16.msra.mxu0 %v2860
    %2959 = vmatprep.subr.bf16.mxu0 0
    %2960 = vmatpush1.bf16.msra.mxu0 %v2859
    %2961 = vmatprep.subr.bf16.mxu0 0
    %2962 = vmatpush1.bf16.msra.mxu0 %v2858
    %2963 = vmatprep.subr.bf16.mxu0 0
    %2964 = vmatpush2.bf16.msra.mxu0 %v2873
    %2965 = vmatprep.subr.bf16.mxu0 0
    %2966 = vmatpush2.bf16.msra.mxu0 %v2872
    %2967 = vmatprep.subr.bf16.mxu0 0
    %2968 = vmatpush2.bf16.msra.mxu0 %v2871
    %2969 = vmatprep.subr.bf16.mxu0 0
    %2970 = vmatpush2.bf16.msra.mxu0 %v2870
    %2971 = vmatprep.subr.bf16.mxu0 0
    %2972 = vmatpush2.bf16.msra.mxu0 %v2869
    %2973 = vmatprep.subr.bf16.mxu0 0
    %2974 = vmatpush2.bf16.msra.mxu0 %v2868
    %2975 = vmatprep.subr.bf16.mxu0 0
    %2976 = vmatpush2.bf16.msra.mxu0 %v2867
    %2977 = vmatprep.subr.bf16.mxu0 0
    %2978 = vmatpush2.bf16.msra.mxu0 %v2866
    %2979 = vmatprep.mubr.bf16.mxu0 %v2642
    %2980 = vmatmul.mubr.bf16.gmra.mxu0 %v2641
    %v2981 = vpop.f32.mrf.mxu0
    %v2982 = vadd.f32 %v2941, %v2981
    %v2983 = vpop.f32.mrf.mxu0
    %v2984 = vpop.f32.mrf.mxu0
    %v2985 = vadd.f32 %v2944, %v2984
    %v2986 = vpop.f32.mrf.mxu0
    %2987 = vdwg.mxu0
    %v2988 = vadd.f32 %v2264, %v2982
    %v2989 = vadd.f32 %v2265, %v2985
    %v2990 = vld [vmem:[%s14] sm:$0x1]
    %v2991 = vld [vmem:[%s15] sm:$0x1]
    %2992 = vadd.xlane.f32.xlu0 %v2988
    %v2993 = vpop.xlane.xlu0 %2992
    %2994 = vadd.xlane.f32.xlu0 %v2989
    %v2995 = vpop.xlane.xlu0 %2994
    %v2996 = vmul.f32 %v2993, %v158
    %v2997 = vmul.f32 %v2995, %v158
    %v2998 = vsub.f32 %v2988, %v2996
    %v2999 = vsub.f32 %v2989, %v2997
    %v3000 = vmul.f32 %v2998, %v2998
    %v3001 = vmul.f32 %v2999, %v2999
    %3002 = vadd.xlane.f32.xlu0 %v3000
    %v3003 = vpop.xlane.xlu0 %3002
    %3004 = vadd.xlane.f32.xlu0 %v3001
    %v3005 = vpop.xlane.xlu0 %3004
    %v3006 = vmul.f32 %v3003, %v158
    %v3007 = vmul.f32 %v3005, %v158
    %v3008 = vadd.f32 %v3006, 1e-12
    %v3009 = vadd.f32 %v3007, 1e-12
    %v3010 = vrsqrt.pop %v3008
    %v3011 = vrsqrt.pop %v3009
    %v3012 = vmul.f32 %v2998, %v3010
    %v3013 = vmul.f32 %v2999, %v3011
    %v3015 = vlaneseq
    %v3016 = vshrl.u32 %v3015, 7
    %v3017 = vsub.s32 0, %v3016
    %v3018 = vrot.slane %v2990, %v3017
    %v3020 = vmul.f32 %v3012, %v3018
    %v3021 = vmul.f32 %v3013, %v3018
    %v3023 = vlaneseq
    %v3024 = vshrl.u32 %v3023, 7
    %v3025 = vsub.s32 0, %v3024
    %v3026 = vrot.slane %v2991, %v3025
    %v3028 = vadd.f32 %v3020, %v3026
    %v3029 = vadd.f32 %v3021, %v3026
    %v3030 = vsel %vm474, 1, 0
    %v3031 = vcvt.s32.f32 %v3030
    %v3033 = vsel %vm555, %v3031, 0
    %3035 = vmatprep.subr.mxu0 0.0
    %3036 = vmatpush1.msra.mxu0 0.0
    %3037 = vmatprep.subr.mxu0 0.0
    %3038 = vmatpush1.msra.mxu0 0.0
    %3039 = vmatprep.subr.mxu0 0.0
    %3040 = vmatpush1.msra.mxu0 0.0
    %3041 = vmatprep.subr.mxu0 0.0
    %3042 = vmatpush1.msra.mxu0 0.0
    %3043 = vmatprep.subr.mxu0 0.0
    %3044 = vmatpush1.msra.mxu0 0.0
    %3045 = vmatprep.subr.mxu0 0.0
    %3046 = vmatpush1.msra.mxu0 0.0
    %3047 = vmatprep.subr.mxu0 0.0
    %3048 = vmatpush1.msra.mxu0 0.0
    %3049 = vmatprep.subr.mxu0 0.0
    %3050 = vmatpush1.msra.mxu0 0.0
    %3051 = vmatprep.subr.mxu0 0.0
    %3052 = vmatpush1.msra.mxu0 0.0
    %3053 = vmatprep.subr.mxu0 0.0
    %3054 = vmatpush1.msra.mxu0 0.0
    %3055 = vmatprep.subr.mxu0 0.0
    %3056 = vmatpush1.msra.mxu0 0.0
    %3057 = vmatprep.subr.mxu0 0.0
    %3058 = vmatpush1.msra.mxu0 0.0
    %3059 = vmatprep.subr.mxu0 0.0
    %3060 = vmatpush1.msra.mxu0 0.0
    %3061 = vmatprep.subr.mxu0 0.0
    %3062 = vmatpush1.msra.mxu0 0.0
    %3063 = vmatprep.subr.mxu0 0.0
    %3064 = vmatpush1.msra.mxu0 0.0
    %3065 = vmatprep.subr.mxu0 0.0
    %3066 = vmatpush1.msra.mxu0 %v3028
    %3067 = vmatprep.subr.mxu0 0.0
    %3068 = vmatpush2.msra.mxu0 0.0
    %3069 = vmatprep.subr.mxu0 0.0
    %3070 = vmatpush2.msra.mxu0 0.0
    %3071 = vmatprep.subr.mxu0 0.0
    %3072 = vmatpush2.msra.mxu0 0.0
    %3073 = vmatprep.subr.mxu0 0.0
    %3074 = vmatpush2.msra.mxu0 0.0
    %3075 = vmatprep.subr.mxu0 0.0
    %3076 = vmatpush2.msra.mxu0 0.0
    %3077 = vmatprep.subr.mxu0 0.0
    %3078 = vmatpush2.msra.mxu0 0.0
    %3079 = vmatprep.subr.mxu0 0.0
    %3080 = vmatpush2.msra.mxu0 0.0
    %3081 = vmatprep.subr.mxu0 0.0
    %3082 = vmatpush2.msra.mxu0 0.0
    %3083 = vmatprep.subr.mxu0 0.0
    %3084 = vmatpush2.msra.mxu0 0.0
    %3085 = vmatprep.subr.mxu0 0.0
    %3086 = vmatpush2.msra.mxu0 0.0
    %3087 = vmatprep.subr.mxu0 0.0
    %3088 = vmatpush2.msra.mxu0 0.0
    %3089 = vmatprep.subr.mxu0 0.0
    %3090 = vmatpush2.msra.mxu0 0.0
    %3091 = vmatprep.subr.mxu0 0.0
    %3092 = vmatpush2.msra.mxu0 0.0
    %3093 = vmatprep.subr.mxu0 0.0
    %3094 = vmatpush2.msra.mxu0 0.0
    %3095 = vmatprep.subr.mxu0 0.0
    %3096 = vmatpush2.msra.mxu0 0.0
    %3097 = vmatprep.subr.mxu0 0.0
    %3098 = vmatpush2.msra.mxu0 0.0
    %3099 = vmatprep.mubr.f32.mxu0 0.0
    %3100 = vmatmul.mubr.f32.gmra.mxu0 %v3033
    %v3101 = vpop.f32.mrf.mxu0
    %v3102 = vadd.f32 0.0, %v3101
    %v3103 = vpop.f32.mrf.mxu0
    %3104 = vdwg.mxu0
    %v3105 = vsel %vm555, %v3031, 0.0
    %3106 = vadd.xlane.f32.xlu0 %v3105
    %v3107 = vpop.xlane.xlu0 %3106
    %v3108 = vmax.f32 %v3107, 1.0
    %v3109 = vrcp.pop %v3108
    %v3110 = vmul.f32 %v3102, %v3109
    %3111 = vst [vmem:[#allocation16] sm:$0x1] %v3110
    %s3112 = sld [smem:[#allocation3 + %s1368]]
    %v3113 = vstv %s3112
    %vm3114 = vcmp.lt.s32.totalorder %v149, %v3113
    %v3115 = vsel %vm3114, 1, 0
    %v3116 = vcvt.s32.f32 %v3115
    %v3118 = vsel %vm555, %v3116, 0
    %3120 = vmatprep.subr.mxu0 0.0
    %3121 = vmatpush1.msra.mxu0 0.0
    %3122 = vmatprep.subr.mxu0 0.0
    %3123 = vmatpush1.msra.mxu0 0.0
    %3124 = vmatprep.subr.mxu0 0.0
    %3125 = vmatpush1.msra.mxu0 0.0
    %3126 = vmatprep.subr.mxu0 0.0
    %3127 = vmatpush1.msra.mxu0 0.0
    %3128 = vmatprep.subr.mxu0 0.0
    %3129 = vmatpush1.msra.mxu0 0.0
    %3130 = vmatprep.subr.mxu0 0.0
    %3131 = vmatpush1.msra.mxu0 0.0
    %3132 = vmatprep.subr.mxu0 0.0
    %3133 = vmatpush1.msra.mxu0 0.0
    %3134 = vmatprep.subr.mxu0 0.0
    %3135 = vmatpush1.msra.mxu0 0.0
    %3136 = vmatprep.subr.mxu0 0.0
    %3137 = vmatpush1.msra.mxu0 0.0
    %3138 = vmatprep.subr.mxu0 0.0
    %3139 = vmatpush1.msra.mxu0 0.0
    %3140 = vmatprep.subr.mxu0 0.0
    %3141 = vmatpush1.msra.mxu0 0.0
    %3142 = vmatprep.subr.mxu0 0.0
    %3143 = vmatpush1.msra.mxu0 0.0
    %3144 = vmatprep.subr.mxu0 0.0
    %3145 = vmatpush1.msra.mxu0 0.0
    %3146 = vmatprep.subr.mxu0 0.0
    %3147 = vmatpush1.msra.mxu0 0.0
    %3148 = vmatprep.subr.mxu0 0.0
    %3149 = vmatpush1.msra.mxu0 0.0
    %3150 = vmatprep.subr.mxu0 0.0
    %3151 = vmatpush1.msra.mxu0 %v3029
    %3152 = vmatprep.subr.mxu0 0.0
    %3153 = vmatpush2.msra.mxu0 0.0
    %3154 = vmatprep.subr.mxu0 0.0
    %3155 = vmatpush2.msra.mxu0 0.0
    %3156 = vmatprep.subr.mxu0 0.0
    %3157 = vmatpush2.msra.mxu0 0.0
    %3158 = vmatprep.subr.mxu0 0.0
    %3159 = vmatpush2.msra.mxu0 0.0
    %3160 = vmatprep.subr.mxu0 0.0
    %3161 = vmatpush2.msra.mxu0 0.0
    %3162 = vmatprep.subr.mxu0 0.0
    %3163 = vmatpush2.msra.mxu0 0.0
    %3164 = vmatprep.subr.mxu0 0.0
    %3165 = vmatpush2.msra.mxu0 0.0
    %3166 = vmatprep.subr.mxu0 0.0
    %3167 = vmatpush2.msra.mxu0 0.0
    %3168 = vmatprep.subr.mxu0 0.0
    %3169 = vmatpush2.msra.mxu0 0.0
    %3170 = vmatprep.subr.mxu0 0.0
    %3171 = vmatpush2.msra.mxu0 0.0
    %3172 = vmatprep.subr.mxu0 0.0
    %3173 = vmatpush2.msra.mxu0 0.0
    %3174 = vmatprep.subr.mxu0 0.0
    %3175 = vmatpush2.msra.mxu0 0.0
    %3176 = vmatprep.subr.mxu0 0.0
    %3177 = vmatpush2.msra.mxu0 0.0
    %3178 = vmatprep.subr.mxu0 0.0
    %3179 = vmatpush2.msra.mxu0 0.0
    %3180 = vmatprep.subr.mxu0 0.0
    %3181 = vmatpush2.msra.mxu0 0.0
    %3182 = vmatprep.subr.mxu0 0.0
    %3183 = vmatpush2.msra.mxu0 0.0
    %3184 = vmatprep.mubr.f32.mxu0 0.0
    %3185 = vmatmul.mubr.f32.gmra.mxu0 %v3118
    %v3186 = vpop.f32.mrf.mxu0
    %v3187 = vadd.f32 0.0, %v3186
    %v3188 = vpop.f32.mrf.mxu0
    %3189 = vdwg.mxu0
    %v3190 = vsel %vm555, %v3116, 0.0
    %3191 = vadd.xlane.f32.xlu0 %v3190
    %v3192 = vpop.xlane.xlu0 %3191
    %v3193 = vmax.f32 %v3192, 1.0
    %v3194 = vrcp.pop %v3193
    %v3195 = vmul.f32 %v3187, %v3194
    %s3196 = scalar_lea.vmem [#allocation16], 1
    %3197 = vst [vmem:[%s3196] sm:$0x1] %v3195
    // Predicated region
    $region90: #{tpu_custom_call.1} parent=1 // pred_check
      _
    $region91: #{tpu_custom_call.1} parent=1 // pred_check_branch
      %3199 = sbr.rel (0) target = $region93
    $region92: #{tpu_custom_call.1} parent=1 // pred_region
      %s3201 = ssub.s32 32, 32
      %3202 = vsyncadd [#allocation6], %s3201
      %s3203 = sshll.u32 [#allocation16], 4
      %s3204 = int_to_ptr.vmem [resolvable:$true] %s3203
      %3209 = dma.vmem_to_hbm [thread:$0]  %s3204, 32, %s16, [#allocation6], 16, 16, 1
    $region93: #{tpu_custom_call.1} parent=1 // pred_fallthru
      _
    // Predicated region
    $region94: #{tpu_custom_call.1} parent=1 // pred_check
      _
    $region95: #{tpu_custom_call.1} parent=1 // pred_check_branch
      %3211 = sbr.rel (0) target = $region97
    $region96: #{tpu_custom_call.1} parent=1 // pred_region
      %3212 = dma.done [#allocation6], 32
    $region97: #{tpu_custom_call.1} parent=1 // pred_fallthru
      _
    %3213 = vsyncpa [#allocation5], 1
    %3214 = vsyncpa [#allocation8], 1
    %3215 = vsyncpa [#allocation11], 1
    %3216 = vsyncpa [#allocation14], 1
    %3217 = vsyncpa [#allocation6], 1

</llo_original>
